<compile_context>
chip_gen: v7x
topology: tpu7x:2x2x1
jax: 0.10.0
libtpu: 0.0.40
codegen_flags: <defaults>
</compile_context>

<pallas_src>
import functools
import math

import jax
import jax.numpy as jnp
from jax import lax
from jax.experimental import pallas as pl
from jax.experimental.pallas import tpu as pltpu

INV_SQRT2 = 1.0 / math.sqrt(2.0)

K3, K5, K7 = 3, 5, 7
DIL7 = 3
PAD3, PAD5, PAD7 = 1, 2, 9          # per-stage zero padding (lk = 5 -> pad 2 on the 5x5)


# -------------------- in-kernel elementwise helpers --------------------
def _fast_recip(d):
    # EUP approximate reciprocal + one Newton-Raphson step (error ~squared -> ~f32 accurate),
    # so the divide leaves the VALU slot without hurting the 2e-3 validation tolerance.
    r = pl.reciprocal(d, approx=True)
    return r * (2.0 - d * r)


def _erf_approx(x):
    # Abramowitz & Stegun 7.1.26 rational approximation (|err| < 1.5e-7); exp/recip -> EUP.
    a1, a2, a3, a4, a5 = 0.254829592, -0.284496736, 1.421413741, -1.453152027, 1.061405429
    p = 0.3275911
    sgn = jnp.where(x >= 0.0, 1.0, -1.0)
    ax = jnp.abs(x)
    t = _fast_recip(1.0 + p * ax)
    poly = ((((a5 * t + a4) * t + a3) * t + a2) * t + a1) * t
    return sgn * (1.0 - poly * jnp.exp(-ax * ax))


def _gelu_exact(x):
    return 0.5 * x * (1.0 + _erf_approx(x * INV_SQRT2))


def _sigmoid(x):
    return _fast_recip(1.0 + jnp.exp(-x))


def _zero_borders(ref, pad_h, pad_lanes, h, w_lanes):
    """Zero only the border strips of a packed padded scratch.

    The interior is fully overwritten every grid step, so the previous full-buffer
    zero sweeps (three per step, on the narrowest VLIW slot) are unnecessary.
    """
    hp = h + 2 * pad_h
    wp = w_lanes + 2 * pad_lanes
    z_rows = jnp.zeros((pad_h, wp), jnp.float32)
    z_cols = jnp.zeros((hp, pad_lanes), jnp.float32)
    ref[0:pad_h, :] = z_rows
    ref[pad_h + h:hp, :] = z_rows
    ref[:, 0:pad_lanes] = z_cols
    ref[:, pad_lanes + w_lanes:wp] = z_cols


# -------------------- fused RCBv6 kernel (packed (H, W*C) layout) --------------------
def _rcbv6_kernel(x_ref, w1_ref, b1_ref, w2_ref, b2_ref,
                  w5_ref, b5_ref, w7_ref, b7_ref, wp_ref, bp_ref,
                  o_ref, p3_ref, p5_ref, p7_ref, col_ref, *, H, W, C):
    WC = W * C
    x = x_ref[0]                                          # (H, WC) lane-dense

    # ---------------- LFE conv #1: im2col (H, 9*WC) @ stacked block-diag (9*WC, WC) ----------
    _zero_borders(p3_ref, PAD3, PAD3 * C, H, WC)
    p3_ref[PAD3:PAD3 + H, PAD3 * C:PAD3 * C + WC] = x
    for t in range(K3 * K3):
        kh, kw = divmod(t, K3)
        col_ref[:, t * WC:(t + 1) * WC] = p3_ref[kh:kh + H, kw * C:kw * C + WC]
    t1 = jnp.dot(col_ref[...], w1_ref[...],
                 preferred_element_type=jnp.float32) + b1_ref[...]
    t1 = _gelu_exact(t1)                                  # (H, WC)

    # ---------------- LFE conv #2 (reuses p3 / col scratch) ----------------
    p3_ref[PAD3:PAD3 + H, PAD3 * C:PAD3 * C + WC] = t1
    for t in range(K3 * K3):
        kh, kw = divmod(t, K3)
        col_ref[:, t * WC:(t + 1) * WC] = p3_ref[kh:kh + H, kw * C:kw * C + WC]
    lfe = jnp.dot(col_ref[...], w2_ref[...],
                  preferred_element_type=jnp.float32) + b2_ref[...]   # (H, WC) == LFE(x)

    # ---------------- LKA depthwise 5x5 (VPU, lane-dense taps) ----------------
    _zero_borders(p5_ref, PAD5, PAD5 * C, H, WC)
    p5_ref[PAD5:PAD5 + H, PAD5 * C:PAD5 * C + WC] = lfe
    w5 = w5_ref[...]                                      # (25, WC)
    acc = jnp.zeros((H, WC), jnp.float32)
    for t in range(K5 * K5):
        kh, kw = divmod(t, K5)
        acc = acc + p5_ref[kh:kh + H, kw * C:kw * C + WC] * w5[t:t + 1, :]
    t3 = acc + b5_ref[...]                                # (H, WC)

    # ---------------- LKA depthwise 7x7, dilation 3 ----------------
    _zero_borders(p7_ref, PAD7, PAD7 * C, H, WC)
    p7_ref[PAD7:PAD7 + H, PAD7 * C:PAD7 * C + WC] = t3
    w7 = w7_ref[...]                                      # (49, WC)
    acc = jnp.zeros((H, WC), jnp.float32)
    for t in range(K7 * K7):
        kh, kw = divmod(t, K7)
        acc = acc + p7_ref[DIL7 * kh:DIL7 * kh + H,
                           DIL7 * kw * C:DIL7 * kw * C + WC] * w7[t:t + 1, :]
    t4 = acc + b7_ref[...]                                # (H, WC)

    # ---------------- 1x1 conv -> sigmoid -> gate -> residual ----------------
    z = jnp.dot(t4, wp_ref[...], preferred_element_type=jnp.float32) + bp_ref[...]
    o_ref[0] = _sigmoid(z) * lfe + x                      # dense (H, 128-wide) store


# -------------------- host-side weight packing --------------------
def _stacked_blockdiag(w_oihw, W):
    """(C_out, C_in, k, k) OIHW -> (k*k*W*C_in, W*C_out): per-tap kron(I_W, K_t) stacked
    along the contraction dim, so all taps of a channel-mixing conv become ONE matmul in
    the packed (H, W*C) layout."""
    k = w_oihw.shape[-1]
    eye = jnp.eye(W, dtype=jnp.float32)
    mats = [jnp.kron(eye, w_oihw[:, :, kh, kw].T.astype(jnp.float32))
            for kh in range(k) for kw in range(k)]
    return jnp.concatenate(mats, axis=0)


def _dw_tap_rows(w_dw, W):
    """(C, 1, k, k) depthwise -> (k*k, W*C) lane-packed per-tap weight rows."""
    k = w_dw.shape[-1]
    taps = jnp.transpose(w_dw[:, 0].astype(jnp.float32), (1, 2, 0)).reshape(k * k, -1)
    return jnp.tile(taps, (1, W))


def _packed_bias(b, W):
    return jnp.tile(b.astype(jnp.float32), W).reshape(1, -1)


# -------------------- wrapper --------------------
@jax.jit
def rcbv6_forward(x_nchw, params):
    B, C, H, W = x_nchw.shape
    f32 = jnp.float32
    WC = W * C

    # NCHW -> packed lane-dense (B, H, W*C); the reshape/transpose is free wrapper plumbing.
    x_packed = jnp.transpose(x_nchw, (0, 2, 3, 1)).reshape(B, H, WC).astype(f32)

    w1 = _stacked_blockdiag(params["w_lfe1"], W)          # (9*WC, WC)
    w2 = _stacked_blockdiag(params["w_lfe2"], W)          # (9*WC, WC)
    wp = jnp.kron(jnp.eye(W, dtype=f32),
                  params["w_pw"][:, :, 0, 0].T.astype(f32))            # (WC, WC)
    w5 = _dw_tap_rows(params["w_dw5"], W)                 # (25, WC)
    w7 = _dw_tap_rows(params["w_dw7"], W)                 # (49, WC)
    b1 = _packed_bias(params["b_lfe1"], W)
    b2 = _packed_bias(params["b_lfe2"], W)
    b5 = _packed_bias(params["b_dw5"], W)
    b7 = _packed_bias(params["b_dw7"], W)
    bp = _packed_bias(params["b_pw"], W)

    kernel = functools.partial(_rcbv6_kernel, H=H, W=W, C=C)
    const2 = lambda b: (0, 0)

    out_packed = pl.pallas_call(
        kernel,
        out_shape=jax.ShapeDtypeStruct((B, H, WC), f32),
        grid=(B,),
        in_specs=[
            pl.BlockSpec((1, H, WC), lambda b: (b, 0, 0)),
            pl.BlockSpec((K3 * K3 * WC, WC), const2),
            pl.BlockSpec((1, WC), const2),
            pl.BlockSpec((K3 * K3 * WC, WC), const2),
            pl.BlockSpec((1, WC), const2),
            pl.BlockSpec((K5 * K5, WC), const2),
            pl.BlockSpec((1, WC), const2),
            pl.BlockSpec((K7 * K7, WC), const2),
            pl.BlockSpec((1, WC), const2),
            pl.BlockSpec((WC, WC), const2),
            pl.BlockSpec((1, WC), const2),
        ],
        out_specs=pl.BlockSpec((1, H, WC), lambda b: (b, 0, 0)),
        scratch_shapes=[
            pltpu.VMEM((H + 2 * PAD3, (W + 2 * PAD3) * C), f32),   # packed padded 3x3 input
            pltpu.VMEM((H + 2 * PAD5, (W + 2 * PAD5) * C), f32),   # packed padded 5x5 input
            pltpu.VMEM((H + 2 * PAD7, (W + 2 * PAD7) * C), f32),   # packed padded 7x7 input
            pltpu.VMEM((H, K3 * K3 * WC), f32),                    # im2col slab (reused)
        ],
        compiler_params=pltpu.CompilerParams(dimension_semantics=("parallel",)),
    )(x_packed, w1, b1, w2, b2, w5, b5, w7, b7, wp, bp)

    return jnp.transpose(out_packed.reshape(B, H, W, C), (0, 3, 1, 2))   # back to NCHW


# -------------------- pure-JAX reference (NCHW, mirrors PyTorch) --------------------
def rcbv6_reference(x, p):
    C = x.shape[1]
    dn = ("NCHW", "OIHW", "NCHW")

    def conv(v, w, b, padding, groups=1, dilation=(1, 1)):
        out = lax.conv_general_dilated(
            v, w, window_strides=(1, 1), padding=padding,
            rhs_dilation=dilation, dimension_numbers=dn,
            feature_group_count=groups)
        return out + b[None, :, None, None]

    t = conv(x, p["w_lfe1"], p["b_lfe1"], ((PAD3, PAD3), (PAD3, PAD3)))
    t = 0.5 * t * (1.0 + jax.scipy.special.erf(t * INV_SQRT2))     # exact GELU
    t = conv(t, p["w_lfe2"], p["b_lfe2"], ((PAD3, PAD3), (PAD3, PAD3)))
    a = conv(t, p["w_dw5"], p["b_dw5"], ((PAD5, PAD5), (PAD5, PAD5)), groups=C)
    a = conv(a, p["w_dw7"], p["b_dw7"], ((PAD7, PAD7), (PAD7, PAD7)),
             groups=C, dilation=(DIL7, DIL7))
    a = conv(a, p["w_pw"], p["b_pw"], ((0, 0), (0, 0)))
    a = jax.nn.sigmoid(a)
    return a * t + x


if __name__ == "__main__":
    B, C, H, W = 2, 8, 16, 16          # n_feats = 8  ->  W*C = 128 (lane-dense)

    key = jax.random.PRNGKey(0)
    ks = jax.random.split(key, 11)
    params = {
        "w_lfe1": 0.15 * jax.random.normal(ks[0], (C, C, K3, K3), jnp.float32),
        "b_lfe1": 0.10 * jax.random.normal(ks[1], (C,), jnp.float32),
        "w_lfe2": 0.15 * jax.random.normal(ks[2], (C, C, K3, K3), jnp.float32),
        "b_lfe2": 0.10 * jax.random.normal(ks[3], (C,), jnp.float32),
        "w_dw5": 0.10 * jax.random.normal(ks[4], (C, 1, K5, K5), jnp.float32),
        "b_dw5": 0.10 * jax.random.normal(ks[5], (C,), jnp.float32),
        "w_dw7": 0.10 * jax.random.normal(ks[6], (C, 1, K7, K7), jnp.float32),
        "b_dw7": 0.10 * jax.random.normal(ks[7], (C,), jnp.float32),
        "w_pw": 0.20 * jax.random.normal(ks[8], (C, C, 1, 1), jnp.float32),
        "b_pw": 0.10 * jax.random.normal(ks[9], (C,), jnp.float32),
    }
    x = jax.random.normal(ks[10], (B, C, H, W), jnp.float32)

    out = jax.block_until_ready(rcbv6_forward(x, params))
    ref = jax.block_until_ready(rcbv6_reference(x, params))

    assert out.shape == (B, C, H, W)
    max_err = float(jnp.max(jnp.abs(out - ref)))
    assert jnp.allclose(out, ref, atol=2e-3, rtol=2e-3), max_err
    print("KERNEL_OK")
</pallas_src>

<mosaic_0001>
module attributes {stable_mosaic.version = 11 : i64} {
  func.func @_rcbv6_kernel(%arg0: i32, %arg1: memref<1x16x128xf32, #tpu.memory_space<vmem>>, %arg2: memref<1152x128xf32, #tpu.memory_space<vmem>>, %arg3: memref<1x128xf32, #tpu.memory_space<vmem>>, %arg4: memref<1152x128xf32, #tpu.memory_space<vmem>>, %arg5: memref<1x128xf32, #tpu.memory_space<vmem>>, %arg6: memref<25x128xf32, #tpu.memory_space<vmem>>, %arg7: memref<1x128xf32, #tpu.memory_space<vmem>>, %arg8: memref<49x128xf32, #tpu.memory_space<vmem>>, %arg9: memref<1x128xf32, #tpu.memory_space<vmem>>, %arg10: memref<128x128xf32, #tpu.memory_space<vmem>>, %arg11: memref<1x128xf32, #tpu.memory_space<vmem>>, %arg12: memref<1x16x128xf32, #tpu.memory_space<vmem>>, %arg13: memref<18x144xf32, #tpu.memory_space<vmem>>, %arg14: memref<20x160xf32, #tpu.memory_space<vmem>>, %arg15: memref<34x272xf32, #tpu.memory_space<vmem>>, %arg16: memref<16x1152xf32, #tpu.memory_space<vmem>>) attributes {dimension_semantics = [#tpu.dimension_semantics<parallel>], iteration_bounds = array<i64: 2>, scalar_prefetch = 0 : i64, scratch_operands = 4 : i64, tpu.core_type = #tpu.core_type<tc>, window_params = [{transform_indices = @transform_0, window_bounds = array<i64: 1, 16, 128>}, {pipeline_mode = #tpu.pipeline_mode<synchronous>, transform_indices = @transform_1, window_bounds = array<i64: 1152, 128>}, {pipeline_mode = #tpu.pipeline_mode<synchronous>, transform_indices = @transform_2, window_bounds = array<i64: 1, 128>}, {pipeline_mode = #tpu.pipeline_mode<synchronous>, transform_indices = @transform_3, window_bounds = array<i64: 1152, 128>}, {pipeline_mode = #tpu.pipeline_mode<synchronous>, transform_indices = @transform_4, window_bounds = array<i64: 1, 128>}, {pipeline_mode = #tpu.pipeline_mode<synchronous>, transform_indices = @transform_5, window_bounds = array<i64: 25, 128>}, {pipeline_mode = #tpu.pipeline_mode<synchronous>, transform_indices = @transform_6, window_bounds = array<i64: 1, 128>}, {pipeline_mode = #tpu.pipeline_mode<synchronous>, transform_indices = @transform_7, window_bounds = array<i64: 49, 128>}, {pipeline_mode = #tpu.pipeline_mode<synchronous>, transform_indices = @transform_8, window_bounds = array<i64: 1, 128>}, {pipeline_mode = #tpu.pipeline_mode<synchronous>, transform_indices = @transform_9, window_bounds = array<i64: 128, 128>}, {pipeline_mode = #tpu.pipeline_mode<synchronous>, transform_indices = @transform_10, window_bounds = array<i64: 1, 128>}, {transform_indices = @transform_11, window_bounds = array<i64: 1, 16, 128>}]} {
    %c0 = arith.constant 0 : index
    %c0_0 = arith.constant 0 : index
    %c0_1 = arith.constant 0 : index
    %0 = vector.load %arg1[%c0, %c0_0, %c0_1] : memref<1x16x128xf32, #tpu.memory_space<vmem>>, vector<1x16x128xf32>
    %1 = vector.shape_cast %0 : vector<1x16x128xf32> to vector<16x128xf32>
    %cst = arith.constant 0.000000e+00 : f32
    %2 = vector.broadcast %cst : f32 to vector<1x144xf32>
    %cst_2 = arith.constant 0.000000e+00 : f32
    %3 = vector.broadcast %cst_2 : f32 to vector<18x8xf32>
    %c0_3 = arith.constant 0 : index
    %c0_4 = arith.constant 0 : index
    %4 = vector.load %arg13[%c0_3, %c0_4] : memref<18x144xf32, #tpu.memory_space<vmem>>, vector<1x144xf32>
    tpu.vector_store %arg13[%c0_3, %c0_4], %2 {strides = array<i32>} : memref<18x144xf32, #tpu.memory_space<vmem>>, vector<1x144xf32>,
    %c17 = arith.constant 17 : index
    %c0_5 = arith.constant 0 : index
    %5 = vector.load %arg13[%c17, %c0_5] : memref<18x144xf32, #tpu.memory_space<vmem>>, vector<1x144xf32>
    tpu.vector_store %arg13[%c17, %c0_5], %2 {strides = array<i32>} : memref<18x144xf32, #tpu.memory_space<vmem>>, vector<1x144xf32>,
    %c0_6 = arith.constant 0 : index
    %c0_7 = arith.constant 0 : index
    %6 = vector.load %arg13[%c0_6, %c0_7] : memref<18x144xf32, #tpu.memory_space<vmem>>, vector<18x8xf32>
    tpu.vector_store %arg13[%c0_6, %c0_7], %3 {strides = array<i32>} : memref<18x144xf32, #tpu.memory_space<vmem>>, vector<18x8xf32>,
    %c0_8 = arith.constant 0 : index
    %c136 = arith.constant 136 : index
    %7 = vector.load %arg13[%c0_8, %c136] : memref<18x144xf32, #tpu.memory_space<vmem>>, vector<18x8xf32>
    tpu.vector_store %arg13[%c0_8, %c136], %3 {strides = array<i32>} : memref<18x144xf32, #tpu.memory_space<vmem>>, vector<18x8xf32>,
    %c1 = arith.constant 1 : index
    %c8 = arith.constant 8 : index
    %8 = vector.load %arg13[%c1, %c8] : memref<18x144xf32, #tpu.memory_space<vmem>>, vector<16x128xf32>
    tpu.vector_store %arg13[%c1, %c8], %1 {strides = array<i32>} : memref<18x144xf32, #tpu.memory_space<vmem>>, vector<16x128xf32>,
    %c0_9 = arith.constant 0 : index
    %c0_10 = arith.constant 0 : index
    %9 = vector.load %arg13[%c0_9, %c0_10] : memref<18x144xf32, #tpu.memory_space<vmem>>, vector<16x128xf32>
    %c0_11 = arith.constant 0 : index
    %c0_12 = arith.constant 0 : index
    %10 = vector.load %arg16[%c0_11, %c0_12] : memref<16x1152xf32, #tpu.memory_space<vmem>>, vector<16x128xf32>
    tpu.vector_store %arg16[%c0_11, %c0_12], %9 {strides = array<i32>} : memref<16x1152xf32, #tpu.memory_space<vmem>>, vector<16x128xf32>,
    %c0_13 = arith.constant 0 : index
    %c8_14 = arith.constant 8 : index
    %11 = vector.load %arg13[%c0_13, %c8_14] : memref<18x144xf32, #tpu.memory_space<vmem>>, vector<16x128xf32>
    %c0_15 = arith.constant 0 : index
    %c128 = arith.constant 128 : index
    %12 = vector.load %arg16[%c0_15, %c128] : memref<16x1152xf32, #tpu.memory_space<vmem>>, vector<16x128xf32>
    tpu.vector_store %arg16[%c0_15, %c128], %11 {strides = array<i32>} : memref<16x1152xf32, #tpu.memory_space<vmem>>, vector<16x128xf32>,
    %c0_16 = arith.constant 0 : index
    %c16 = arith.constant 16 : index
    %13 = vector.load %arg13[%c0_16, %c16] : memref<18x144xf32, #tpu.memory_space<vmem>>, vector<16x128xf32>
    %c0_17 = arith.constant 0 : index
    %c256 = arith.constant 256 : index
    %14 = vector.load %arg16[%c0_17, %c256] : memref<16x1152xf32, #tpu.memory_space<vmem>>, vector<16x128xf32>
    tpu.vector_store %arg16[%c0_17, %c256], %13 {strides = array<i32>} : memref<16x1152xf32, #tpu.memory_space<vmem>>, vector<16x128xf32>,
    %c1_18 = arith.constant 1 : index
    %c0_19 = arith.constant 0 : index
    %15 = vector.load %arg13[%c1_18, %c0_19] : memref<18x144xf32, #tpu.memory_space<vmem>>, vector<16x128xf32>
    %c0_20 = arith.constant 0 : index
    %c384 = arith.constant 384 : index
    %16 = vector.load %arg16[%c0_20, %c384] : memref<16x1152xf32, #tpu.memory_space<vmem>>, vector<16x128xf32>
    tpu.vector_store %arg16[%c0_20, %c384], %15 {strides = array<i32>} : memref<16x1152xf32, #tpu.memory_space<vmem>>, vector<16x128xf32>,
    %c1_21 = arith.constant 1 : index
    %c8_22 = arith.constant 8 : index
    %17 = vector.load %arg13[%c1_21, %c8_22] : memref<18x144xf32, #tpu.memory_space<vmem>>, vector<16x128xf32>
    %c0_23 = arith.constant 0 : index
    %c512 = arith.constant 512 : index
    %18 = vector.load %arg16[%c0_23, %c512] : memref<16x1152xf32, #tpu.memory_space<vmem>>, vector<16x128xf32>
    tpu.vector_store %arg16[%c0_23, %c512], %17 {strides = array<i32>} : memref<16x1152xf32, #tpu.memory_space<vmem>>, vector<16x128xf32>,
    %c1_24 = arith.constant 1 : index
    %c16_25 = arith.constant 16 : index
    %19 = vector.load %arg13[%c1_24, %c16_25] : memref<18x144xf32, #tpu.memory_space<vmem>>, vector<16x128xf32>
    %c0_26 = arith.constant 0 : index
    %c640 = arith.constant 640 : index
    %20 = vector.load %arg16[%c0_26, %c640] : memref<16x1152xf32, #tpu.memory_space<vmem>>, vector<16x128xf32>
    tpu.vector_store %arg16[%c0_26, %c640], %19 {strides = array<i32>} : memref<16x1152xf32, #tpu.memory_space<vmem>>, vector<16x128xf32>,
    %c2 = arith.constant 2 : index
    %c0_27 = arith.constant 0 : index
    %21 = vector.load %arg13[%c2, %c0_27] : memref<18x144xf32, #tpu.memory_space<vmem>>, vector<16x128xf32>
    %c0_28 = arith.constant 0 : index
    %c768 = arith.constant 768 : index
    %22 = vector.load %arg16[%c0_28, %c768] : memref<16x1152xf32, #tpu.memory_space<vmem>>, vector<16x128xf32>
    tpu.vector_store %arg16[%c0_28, %c768], %21 {strides = array<i32>} : memref<16x1152xf32, #tpu.memory_space<vmem>>, vector<16x128xf32>,
    %c2_29 = arith.constant 2 : index
    %c8_30 = arith.constant 8 : index
    %23 = vector.load %arg13[%c2_29, %c8_30] : memref<18x144xf32, #tpu.memory_space<vmem>>, vector<16x128xf32>
    %c0_31 = arith.constant 0 : index
    %c896 = arith.constant 896 : index
    %24 = vector.load %arg16[%c0_31, %c896] : memref<16x1152xf32, #tpu.memory_space<vmem>>, vector<16x128xf32>
    tpu.vector_store %arg16[%c0_31, %c896], %23 {strides = array<i32>} : memref<16x1152xf32, #tpu.memory_space<vmem>>, vector<16x128xf32>,
    %c2_32 = arith.constant 2 : index
    %c16_33 = arith.constant 16 : index
    %25 = vector.load %arg13[%c2_32, %c16_33] : memref<18x144xf32, #tpu.memory_space<vmem>>, vector<16x128xf32>
    %c0_34 = arith.constant 0 : index
    %c1024 = arith.constant 1024 : index
    %26 = vector.load %arg16[%c0_34, %c1024] : memref<16x1152xf32, #tpu.memory_space<vmem>>, vector<16x128xf32>
    tpu.vector_store %arg16[%c0_34, %c1024], %25 {strides = array<i32>} : memref<16x1152xf32, #tpu.memory_space<vmem>>, vector<16x128xf32>,
    %c0_35 = arith.constant 0 : index
    %c0_36 = arith.constant 0 : index
    %27 = vector.load %arg16[%c0_35, %c0_36] : memref<16x1152xf32, #tpu.memory_space<vmem>>, vector<16x1152xf32>
    %c0_37 = arith.constant 0 : index
    %c0_38 = arith.constant 0 : index
    %28 = vector.load %arg2[%c0_37, %c0_38] : memref<1152x128xf32, #tpu.memory_space<vmem>>, vector<1152x128xf32>
    %cst_39 = arith.constant dense<0.000000e+00> : vector<16x128xf32>
    %29 = tpu.matmul %27, %28, %cst_39 {dimension_numbers = #tpu.dot_dimension_numbers<[1], [0], [0], [1], [0, 0, 1, 1], [], []>} : vector<16x1152xf32>, vector<1152x128xf32>, vector<16x128xf32> -> vector<16x128xf32>
    %c0_40 = arith.constant 0 : index
    %c0_41 = arith.constant 0 : index
    %30 = vector.load %arg3[%c0_40, %c0_41] : memref<1x128xf32, #tpu.memory_space<vmem>>, vector<1x128xf32>
    %31 = vector.broadcast %30 : vector<1x128xf32> to vector<16x128xf32>
    %32 = arith.addf %29, %31 : vector<16x128xf32>
    %cst_42 = arith.constant 5.000000e-01 : f32
    %33 = vector.broadcast %cst_42 : f32 to vector<16x128xf32>
    %34 = arith.mulf %33, %32 : vector<16x128xf32>
    %cst_43 = arith.constant 0.707106769 : f32
    %35 = vector.broadcast %cst_43 : f32 to vector<16x128xf32>
    %36 = arith.mulf %32, %35 : vector<16x128xf32>
    %cst_44 = arith.constant 0.000000e+00 : f32
    %37 = vector.broadcast %cst_44 : f32 to vector<16x128xf32>
    %38 = arith.cmpf oge, %36, %37 : vector<16x128xf32>
    %cst_45 = arith.constant 1.000000e+00 : f32
    %cst_46 = arith.constant -1.000000e+00 : f32
    %39 = vector.broadcast %cst_45 : f32 to vector<16x128xf32>
    %40 = vector.broadcast %cst_46 : f32 to vector<16x128xf32>
    %41 = arith.select %38, %39, %40 : vector<16x128xi1>, vector<16x128xf32>
    %42 = math.absf %36 : vector<16x128xf32>
    %cst_47 = arith.constant 0.327591091 : f32
    %43 = vector.broadcast %cst_47 : f32 to vector<16x128xf32>
    %44 = arith.mulf %43, %42 : vector<16x128xf32>
    %cst_48 = arith.constant 1.000000e+00 : f32
    %45 = vector.broadcast %cst_48 : f32 to vector<16x128xf32>
    %46 = arith.addf %45, %44 : vector<16x128xf32>
    %47 = tpu.reciprocal %46 {approx = true} : vector<16x128xf32> -> vector<16x128xf32>
    %48 = arith.mulf %46, %47 : vector<16x128xf32>
    %cst_49 = arith.constant 2.000000e+00 : f32
    %49 = vector.broadcast %cst_49 : f32 to vector<16x128xf32>
    %50 = arith.subf %49, %48 : vector<16x128xf32>
    %51 = arith.mulf %47, %50 : vector<16x128xf32>
    %cst_50 = arith.constant 1.06140542 : f32
    %52 = vector.broadcast %cst_50 : f32 to vector<16x128xf32>
    %53 = arith.mulf %52, %51 : vector<16x128xf32>
    %cst_51 = arith.constant -1.45315206 : f32
    %54 = vector.broadcast %cst_51 : f32 to vector<16x128xf32>
    %55 = arith.addf %53, %54 : vector<16x128xf32>
    %56 = arith.mulf %55, %51 : vector<16x128xf32>
    %cst_52 = arith.constant 1.42141378 : f32
    %57 = vector.broadcast %cst_52 : f32 to vector<16x128xf32>
    %58 = arith.addf %56, %57 : vector<16x128xf32>
    %59 = arith.mulf %58, %51 : vector<16x128xf32>
    %cst_53 = arith.constant -0.284496725 : f32
    %60 = vector.broadcast %cst_53 : f32 to vector<16x128xf32>
    %61 = arith.addf %59, %60 : vector<16x128xf32>
    %62 = arith.mulf %61, %51 : vector<16x128xf32>
    %cst_54 = arith.constant 0.254829586 : f32
    %63 = vector.broadcast %cst_54 : f32 to vector<16x128xf32>
    %64 = arith.addf %62, %63 : vector<16x128xf32>
    %65 = arith.mulf %64, %51 : vector<16x128xf32>
    %cst_55 = arith.constant 0.000000e+00 : f32
    %66 = vector.broadcast %cst_55 : f32 to vector<16x128xf32>
    %67 = arith.subf %66, %42 : vector<16x128xf32>
    %68 = arith.mulf %67, %42 : vector<16x128xf32>
    %69 = math.exp %68 : vector<16x128xf32>
    %70 = arith.mulf %65, %69 : vector<16x128xf32>
    %cst_56 = arith.constant 1.000000e+00 : f32
    %71 = vector.broadcast %cst_56 : f32 to vector<16x128xf32>
    %72 = arith.subf %71, %70 : vector<16x128xf32>
    %73 = arith.mulf %41, %72 : vector<16x128xf32>
    %cst_57 = arith.constant 1.000000e+00 : f32
    %74 = vector.broadcast %cst_57 : f32 to vector<16x128xf32>
    %75 = arith.addf %74, %73 : vector<16x128xf32>
    %76 = arith.mulf %34, %75 : vector<16x128xf32>
    %c1_58 = arith.constant 1 : index
    %c8_59 = arith.constant 8 : index
    %77 = vector.load %arg13[%c1_58, %c8_59] : memref<18x144xf32, #tpu.memory_space<vmem>>, vector<16x128xf32>
    tpu.vector_store %arg13[%c1_58, %c8_59], %76 {strides = array<i32>} : memref<18x144xf32, #tpu.memory_space<vmem>>, vector<16x128xf32>,
    %c0_60 = arith.constant 0 : index
    %c0_61 = arith.constant 0 : index
    %78 = vector.load %arg13[%c0_60, %c0_61] : memref<18x144xf32, #tpu.memory_space<vmem>>, vector<16x128xf32>
    %c0_62 = arith.constant 0 : index
    %c0_63 = arith.constant 0 : index
    %79 = vector.load %arg16[%c0_62, %c0_63] : memref<16x1152xf32, #tpu.memory_space<vmem>>, vector<16x128xf32>
    tpu.vector_store %arg16[%c0_62, %c0_63], %78 {strides = array<i32>} : memref<16x1152xf32, #tpu.memory_space<vmem>>, vector<16x128xf32>,
    %c0_64 = arith.constant 0 : index
    %c8_65 = arith.constant 8 : index
    %80 = vector.load %arg13[%c0_64, %c8_65] : memref<18x144xf32, #tpu.memory_space<vmem>>, vector<16x128xf32>
    %c0_66 = arith.constant 0 : index
    %c128_67 = arith.constant 128 : index
    %81 = vector.load %arg16[%c0_66, %c128_67] : memref<16x1152xf32, #tpu.memory_space<vmem>>, vector<16x128xf32>
    tpu.vector_store %arg16[%c0_66, %c128_67], %80 {strides = array<i32>} : memref<16x1152xf32, #tpu.memory_space<vmem>>, vector<16x128xf32>,
    %c0_68 = arith.constant 0 : index
    %c16_69 = arith.constant 16 : index
    %82 = vector.load %arg13[%c0_68, %c16_69] : memref<18x144xf32, #tpu.memory_space<vmem>>, vector<16x128xf32>
    %c0_70 = arith.constant 0 : index
    %c256_71 = arith.constant 256 : index
    %83 = vector.load %arg16[%c0_70, %c256_71] : memref<16x1152xf32, #tpu.memory_space<vmem>>, vector<16x128xf32>
    tpu.vector_store %arg16[%c0_70, %c256_71], %82 {strides = array<i32>} : memref<16x1152xf32, #tpu.memory_space<vmem>>, vector<16x128xf32>,
    %c1_72 = arith.constant 1 : index
    %c0_73 = arith.constant 0 : index
    %84 = vector.load %arg13[%c1_72, %c0_73] : memref<18x144xf32, #tpu.memory_space<vmem>>, vector<16x128xf32>
    %c0_74 = arith.constant 0 : index
    %c384_75 = arith.constant 384 : index
    %85 = vector.load %arg16[%c0_74, %c384_75] : memref<16x1152xf32, #tpu.memory_space<vmem>>, vector<16x128xf32>
    tpu.vector_store %arg16[%c0_74, %c384_75], %84 {strides = array<i32>} : memref<16x1152xf32, #tpu.memory_space<vmem>>, vector<16x128xf32>,
    %c1_76 = arith.constant 1 : index
    %c8_77 = arith.constant 8 : index
    %86 = vector.load %arg13[%c1_76, %c8_77] : memref<18x144xf32, #tpu.memory_space<vmem>>, vector<16x128xf32>
    %c0_78 = arith.constant 0 : index
    %c512_79 = arith.constant 512 : index
    %87 = vector.load %arg16[%c0_78, %c512_79] : memref<16x1152xf32, #tpu.memory_space<vmem>>, vector<16x128xf32>
    tpu.vector_store %arg16[%c0_78, %c512_79], %86 {strides = array<i32>} : memref<16x1152xf32, #tpu.memory_space<vmem>>, vector<16x128xf32>,
    %c1_80 = arith.constant 1 : index
    %c16_81 = arith.constant 16 : index
    %88 = vector.load %arg13[%c1_80, %c16_81] : memref<18x144xf32, #tpu.memory_space<vmem>>, vector<16x128xf32>
    %c0_82 = arith.constant 0 : index
    %c640_83 = arith.constant 640 : index
    %89 = vector.load %arg16[%c0_82, %c640_83] : memref<16x1152xf32, #tpu.memory_space<vmem>>, vector<16x128xf32>
    tpu.vector_store %arg16[%c0_82, %c640_83], %88 {strides = array<i32>} : memref<16x1152xf32, #tpu.memory_space<vmem>>, vector<16x128xf32>,
    %c2_84 = arith.constant 2 : index
    %c0_85 = arith.constant 0 : index
    %90 = vector.load %arg13[%c2_84, %c0_85] : memref<18x144xf32, #tpu.memory_space<vmem>>, vector<16x128xf32>
    %c0_86 = arith.constant 0 : index
    %c768_87 = arith.constant 768 : index
    %91 = vector.load %arg16[%c0_86, %c768_87] : memref<16x1152xf32, #tpu.memory_space<vmem>>, vector<16x128xf32>
    tpu.vector_store %arg16[%c0_86, %c768_87], %90 {strides = array<i32>} : memref<16x1152xf32, #tpu.memory_space<vmem>>, vector<16x128xf32>,
    %c2_88 = arith.constant 2 : index
    %c8_89 = arith.constant 8 : index
    %92 = vector.load %arg13[%c2_88, %c8_89] : memref<18x144xf32, #tpu.memory_space<vmem>>, vector<16x128xf32>
    %c0_90 = arith.constant 0 : index
    %c896_91 = arith.constant 896 : index
    %93 = vector.load %arg16[%c0_90, %c896_91] : memref<16x1152xf32, #tpu.memory_space<vmem>>, vector<16x128xf32>
    tpu.vector_store %arg16[%c0_90, %c896_91], %92 {strides = array<i32>} : memref<16x1152xf32, #tpu.memory_space<vmem>>, vector<16x128xf32>,
    %c2_92 = arith.constant 2 : index
    %c16_93 = arith.constant 16 : index
    %94 = vector.load %arg13[%c2_92, %c16_93] : memref<18x144xf32, #tpu.memory_space<vmem>>, vector<16x128xf32>
    %c0_94 = arith.constant 0 : index
    %c1024_95 = arith.constant 1024 : index
    %95 = vector.load %arg16[%c0_94, %c1024_95] : memref<16x1152xf32, #tpu.memory_space<vmem>>, vector<16x128xf32>
    tpu.vector_store %arg16[%c0_94, %c1024_95], %94 {strides = array<i32>} : memref<16x1152xf32, #tpu.memory_space<vmem>>, vector<16x128xf32>,
    %c0_96 = arith.constant 0 : index
    %c0_97 = arith.constant 0 : index
    %96 = vector.load %arg16[%c0_96, %c0_97] : memref<16x1152xf32, #tpu.memory_space<vmem>>, vector<16x1152xf32>
    %c0_98 = arith.constant 0 : index
    %c0_99 = arith.constant 0 : index
    %97 = vector.load %arg4[%c0_98, %c0_99] : memref<1152x128xf32, #tpu.memory_space<vmem>>, vector<1152x128xf32>
    %cst_100 = arith.constant dense<0.000000e+00> : vector<16x128xf32>
    %98 = tpu.matmul %96, %97, %cst_100 {dimension_numbers = #tpu.dot_dimension_numbers<[1], [0], [0], [1], [0, 0, 1, 1], [], []>} : vector<16x1152xf32>, vector<1152x128xf32>, vector<16x128xf32> -> vector<16x128xf32>
    %c0_101 = arith.constant 0 : index
    %c0_102 = arith.constant 0 : index
    %99 = vector.load %arg5[%c0_101, %c0_102] : memref<1x128xf32, #tpu.memory_space<vmem>>, vector<1x128xf32>
    %100 = vector.broadcast %99 : vector<1x128xf32> to vector<16x128xf32>
    %101 = arith.addf %98, %100 : vector<16x128xf32>
    %cst_103 = arith.constant 0.000000e+00 : f32
    %102 = vector.broadcast %cst_103 : f32 to vector<2x160xf32>
    %cst_104 = arith.constant 0.000000e+00 : f32
    %103 = vector.broadcast %cst_104 : f32 to vector<20x16xf32>
    %c0_105 = arith.constant 0 : index
    %c0_106 = arith.constant 0 : index
    %104 = vector.load %arg14[%c0_105, %c0_106] : memref<20x160xf32, #tpu.memory_space<vmem>>, vector<2x160xf32>
    tpu.vector_store %arg14[%c0_105, %c0_106], %102 {strides = array<i32>} : memref<20x160xf32, #tpu.memory_space<vmem>>, vector<2x160xf32>,
    %c18 = arith.constant 18 : index
    %c0_107 = arith.constant 0 : index
    %105 = vector.load %arg14[%c18, %c0_107] : memref<20x160xf32, #tpu.memory_space<vmem>>, vector<2x160xf32>
    tpu.vector_store %arg14[%c18, %c0_107], %102 {strides = array<i32>} : memref<20x160xf32, #tpu.memory_space<vmem>>, vector<2x160xf32>,
    %c0_108 = arith.constant 0 : index
    %c0_109 = arith.constant 0 : index
    %106 = vector.load %arg14[%c0_108, %c0_109] : memref<20x160xf32, #tpu.memory_space<vmem>>, vector<20x16xf32>
    tpu.vector_store %arg14[%c0_108, %c0_109], %103 {strides = array<i32>} : memref<20x160xf32, #tpu.memory_space<vmem>>, vector<20x16xf32>,
    %c0_110 = arith.constant 0 : index
    %c144 = arith.constant 144 : index
    %107 = vector.load %arg14[%c0_110, %c144] : memref<20x160xf32, #tpu.memory_space<vmem>>, vector<20x16xf32>
    tpu.vector_store %arg14[%c0_110, %c144], %103 {strides = array<i32>} : memref<20x160xf32, #tpu.memory_space<vmem>>, vector<20x16xf32>,
    %c2_111 = arith.constant 2 : index
    %c16_112 = arith.constant 16 : index
    %108 = vector.load %arg14[%c2_111, %c16_112] : memref<20x160xf32, #tpu.memory_space<vmem>>, vector<16x128xf32>
    tpu.vector_store %arg14[%c2_111, %c16_112], %101 {strides = array<i32>} : memref<20x160xf32, #tpu.memory_space<vmem>>, vector<16x128xf32>,
    %c0_113 = arith.constant 0 : index
    %c0_114 = arith.constant 0 : index
    %109 = vector.load %arg6[%c0_113, %c0_114] : memref<25x128xf32, #tpu.memory_space<vmem>>, vector<25x128xf32>
    %cst_115 = arith.constant 0.000000e+00 : f32
    %110 = vector.broadcast %cst_115 : f32 to vector<16x128xf32>
    %c0_116 = arith.constant 0 : index
    %c0_117 = arith.constant 0 : index
    %111 = vector.load %arg14[%c0_116, %c0_117] : memref<20x160xf32, #tpu.memory_space<vmem>>, vector<16x128xf32>
    %112 = vector.extract_strided_slice %109 {offsets = [0, 0], sizes = [1, 128], strides = [1, 1]} : vector<25x128xf32> to vector<1x128xf32>
    %113 = vector.broadcast %112 : vector<1x128xf32> to vector<16x128xf32>
    %114 = arith.mulf %111, %113 : vector<16x128xf32>
    %115 = arith.addf %110, %114 : vector<16x128xf32>
    %c0_118 = arith.constant 0 : index
    %c8_119 = arith.constant 8 : index
    %116 = vector.load %arg14[%c0_118, %c8_119] : memref<20x160xf32, #tpu.memory_space<vmem>>, vector<16x128xf32>
    %117 = vector.extract_strided_slice %109 {offsets = [1, 0], sizes = [1, 128], strides = [1, 1]} : vector<25x128xf32> to vector<1x128xf32>
    %118 = vector.broadcast %117 : vector<1x128xf32> to vector<16x128xf32>
    %119 = arith.mulf %116, %118 : vector<16x128xf32>
    %120 = arith.addf %115, %119 : vector<16x128xf32>
    %c0_120 = arith.constant 0 : index
    %c16_121 = arith.constant 16 : index
    %121 = vector.load %arg14[%c0_120, %c16_121] : memref<20x160xf32, #tpu.memory_space<vmem>>, vector<16x128xf32>
    %122 = vector.extract_strided_slice %109 {offsets = [2, 0], sizes = [1, 128], strides = [1, 1]} : vector<25x128xf32> to vector<1x128xf32>
    %123 = vector.broadcast %122 : vector<1x128xf32> to vector<16x128xf32>
    %124 = arith.mulf %121, %123 : vector<16x128xf32>
    %125 = arith.addf %120, %124 : vector<16x128xf32>
    %c0_122 = arith.constant 0 : index
    %c24 = arith.constant 24 : index
    %126 = vector.load %arg14[%c0_122, %c24] : memref<20x160xf32, #tpu.memory_space<vmem>>, vector<16x128xf32>
    %127 = vector.extract_strided_slice %109 {offsets = [3, 0], sizes = [1, 128], strides = [1, 1]} : vector<25x128xf32> to vector<1x128xf32>
    %128 = vector.broadcast %127 : vector<1x128xf32> to vector<16x128xf32>
    %129 = arith.mulf %126, %128 : vector<16x128xf32>
    %130 = arith.addf %125, %129 : vector<16x128xf32>
    %c0_123 = arith.constant 0 : index
    %c32 = arith.constant 32 : index
    %131 = vector.load %arg14[%c0_123, %c32] : memref<20x160xf32, #tpu.memory_space<vmem>>, vector<16x128xf32>
    %132 = vector.extract_strided_slice %109 {offsets = [4, 0], sizes = [1, 128], strides = [1, 1]} : vector<25x128xf32> to vector<1x128xf32>
    %133 = vector.broadcast %132 : vector<1x128xf32> to vector<16x128xf32>
    %134 = arith.mulf %131, %133 : vector<16x128xf32>
    %135 = arith.addf %130, %134 : vector<16x128xf32>
    %c1_124 = arith.constant 1 : index
    %c0_125 = arith.constant 0 : index
    %136 = vector.load %arg14[%c1_124, %c0_125] : memref<20x160xf32, #tpu.memory_space<vmem>>, vector<16x128xf32>
    %137 = vector.extract_strided_slice %109 {offsets = [5, 0], sizes = [1, 128], strides = [1, 1]} : vector<25x128xf32> to vector<1x128xf32>
    %138 = vector.broadcast %137 : vector<1x128xf32> to vector<16x128xf32>
    %139 = arith.mulf %136, %138 : vector<16x128xf32>
    %140 = arith.addf %135, %139 : vector<16x128xf32>
    %c1_126 = arith.constant 1 : index
    %c8_127 = arith.constant 8 : index
    %141 = vector.load %arg14[%c1_126, %c8_127] : memref<20x160xf32, #tpu.memory_space<vmem>>, vector<16x128xf32>
    %142 = vector.extract_strided_slice %109 {offsets = [6, 0], sizes = [1, 128], strides = [1, 1]} : vector<25x128xf32> to vector<1x128xf32>
    %143 = vector.broadcast %142 : vector<1x128xf32> to vector<16x128xf32>
    %144 = arith.mulf %141, %143 : vector<16x128xf32>
    %145 = arith.addf %140, %144 : vector<16x128xf32>
    %c1_128 = arith.constant 1 : index
    %c16_129 = arith.constant 16 : index
    %146 = vector.load %arg14[%c1_128, %c16_129] : memref<20x160xf32, #tpu.memory_space<vmem>>, vector<16x128xf32>
    %147 = vector.extract_strided_slice %109 {offsets = [7, 0], sizes = [1, 128], strides = [1, 1]} : vector<25x128xf32> to vector<1x128xf32>
    %148 = vector.broadcast %147 : vector<1x128xf32> to vector<16x128xf32>
    %149 = arith.mulf %146, %148 : vector<16x128xf32>
    %150 = arith.addf %145, %149 : vector<16x128xf32>
    %c1_130 = arith.constant 1 : index
    %c24_131 = arith.constant 24 : index
    %151 = vector.load %arg14[%c1_130, %c24_131] : memref<20x160xf32, #tpu.memory_space<vmem>>, vector<16x128xf32>
    %152 = vector.extract_strided_slice %109 {offsets = [8, 0], sizes = [1, 128], strides = [1, 1]} : vector<25x128xf32> to vector<1x128xf32>
    %153 = vector.broadcast %152 : vector<1x128xf32> to vector<16x128xf32>
    %154 = arith.mulf %151, %153 : vector<16x128xf32>
    %155 = arith.addf %150, %154 : vector<16x128xf32>
    %c1_132 = arith.constant 1 : index
    %c32_133 = arith.constant 32 : index
    %156 = vector.load %arg14[%c1_132, %c32_133] : memref<20x160xf32, #tpu.memory_space<vmem>>, vector<16x128xf32>
    %157 = vector.extract_strided_slice %109 {offsets = [9, 0], sizes = [1, 128], strides = [1, 1]} : vector<25x128xf32> to vector<1x128xf32>
    %158 = vector.broadcast %157 : vector<1x128xf32> to vector<16x128xf32>
    %159 = arith.mulf %156, %158 : vector<16x128xf32>
    %160 = arith.addf %155, %159 : vector<16x128xf32>
    %c2_134 = arith.constant 2 : index
    %c0_135 = arith.constant 0 : index
    %161 = vector.load %arg14[%c2_134, %c0_135] : memref<20x160xf32, #tpu.memory_space<vmem>>, vector<16x128xf32>
    %162 = vector.extract_strided_slice %109 {offsets = [10, 0], sizes = [1, 128], strides = [1, 1]} : vector<25x128xf32> to vector<1x128xf32>
    %163 = vector.broadcast %162 : vector<1x128xf32> to vector<16x128xf32>
    %164 = arith.mulf %161, %163 : vector<16x128xf32>
    %165 = arith.addf %160, %164 : vector<16x128xf32>
    %c2_136 = arith.constant 2 : index
    %c8_137 = arith.constant 8 : index
    %166 = vector.load %arg14[%c2_136, %c8_137] : memref<20x160xf32, #tpu.memory_space<vmem>>, vector<16x128xf32>
    %167 = vector.extract_strided_slice %109 {offsets = [11, 0], sizes = [1, 128], strides = [1, 1]} : vector<25x128xf32> to vector<1x128xf32>
    %168 = vector.broadcast %167 : vector<1x128xf32> to vector<16x128xf32>
    %169 = arith.mulf %166, %168 : vector<16x128xf32>
    %170 = arith.addf %165, %169 : vector<16x128xf32>
    %c2_138 = arith.constant 2 : index
    %c16_139 = arith.constant 16 : index
    %171 = vector.load %arg14[%c2_138, %c16_139] : memref<20x160xf32, #tpu.memory_space<vmem>>, vector<16x128xf32>
    %172 = vector.extract_strided_slice %109 {offsets = [12, 0], sizes = [1, 128], strides = [1, 1]} : vector<25x128xf32> to vector<1x128xf32>
    %173 = vector.broadcast %172 : vector<1x128xf32> to vector<16x128xf32>
    %174 = arith.mulf %171, %173 : vector<16x128xf32>
    %175 = arith.addf %170, %174 : vector<16x128xf32>
    %c2_140 = arith.constant 2 : index
    %c24_141 = arith.constant 24 : index
    %176 = vector.load %arg14[%c2_140, %c24_141] : memref<20x160xf32, #tpu.memory_space<vmem>>, vector<16x128xf32>
    %177 = vector.extract_strided_slice %109 {offsets = [13, 0], sizes = [1, 128], strides = [1, 1]} : vector<25x128xf32> to vector<1x128xf32>
    %178 = vector.broadcast %177 : vector<1x128xf32> to vector<16x128xf32>
    %179 = arith.mulf %176, %178 : vector<16x128xf32>
    %180 = arith.addf %175, %179 : vector<16x128xf32>
    %c2_142 = arith.constant 2 : index
    %c32_143 = arith.constant 32 : index
    %181 = vector.load %arg14[%c2_142, %c32_143] : memref<20x160xf32, #tpu.memory_space<vmem>>, vector<16x128xf32>
    %182 = vector.extract_strided_slice %109 {offsets = [14, 0], sizes = [1, 128], strides = [1, 1]} : vector<25x128xf32> to vector<1x128xf32>
    %183 = vector.broadcast %182 : vector<1x128xf32> to vector<16x128xf32>
    %184 = arith.mulf %181, %183 : vector<16x128xf32>
    %185 = arith.addf %180, %184 : vector<16x128xf32>
    %c3 = arith.constant 3 : index
    %c0_144 = arith.constant 0 : index
    %186 = vector.load %arg14[%c3, %c0_144] : memref<20x160xf32, #tpu.memory_space<vmem>>, vector<16x128xf32>
    %187 = vector.extract_strided_slice %109 {offsets = [15, 0], sizes = [1, 128], strides = [1, 1]} : vector<25x128xf32> to vector<1x128xf32>
    %188 = vector.broadcast %187 : vector<1x128xf32> to vector<16x128xf32>
    %189 = arith.mulf %186, %188 : vector<16x128xf32>
    %190 = arith.addf %185, %189 : vector<16x128xf32>
    %c3_145 = arith.constant 3 : index
    %c8_146 = arith.constant 8 : index
    %191 = vector.load %arg14[%c3_145, %c8_146] : memref<20x160xf32, #tpu.memory_space<vmem>>, vector<16x128xf32>
    %192 = vector.extract_strided_slice %109 {offsets = [16, 0], sizes = [1, 128], strides = [1, 1]} : vector<25x128xf32> to vector<1x128xf32>
    %193 = vector.broadcast %192 : vector<1x128xf32> to vector<16x128xf32>
    %194 = arith.mulf %191, %193 : vector<16x128xf32>
    %195 = arith.addf %190, %194 : vector<16x128xf32>
    %c3_147 = arith.constant 3 : index
    %c16_148 = arith.constant 16 : index
    %196 = vector.load %arg14[%c3_147, %c16_148] : memref<20x160xf32, #tpu.memory_space<vmem>>, vector<16x128xf32>
    %197 = vector.extract_strided_slice %109 {offsets = [17, 0], sizes = [1, 128], strides = [1, 1]} : vector<25x128xf32> to vector<1x128xf32>
    %198 = vector.broadcast %197 : vector<1x128xf32> to vector<16x128xf32>
    %199 = arith.mulf %196, %198 : vector<16x128xf32>
    %200 = arith.addf %195, %199 : vector<16x128xf32>
    %c3_149 = arith.constant 3 : index
    %c24_150 = arith.constant 24 : index
    %201 = vector.load %arg14[%c3_149, %c24_150] : memref<20x160xf32, #tpu.memory_space<vmem>>, vector<16x128xf32>
    %202 = vector.extract_strided_slice %109 {offsets = [18, 0], sizes = [1, 128], strides = [1, 1]} : vector<25x128xf32> to vector<1x128xf32>
    %203 = vector.broadcast %202 : vector<1x128xf32> to vector<16x128xf32>
    %204 = arith.mulf %201, %203 : vector<16x128xf32>
    %205 = arith.addf %200, %204 : vector<16x128xf32>
    %c3_151 = arith.constant 3 : index
    %c32_152 = arith.constant 32 : index
    %206 = vector.load %arg14[%c3_151, %c32_152] : memref<20x160xf32, #tpu.memory_space<vmem>>, vector<16x128xf32>
    %207 = vector.extract_strided_slice %109 {offsets = [19, 0], sizes = [1, 128], strides = [1, 1]} : vector<25x128xf32> to vector<1x128xf32>
    %208 = vector.broadcast %207 : vector<1x128xf32> to vector<16x128xf32>
    %209 = arith.mulf %206, %208 : vector<16x128xf32>
    %210 = arith.addf %205, %209 : vector<16x128xf32>
    %c4 = arith.constant 4 : index
    %c0_153 = arith.constant 0 : index
    %211 = vector.load %arg14[%c4, %c0_153] : memref<20x160xf32, #tpu.memory_space<vmem>>, vector<16x128xf32>
    %212 = vector.extract_strided_slice %109 {offsets = [20, 0], sizes = [1, 128], strides = [1, 1]} : vector<25x128xf32> to vector<1x128xf32>
    %213 = vector.broadcast %212 : vector<1x128xf32> to vector<16x128xf32>
    %214 = arith.mulf %211, %213 : vector<16x128xf32>
    %215 = arith.addf %210, %214 : vector<16x128xf32>
    %c4_154 = arith.constant 4 : index
    %c8_155 = arith.constant 8 : index
    %216 = vector.load %arg14[%c4_154, %c8_155] : memref<20x160xf32, #tpu.memory_space<vmem>>, vector<16x128xf32>
    %217 = vector.extract_strided_slice %109 {offsets = [21, 0], sizes = [1, 128], strides = [1, 1]} : vector<25x128xf32> to vector<1x128xf32>
    %218 = vector.broadcast %217 : vector<1x128xf32> to vector<16x128xf32>
    %219 = arith.mulf %216, %218 : vector<16x128xf32>
    %220 = arith.addf %215, %219 : vector<16x128xf32>
    %c4_156 = arith.constant 4 : index
    %c16_157 = arith.constant 16 : index
    %221 = vector.load %arg14[%c4_156, %c16_157] : memref<20x160xf32, #tpu.memory_space<vmem>>, vector<16x128xf32>
    %222 = vector.extract_strided_slice %109 {offsets = [22, 0], sizes = [1, 128], strides = [1, 1]} : vector<25x128xf32> to vector<1x128xf32>
    %223 = vector.broadcast %222 : vector<1x128xf32> to vector<16x128xf32>
    %224 = arith.mulf %221, %223 : vector<16x128xf32>
    %225 = arith.addf %220, %224 : vector<16x128xf32>
    %c4_158 = arith.constant 4 : index
    %c24_159 = arith.constant 24 : index
    %226 = vector.load %arg14[%c4_158, %c24_159] : memref<20x160xf32, #tpu.memory_space<vmem>>, vector<16x128xf32>
    %227 = vector.extract_strided_slice %109 {offsets = [23, 0], sizes = [1, 128], strides = [1, 1]} : vector<25x128xf32> to vector<1x128xf32>
    %228 = vector.broadcast %227 : vector<1x128xf32> to vector<16x128xf32>
    %229 = arith.mulf %226, %228 : vector<16x128xf32>
    %230 = arith.addf %225, %229 : vector<16x128xf32>
    %c4_160 = arith.constant 4 : index
    %c32_161 = arith.constant 32 : index
    %231 = vector.load %arg14[%c4_160, %c32_161] : memref<20x160xf32, #tpu.memory_space<vmem>>, vector<16x128xf32>
    %232 = vector.extract_strided_slice %109 {offsets = [24, 0], sizes = [1, 128], strides = [1, 1]} : vector<25x128xf32> to vector<1x128xf32>
    %233 = vector.broadcast %232 : vector<1x128xf32> to vector<16x128xf32>
    %234 = arith.mulf %231, %233 : vector<16x128xf32>
    %235 = arith.addf %230, %234 : vector<16x128xf32>
    %c0_162 = arith.constant 0 : index
    %c0_163 = arith.constant 0 : index
    %236 = vector.load %arg7[%c0_162, %c0_163] : memref<1x128xf32, #tpu.memory_space<vmem>>, vector<1x128xf32>
    %237 = vector.broadcast %236 : vector<1x128xf32> to vector<16x128xf32>
    %238 = arith.addf %235, %237 : vector<16x128xf32>
    %cst_164 = arith.constant 0.000000e+00 : f32
    %239 = vector.broadcast %cst_164 : f32 to vector<9x272xf32>
    %cst_165 = arith.constant 0.000000e+00 : f32
    %240 = vector.broadcast %cst_165 : f32 to vector<34x72xf32>
    %c0_166 = arith.constant 0 : index
    %c0_167 = arith.constant 0 : index
    %241 = vector.load %arg15[%c0_166, %c0_167] : memref<34x272xf32, #tpu.memory_space<vmem>>, vector<9x272xf32>
    tpu.vector_store %arg15[%c0_166, %c0_167], %239 {strides = array<i32>} : memref<34x272xf32, #tpu.memory_space<vmem>>, vector<9x272xf32>,
    %c25 = arith.constant 25 : index
    %c0_168 = arith.constant 0 : index
    %242 = vector.load %arg15[%c25, %c0_168] : memref<34x272xf32, #tpu.memory_space<vmem>>, vector<9x272xf32>
    tpu.vector_store %arg15[%c25, %c0_168], %239 {strides = array<i32>} : memref<34x272xf32, #tpu.memory_space<vmem>>, vector<9x272xf32>,
    %c0_169 = arith.constant 0 : index
    %c0_170 = arith.constant 0 : index
    %243 = vector.load %arg15[%c0_169, %c0_170] : memref<34x272xf32, #tpu.memory_space<vmem>>, vector<34x72xf32>
    tpu.vector_store %arg15[%c0_169, %c0_170], %240 {strides = array<i32>} : memref<34x272xf32, #tpu.memory_space<vmem>>, vector<34x72xf32>,
    %c0_171 = arith.constant 0 : index
    %c200 = arith.constant 200 : index
    %244 = vector.load %arg15[%c0_171, %c200] : memref<34x272xf32, #tpu.memory_space<vmem>>, vector<34x72xf32>
    tpu.vector_store %arg15[%c0_171, %c200], %240 {strides = array<i32>} : memref<34x272xf32, #tpu.memory_space<vmem>>, vector<34x72xf32>,
    %c9 = arith.constant 9 : index
    %c72 = arith.constant 72 : index
    %245 = vector.load %arg15[%c9, %c72] : memref<34x272xf32, #tpu.memory_space<vmem>>, vector<16x128xf32>
    tpu.vector_store %arg15[%c9, %c72], %238 {strides = array<i32>} : memref<34x272xf32, #tpu.memory_space<vmem>>, vector<16x128xf32>,
    %c0_172 = arith.constant 0 : index
    %c0_173 = arith.constant 0 : index
    %246 = vector.load %arg8[%c0_172, %c0_173] : memref<49x128xf32, #tpu.memory_space<vmem>>, vector<49x128xf32>
    %cst_174 = arith.constant 0.000000e+00 : f32
    %247 = vector.broadcast %cst_174 : f32 to vector<16x128xf32>
    %c0_175 = arith.constant 0 : index
    %c0_176 = arith.constant 0 : index
    %248 = vector.load %arg15[%c0_175, %c0_176] : memref<34x272xf32, #tpu.memory_space<vmem>>, vector<16x128xf32>
    %249 = vector.extract_strided_slice %246 {offsets = [0, 0], sizes = [1, 128], strides = [1, 1]} : vector<49x128xf32> to vector<1x128xf32>
    %250 = vector.broadcast %249 : vector<1x128xf32> to vector<16x128xf32>
    %251 = arith.mulf %248, %250 : vector<16x128xf32>
    %252 = arith.addf %247, %251 : vector<16x128xf32>
    %c0_177 = arith.constant 0 : index
    %c24_178 = arith.constant 24 : index
    %253 = vector.load %arg15[%c0_177, %c24_178] : memref<34x272xf32, #tpu.memory_space<vmem>>, vector<16x128xf32>
    %254 = vector.extract_strided_slice %246 {offsets = [1, 0], sizes = [1, 128], strides = [1, 1]} : vector<49x128xf32> to vector<1x128xf32>
    %255 = vector.broadcast %254 : vector<1x128xf32> to vector<16x128xf32>
    %256 = arith.mulf %253, %255 : vector<16x128xf32>
    %257 = arith.addf %252, %256 : vector<16x128xf32>
    %c0_179 = arith.constant 0 : index
    %c48 = arith.constant 48 : index
    %258 = vector.load %arg15[%c0_179, %c48] : memref<34x272xf32, #tpu.memory_space<vmem>>, vector<16x128xf32>
    %259 = vector.extract_strided_slice %246 {offsets = [2, 0], sizes = [1, 128], strides = [1, 1]} : vector<49x128xf32> to vector<1x128xf32>
    %260 = vector.broadcast %259 : vector<1x128xf32> to vector<16x128xf32>
    %261 = arith.mulf %258, %260 : vector<16x128xf32>
    %262 = arith.addf %257, %261 : vector<16x128xf32>
    %c0_180 = arith.constant 0 : index
    %c72_181 = arith.constant 72 : index
    %263 = vector.load %arg15[%c0_180, %c72_181] : memref<34x272xf32, #tpu.memory_space<vmem>>, vector<16x128xf32>
    %264 = vector.extract_strided_slice %246 {offsets = [3, 0], sizes = [1, 128], strides = [1, 1]} : vector<49x128xf32> to vector<1x128xf32>
    %265 = vector.broadcast %264 : vector<1x128xf32> to vector<16x128xf32>
    %266 = arith.mulf %263, %265 : vector<16x128xf32>
    %267 = arith.addf %262, %266 : vector<16x128xf32>
    %c0_182 = arith.constant 0 : index
    %c96 = arith.constant 96 : index
    %268 = vector.load %arg15[%c0_182, %c96] : memref<34x272xf32, #tpu.memory_space<vmem>>, vector<16x128xf32>
    %269 = vector.extract_strided_slice %246 {offsets = [4, 0], sizes = [1, 128], strides = [1, 1]} : vector<49x128xf32> to vector<1x128xf32>
    %270 = vector.broadcast %269 : vector<1x128xf32> to vector<16x128xf32>
    %271 = arith.mulf %268, %270 : vector<16x128xf32>
    %272 = arith.addf %267, %271 : vector<16x128xf32>
    %c0_183 = arith.constant 0 : index
    %c120 = arith.constant 120 : index
    %273 = vector.load %arg15[%c0_183, %c120] : memref<34x272xf32, #tpu.memory_space<vmem>>, vector<16x128xf32>
    %274 = vector.extract_strided_slice %246 {offsets = [5, 0], sizes = [1, 128], strides = [1, 1]} : vector<49x128xf32> to vector<1x128xf32>
    %275 = vector.broadcast %274 : vector<1x128xf32> to vector<16x128xf32>
    %276 = arith.mulf %273, %275 : vector<16x128xf32>
    %277 = arith.addf %272, %276 : vector<16x128xf32>
    %c0_184 = arith.constant 0 : index
    %c144_185 = arith.constant 144 : index
    %278 = vector.load %arg15[%c0_184, %c144_185] : memref<34x272xf32, #tpu.memory_space<vmem>>, vector<16x128xf32>
    %279 = vector.extract_strided_slice %246 {offsets = [6, 0], sizes = [1, 128], strides = [1, 1]} : vector<49x128xf32> to vector<1x128xf32>
    %280 = vector.broadcast %279 : vector<1x128xf32> to vector<16x128xf32>
    %281 = arith.mulf %278, %280 : vector<16x128xf32>
    %282 = arith.addf %277, %281 : vector<16x128xf32>
    %c3_186 = arith.constant 3 : index
    %c0_187 = arith.constant 0 : index
    %283 = vector.load %arg15[%c3_186, %c0_187] : memref<34x272xf32, #tpu.memory_space<vmem>>, vector<16x128xf32>
    %284 = vector.extract_strided_slice %246 {offsets = [7, 0], sizes = [1, 128], strides = [1, 1]} : vector<49x128xf32> to vector<1x128xf32>
    %285 = vector.broadcast %284 : vector<1x128xf32> to vector<16x128xf32>
    %286 = arith.mulf %283, %285 : vector<16x128xf32>
    %287 = arith.addf %282, %286 : vector<16x128xf32>
    %c3_188 = arith.constant 3 : index
    %c24_189 = arith.constant 24 : index
    %288 = vector.load %arg15[%c3_188, %c24_189] : memref<34x272xf32, #tpu.memory_space<vmem>>, vector<16x128xf32>
    %289 = vector.extract_strided_slice %246 {offsets = [8, 0], sizes = [1, 128], strides = [1, 1]} : vector<49x128xf32> to vector<1x128xf32>
    %290 = vector.broadcast %289 : vector<1x128xf32> to vector<16x128xf32>
    %291 = arith.mulf %288, %290 : vector<16x128xf32>
    %292 = arith.addf %287, %291 : vector<16x128xf32>
    %c3_190 = arith.constant 3 : index
    %c48_191 = arith.constant 48 : index
    %293 = vector.load %arg15[%c3_190, %c48_191] : memref<34x272xf32, #tpu.memory_space<vmem>>, vector<16x128xf32>
    %294 = vector.extract_strided_slice %246 {offsets = [9, 0], sizes = [1, 128], strides = [1, 1]} : vector<49x128xf32> to vector<1x128xf32>
    %295 = vector.broadcast %294 : vector<1x128xf32> to vector<16x128xf32>
    %296 = arith.mulf %293, %295 : vector<16x128xf32>
    %297 = arith.addf %292, %296 : vector<16x128xf32>
    %c3_192 = arith.constant 3 : index
    %c72_193 = arith.constant 72 : index
    %298 = vector.load %arg15[%c3_192, %c72_193] : memref<34x272xf32, #tpu.memory_space<vmem>>, vector<16x128xf32>
    %299 = vector.extract_strided_slice %246 {offsets = [10, 0], sizes = [1, 128], strides = [1, 1]} : vector<49x128xf32> to vector<1x128xf32>
    %300 = vector.broadcast %299 : vector<1x128xf32> to vector<16x128xf32>
    %301 = arith.mulf %298, %300 : vector<16x128xf32>
    %302 = arith.addf %297, %301 : vector<16x128xf32>
    %c3_194 = arith.constant 3 : index
    %c96_195 = arith.constant 96 : index
    %303 = vector.load %arg15[%c3_194, %c96_195] : memref<34x272xf32, #tpu.memory_space<vmem>>, vector<16x128xf32>
    %304 = vector.extract_strided_slice %246 {offsets = [11, 0], sizes = [1, 128], strides = [1, 1]} : vector<49x128xf32> to vector<1x128xf32>
    %305 = vector.broadcast %304 : vector<1x128xf32> to vector<16x128xf32>
    %306 = arith.mulf %303, %305 : vector<16x128xf32>
    %307 = arith.addf %302, %306 : vector<16x128xf32>
    %c3_196 = arith.constant 3 : index
    %c120_197 = arith.constant 120 : index
    %308 = vector.load %arg15[%c3_196, %c120_197] : memref<34x272xf32, #tpu.memory_space<vmem>>, vector<16x128xf32>
    %309 = vector.extract_strided_slice %246 {offsets = [12, 0], sizes = [1, 128], strides = [1, 1]} : vector<49x128xf32> to vector<1x128xf32>
    %310 = vector.broadcast %309 : vector<1x128xf32> to vector<16x128xf32>
    %311 = arith.mulf %308, %310 : vector<16x128xf32>
    %312 = arith.addf %307, %311 : vector<16x128xf32>
    %c3_198 = arith.constant 3 : index
    %c144_199 = arith.constant 144 : index
    %313 = vector.load %arg15[%c3_198, %c144_199] : memref<34x272xf32, #tpu.memory_space<vmem>>, vector<16x128xf32>
    %314 = vector.extract_strided_slice %246 {offsets = [13, 0], sizes = [1, 128], strides = [1, 1]} : vector<49x128xf32> to vector<1x128xf32>
    %315 = vector.broadcast %314 : vector<1x128xf32> to vector<16x128xf32>
    %316 = arith.mulf %313, %315 : vector<16x128xf32>
    %317 = arith.addf %312, %316 : vector<16x128xf32>
    %c6 = arith.constant 6 : index
    %c0_200 = arith.constant 0 : index
    %318 = vector.load %arg15[%c6, %c0_200] : memref<34x272xf32, #tpu.memory_space<vmem>>, vector<16x128xf32>
    %319 = vector.extract_strided_slice %246 {offsets = [14, 0], sizes = [1, 128], strides = [1, 1]} : vector<49x128xf32> to vector<1x128xf32>
    %320 = vector.broadcast %319 : vector<1x128xf32> to vector<16x128xf32>
    %321 = arith.mulf %318, %320 : vector<16x128xf32>
    %322 = arith.addf %317, %321 : vector<16x128xf32>
    %c6_201 = arith.constant 6 : index
    %c24_202 = arith.constant 24 : index
    %323 = vector.load %arg15[%c6_201, %c24_202] : memref<34x272xf32, #tpu.memory_space<vmem>>, vector<16x128xf32>
    %324 = vector.extract_strided_slice %246 {offsets = [15, 0], sizes = [1, 128], strides = [1, 1]} : vector<49x128xf32> to vector<1x128xf32>
    %325 = vector.broadcast %324 : vector<1x128xf32> to vector<16x128xf32>
    %326 = arith.mulf %323, %325 : vector<16x128xf32>
    %327 = arith.addf %322, %326 : vector<16x128xf32>
    %c6_203 = arith.constant 6 : index
    %c48_204 = arith.constant 48 : index
    %328 = vector.load %arg15[%c6_203, %c48_204] : memref<34x272xf32, #tpu.memory_space<vmem>>, vector<16x128xf32>
    %329 = vector.extract_strided_slice %246 {offsets = [16, 0], sizes = [1, 128], strides = [1, 1]} : vector<49x128xf32> to vector<1x128xf32>
    %330 = vector.broadcast %329 : vector<1x128xf32> to vector<16x128xf32>
    %331 = arith.mulf %328, %330 : vector<16x128xf32>
    %332 = arith.addf %327, %331 : vector<16x128xf32>
    %c6_205 = arith.constant 6 : index
    %c72_206 = arith.constant 72 : index
    %333 = vector.load %arg15[%c6_205, %c72_206] : memref<34x272xf32, #tpu.memory_space<vmem>>, vector<16x128xf32>
    %334 = vector.extract_strided_slice %246 {offsets = [17, 0], sizes = [1, 128], strides = [1, 1]} : vector<49x128xf32> to vector<1x128xf32>
    %335 = vector.broadcast %334 : vector<1x128xf32> to vector<16x128xf32>
    %336 = arith.mulf %333, %335 : vector<16x128xf32>
    %337 = arith.addf %332, %336 : vector<16x128xf32>
    %c6_207 = arith.constant 6 : index
    %c96_208 = arith.constant 96 : index
    %338 = vector.load %arg15[%c6_207, %c96_208] : memref<34x272xf32, #tpu.memory_space<vmem>>, vector<16x128xf32>
    %339 = vector.extract_strided_slice %246 {offsets = [18, 0], sizes = [1, 128], strides = [1, 1]} : vector<49x128xf32> to vector<1x128xf32>
    %340 = vector.broadcast %339 : vector<1x128xf32> to vector<16x128xf32>
    %341 = arith.mulf %338, %340 : vector<16x128xf32>
    %342 = arith.addf %337, %341 : vector<16x128xf32>
    %c6_209 = arith.constant 6 : index
    %c120_210 = arith.constant 120 : index
    %343 = vector.load %arg15[%c6_209, %c120_210] : memref<34x272xf32, #tpu.memory_space<vmem>>, vector<16x128xf32>
    %344 = vector.extract_strided_slice %246 {offsets = [19, 0], sizes = [1, 128], strides = [1, 1]} : vector<49x128xf32> to vector<1x128xf32>
    %345 = vector.broadcast %344 : vector<1x128xf32> to vector<16x128xf32>
    %346 = arith.mulf %343, %345 : vector<16x128xf32>
    %347 = arith.addf %342, %346 : vector<16x128xf32>
    %c6_211 = arith.constant 6 : index
    %c144_212 = arith.constant 144 : index
    %348 = vector.load %arg15[%c6_211, %c144_212] : memref<34x272xf32, #tpu.memory_space<vmem>>, vector<16x128xf32>
    %349 = vector.extract_strided_slice %246 {offsets = [20, 0], sizes = [1, 128], strides = [1, 1]} : vector<49x128xf32> to vector<1x128xf32>
    %350 = vector.broadcast %349 : vector<1x128xf32> to vector<16x128xf32>
    %351 = arith.mulf %348, %350 : vector<16x128xf32>
    %352 = arith.addf %347, %351 : vector<16x128xf32>
    %c9_213 = arith.constant 9 : index
    %c0_214 = arith.constant 0 : index
    %353 = vector.load %arg15[%c9_213, %c0_214] : memref<34x272xf32, #tpu.memory_space<vmem>>, vector<16x128xf32>
    %354 = vector.extract_strided_slice %246 {offsets = [21, 0], sizes = [1, 128], strides = [1, 1]} : vector<49x128xf32> to vector<1x128xf32>
    %355 = vector.broadcast %354 : vector<1x128xf32> to vector<16x128xf32>
    %356 = arith.mulf %353, %355 : vector<16x128xf32>
    %357 = arith.addf %352, %356 : vector<16x128xf32>
    %c9_215 = arith.constant 9 : index
    %c24_216 = arith.constant 24 : index
    %358 = vector.load %arg15[%c9_215, %c24_216] : memref<34x272xf32, #tpu.memory_space<vmem>>, vector<16x128xf32>
    %359 = vector.extract_strided_slice %246 {offsets = [22, 0], sizes = [1, 128], strides = [1, 1]} : vector<49x128xf32> to vector<1x128xf32>
    %360 = vector.broadcast %359 : vector<1x128xf32> to vector<16x128xf32>
    %361 = arith.mulf %358, %360 : vector<16x128xf32>
    %362 = arith.addf %357, %361 : vector<16x128xf32>
    %c9_217 = arith.constant 9 : index
    %c48_218 = arith.constant 48 : index
    %363 = vector.load %arg15[%c9_217, %c48_218] : memref<34x272xf32, #tpu.memory_space<vmem>>, vector<16x128xf32>
    %364 = vector.extract_strided_slice %246 {offsets = [23, 0], sizes = [1, 128], strides = [1, 1]} : vector<49x128xf32> to vector<1x128xf32>
    %365 = vector.broadcast %364 : vector<1x128xf32> to vector<16x128xf32>
    %366 = arith.mulf %363, %365 : vector<16x128xf32>
    %367 = arith.addf %362, %366 : vector<16x128xf32>
    %c9_219 = arith.constant 9 : index
    %c72_220 = arith.constant 72 : index
    %368 = vector.load %arg15[%c9_219, %c72_220] : memref<34x272xf32, #tpu.memory_space<vmem>>, vector<16x128xf32>
    %369 = vector.extract_strided_slice %246 {offsets = [24, 0], sizes = [1, 128], strides = [1, 1]} : vector<49x128xf32> to vector<1x128xf32>
    %370 = vector.broadcast %369 : vector<1x128xf32> to vector<16x128xf32>
    %371 = arith.mulf %368, %370 : vector<16x128xf32>
    %372 = arith.addf %367, %371 : vector<16x128xf32>
    %c9_221 = arith.constant 9 : index
    %c96_222 = arith.constant 96 : index
    %373 = vector.load %arg15[%c9_221, %c96_222] : memref<34x272xf32, #tpu.memory_space<vmem>>, vector<16x128xf32>
    %374 = vector.extract_strided_slice %246 {offsets = [25, 0], sizes = [1, 128], strides = [1, 1]} : vector<49x128xf32> to vector<1x128xf32>
    %375 = vector.broadcast %374 : vector<1x128xf32> to vector<16x128xf32>
    %376 = arith.mulf %373, %375 : vector<16x128xf32>
    %377 = arith.addf %372, %376 : vector<16x128xf32>
    %c9_223 = arith.constant 9 : index
    %c120_224 = arith.constant 120 : index
    %378 = vector.load %arg15[%c9_223, %c120_224] : memref<34x272xf32, #tpu.memory_space<vmem>>, vector<16x128xf32>
    %379 = vector.extract_strided_slice %246 {offsets = [26, 0], sizes = [1, 128], strides = [1, 1]} : vector<49x128xf32> to vector<1x128xf32>
    %380 = vector.broadcast %379 : vector<1x128xf32> to vector<16x128xf32>
    %381 = arith.mulf %378, %380 : vector<16x128xf32>
    %382 = arith.addf %377, %381 : vector<16x128xf32>
    %c9_225 = arith.constant 9 : index
    %c144_226 = arith.constant 144 : index
    %383 = vector.load %arg15[%c9_225, %c144_226] : memref<34x272xf32, #tpu.memory_space<vmem>>, vector<16x128xf32>
    %384 = vector.extract_strided_slice %246 {offsets = [27, 0], sizes = [1, 128], strides = [1, 1]} : vector<49x128xf32> to vector<1x128xf32>
    %385 = vector.broadcast %384 : vector<1x128xf32> to vector<16x128xf32>
    %386 = arith.mulf %383, %385 : vector<16x128xf32>
    %387 = arith.addf %382, %386 : vector<16x128xf32>
    %c12 = arith.constant 12 : index
    %c0_227 = arith.constant 0 : index
    %388 = vector.load %arg15[%c12, %c0_227] : memref<34x272xf32, #tpu.memory_space<vmem>>, vector<16x128xf32>
    %389 = vector.extract_strided_slice %246 {offsets = [28, 0], sizes = [1, 128], strides = [1, 1]} : vector<49x128xf32> to vector<1x128xf32>
    %390 = vector.broadcast %389 : vector<1x128xf32> to vector<16x128xf32>
    %391 = arith.mulf %388, %390 : vector<16x128xf32>
    %392 = arith.addf %387, %391 : vector<16x128xf32>
    %c12_228 = arith.constant 12 : index
    %c24_229 = arith.constant 24 : index
    %393 = vector.load %arg15[%c12_228, %c24_229] : memref<34x272xf32, #tpu.memory_space<vmem>>, vector<16x128xf32>
    %394 = vector.extract_strided_slice %246 {offsets = [29, 0], sizes = [1, 128], strides = [1, 1]} : vector<49x128xf32> to vector<1x128xf32>
    %395 = vector.broadcast %394 : vector<1x128xf32> to vector<16x128xf32>
    %396 = arith.mulf %393, %395 : vector<16x128xf32>
    %397 = arith.addf %392, %396 : vector<16x128xf32>
    %c12_230 = arith.constant 12 : index
    %c48_231 = arith.constant 48 : index
    %398 = vector.load %arg15[%c12_230, %c48_231] : memref<34x272xf32, #tpu.memory_space<vmem>>, vector<16x128xf32>
    %399 = vector.extract_strided_slice %246 {offsets = [30, 0], sizes = [1, 128], strides = [1, 1]} : vector<49x128xf32> to vector<1x128xf32>
    %400 = vector.broadcast %399 : vector<1x128xf32> to vector<16x128xf32>
    %401 = arith.mulf %398, %400 : vector<16x128xf32>
    %402 = arith.addf %397, %401 : vector<16x128xf32>
    %c12_232 = arith.constant 12 : index
    %c72_233 = arith.constant 72 : index
    %403 = vector.load %arg15[%c12_232, %c72_233] : memref<34x272xf32, #tpu.memory_space<vmem>>, vector<16x128xf32>
    %404 = vector.extract_strided_slice %246 {offsets = [31, 0], sizes = [1, 128], strides = [1, 1]} : vector<49x128xf32> to vector<1x128xf32>
    %405 = vector.broadcast %404 : vector<1x128xf32> to vector<16x128xf32>
    %406 = arith.mulf %403, %405 : vector<16x128xf32>
    %407 = arith.addf %402, %406 : vector<16x128xf32>
    %c12_234 = arith.constant 12 : index
    %c96_235 = arith.constant 96 : index
    %408 = vector.load %arg15[%c12_234, %c96_235] : memref<34x272xf32, #tpu.memory_space<vmem>>, vector<16x128xf32>
    %409 = vector.extract_strided_slice %246 {offsets = [32, 0], sizes = [1, 128], strides = [1, 1]} : vector<49x128xf32> to vector<1x128xf32>
    %410 = vector.broadcast %409 : vector<1x128xf32> to vector<16x128xf32>
    %411 = arith.mulf %408, %410 : vector<16x128xf32>
    %412 = arith.addf %407, %411 : vector<16x128xf32>
    %c12_236 = arith.constant 12 : index
    %c120_237 = arith.constant 120 : index
    %413 = vector.load %arg15[%c12_236, %c120_237] : memref<34x272xf32, #tpu.memory_space<vmem>>, vector<16x128xf32>
    %414 = vector.extract_strided_slice %246 {offsets = [33, 0], sizes = [1, 128], strides = [1, 1]} : vector<49x128xf32> to vector<1x128xf32>
    %415 = vector.broadcast %414 : vector<1x128xf32> to vector<16x128xf32>
    %416 = arith.mulf %413, %415 : vector<16x128xf32>
    %417 = arith.addf %412, %416 : vector<16x128xf32>
    %c12_238 = arith.constant 12 : index
    %c144_239 = arith.constant 144 : index
    %418 = vector.load %arg15[%c12_238, %c144_239] : memref<34x272xf32, #tpu.memory_space<vmem>>, vector<16x128xf32>
    %419 = vector.extract_strided_slice %246 {offsets = [34, 0], sizes = [1, 128], strides = [1, 1]} : vector<49x128xf32> to vector<1x128xf32>
    %420 = vector.broadcast %419 : vector<1x128xf32> to vector<16x128xf32>
    %421 = arith.mulf %418, %420 : vector<16x128xf32>
    %422 = arith.addf %417, %421 : vector<16x128xf32>
    %c15 = arith.constant 15 : index
    %c0_240 = arith.constant 0 : index
    %423 = vector.load %arg15[%c15, %c0_240] : memref<34x272xf32, #tpu.memory_space<vmem>>, vector<16x128xf32>
    %424 = vector.extract_strided_slice %246 {offsets = [35, 0], sizes = [1, 128], strides = [1, 1]} : vector<49x128xf32> to vector<1x128xf32>
    %425 = vector.broadcast %424 : vector<1x128xf32> to vector<16x128xf32>
    %426 = arith.mulf %423, %425 : vector<16x128xf32>
    %427 = arith.addf %422, %426 : vector<16x128xf32>
    %c15_241 = arith.constant 15 : index
    %c24_242 = arith.constant 24 : index
    %428 = vector.load %arg15[%c15_241, %c24_242] : memref<34x272xf32, #tpu.memory_space<vmem>>, vector<16x128xf32>
    %429 = vector.extract_strided_slice %246 {offsets = [36, 0], sizes = [1, 128], strides = [1, 1]} : vector<49x128xf32> to vector<1x128xf32>
    %430 = vector.broadcast %429 : vector<1x128xf32> to vector<16x128xf32>
    %431 = arith.mulf %428, %430 : vector<16x128xf32>
    %432 = arith.addf %427, %431 : vector<16x128xf32>
    %c15_243 = arith.constant 15 : index
    %c48_244 = arith.constant 48 : index
    %433 = vector.load %arg15[%c15_243, %c48_244] : memref<34x272xf32, #tpu.memory_space<vmem>>, vector<16x128xf32>
    %434 = vector.extract_strided_slice %246 {offsets = [37, 0], sizes = [1, 128], strides = [1, 1]} : vector<49x128xf32> to vector<1x128xf32>
    %435 = vector.broadcast %434 : vector<1x128xf32> to vector<16x128xf32>
    %436 = arith.mulf %433, %435 : vector<16x128xf32>
    %437 = arith.addf %432, %436 : vector<16x128xf32>
    %c15_245 = arith.constant 15 : index
    %c72_246 = arith.constant 72 : index
    %438 = vector.load %arg15[%c15_245, %c72_246] : memref<34x272xf32, #tpu.memory_space<vmem>>, vector<16x128xf32>
    %439 = vector.extract_strided_slice %246 {offsets = [38, 0], sizes = [1, 128], strides = [1, 1]} : vector<49x128xf32> to vector<1x128xf32>
    %440 = vector.broadcast %439 : vector<1x128xf32> to vector<16x128xf32>
    %441 = arith.mulf %438, %440 : vector<16x128xf32>
    %442 = arith.addf %437, %441 : vector<16x128xf32>
    %c15_247 = arith.constant 15 : index
    %c96_248 = arith.constant 96 : index
    %443 = vector.load %arg15[%c15_247, %c96_248] : memref<34x272xf32, #tpu.memory_space<vmem>>, vector<16x128xf32>
    %444 = vector.extract_strided_slice %246 {offsets = [39, 0], sizes = [1, 128], strides = [1, 1]} : vector<49x128xf32> to vector<1x128xf32>
    %445 = vector.broadcast %444 : vector<1x128xf32> to vector<16x128xf32>
    %446 = arith.mulf %443, %445 : vector<16x128xf32>
    %447 = arith.addf %442, %446 : vector<16x128xf32>
    %c15_249 = arith.constant 15 : index
    %c120_250 = arith.constant 120 : index
    %448 = vector.load %arg15[%c15_249, %c120_250] : memref<34x272xf32, #tpu.memory_space<vmem>>, vector<16x128xf32>
    %449 = vector.extract_strided_slice %246 {offsets = [40, 0], sizes = [1, 128], strides = [1, 1]} : vector<49x128xf32> to vector<1x128xf32>
    %450 = vector.broadcast %449 : vector<1x128xf32> to vector<16x128xf32>
    %451 = arith.mulf %448, %450 : vector<16x128xf32>
    %452 = arith.addf %447, %451 : vector<16x128xf32>
    %c15_251 = arith.constant 15 : index
    %c144_252 = arith.constant 144 : index
    %453 = vector.load %arg15[%c15_251, %c144_252] : memref<34x272xf32, #tpu.memory_space<vmem>>, vector<16x128xf32>
    %454 = vector.extract_strided_slice %246 {offsets = [41, 0], sizes = [1, 128], strides = [1, 1]} : vector<49x128xf32> to vector<1x128xf32>
    %455 = vector.broadcast %454 : vector<1x128xf32> to vector<16x128xf32>
    %456 = arith.mulf %453, %455 : vector<16x128xf32>
    %457 = arith.addf %452, %456 : vector<16x128xf32>
    %c18_253 = arith.constant 18 : index
    %c0_254 = arith.constant 0 : index
    %458 = vector.load %arg15[%c18_253, %c0_254] : memref<34x272xf32, #tpu.memory_space<vmem>>, vector<16x128xf32>
    %459 = vector.extract_strided_slice %246 {offsets = [42, 0], sizes = [1, 128], strides = [1, 1]} : vector<49x128xf32> to vector<1x128xf32>
    %460 = vector.broadcast %459 : vector<1x128xf32> to vector<16x128xf32>
    %461 = arith.mulf %458, %460 : vector<16x128xf32>
    %462 = arith.addf %457, %461 : vector<16x128xf32>
    %c18_255 = arith.constant 18 : index
    %c24_256 = arith.constant 24 : index
    %463 = vector.load %arg15[%c18_255, %c24_256] : memref<34x272xf32, #tpu.memory_space<vmem>>, vector<16x128xf32>
    %464 = vector.extract_strided_slice %246 {offsets = [43, 0], sizes = [1, 128], strides = [1, 1]} : vector<49x128xf32> to vector<1x128xf32>
    %465 = vector.broadcast %464 : vector<1x128xf32> to vector<16x128xf32>
    %466 = arith.mulf %463, %465 : vector<16x128xf32>
    %467 = arith.addf %462, %466 : vector<16x128xf32>
    %c18_257 = arith.constant 18 : index
    %c48_258 = arith.constant 48 : index
    %468 = vector.load %arg15[%c18_257, %c48_258] : memref<34x272xf32, #tpu.memory_space<vmem>>, vector<16x128xf32>
    %469 = vector.extract_strided_slice %246 {offsets = [44, 0], sizes = [1, 128], strides = [1, 1]} : vector<49x128xf32> to vector<1x128xf32>
    %470 = vector.broadcast %469 : vector<1x128xf32> to vector<16x128xf32>
    %471 = arith.mulf %468, %470 : vector<16x128xf32>
    %472 = arith.addf %467, %471 : vector<16x128xf32>
    %c18_259 = arith.constant 18 : index
    %c72_260 = arith.constant 72 : index
    %473 = vector.load %arg15[%c18_259, %c72_260] : memref<34x272xf32, #tpu.memory_space<vmem>>, vector<16x128xf32>
    %474 = vector.extract_strided_slice %246 {offsets = [45, 0], sizes = [1, 128], strides = [1, 1]} : vector<49x128xf32> to vector<1x128xf32>
    %475 = vector.broadcast %474 : vector<1x128xf32> to vector<16x128xf32>
    %476 = arith.mulf %473, %475 : vector<16x128xf32>
    %477 = arith.addf %472, %476 : vector<16x128xf32>
    %c18_261 = arith.constant 18 : index
    %c96_262 = arith.constant 96 : index
    %478 = vector.load %arg15[%c18_261, %c96_262] : memref<34x272xf32, #tpu.memory_space<vmem>>, vector<16x128xf32>
    %479 = vector.extract_strided_slice %246 {offsets = [46, 0], sizes = [1, 128], strides = [1, 1]} : vector<49x128xf32> to vector<1x128xf32>
    %480 = vector.broadcast %479 : vector<1x128xf32> to vector<16x128xf32>
    %481 = arith.mulf %478, %480 : vector<16x128xf32>
    %482 = arith.addf %477, %481 : vector<16x128xf32>
    %c18_263 = arith.constant 18 : index
    %c120_264 = arith.constant 120 : index
    %483 = vector.load %arg15[%c18_263, %c120_264] : memref<34x272xf32, #tpu.memory_space<vmem>>, vector<16x128xf32>
    %484 = vector.extract_strided_slice %246 {offsets = [47, 0], sizes = [1, 128], strides = [1, 1]} : vector<49x128xf32> to vector<1x128xf32>
    %485 = vector.broadcast %484 : vector<1x128xf32> to vector<16x128xf32>
    %486 = arith.mulf %483, %485 : vector<16x128xf32>
    %487 = arith.addf %482, %486 : vector<16x128xf32>
    %c18_265 = arith.constant 18 : index
    %c144_266 = arith.constant 144 : index
    %488 = vector.load %arg15[%c18_265, %c144_266] : memref<34x272xf32, #tpu.memory_space<vmem>>, vector<16x128xf32>
    %489 = vector.extract_strided_slice %246 {offsets = [48, 0], sizes = [1, 128], strides = [1, 1]} : vector<49x128xf32> to vector<1x128xf32>
    %490 = vector.broadcast %489 : vector<1x128xf32> to vector<16x128xf32>
    %491 = arith.mulf %488, %490 : vector<16x128xf32>
    %492 = arith.addf %487, %491 : vector<16x128xf32>
    %c0_267 = arith.constant 0 : index
    %c0_268 = arith.constant 0 : index
    %493 = vector.load %arg9[%c0_267, %c0_268] : memref<1x128xf32, #tpu.memory_space<vmem>>, vector<1x128xf32>
    %494 = vector.broadcast %493 : vector<1x128xf32> to vector<16x128xf32>
    %495 = arith.addf %492, %494 : vector<16x128xf32>
    %c0_269 = arith.constant 0 : index
    %c0_270 = arith.constant 0 : index
    %496 = vector.load %arg10[%c0_269, %c0_270] : memref<128x128xf32, #tpu.memory_space<vmem>>, vector<128x128xf32>
    %cst_271 = arith.constant dense<0.000000e+00> : vector<16x128xf32>
    %497 = tpu.matmul %495, %496, %cst_271 {dimension_numbers = #tpu.dot_dimension_numbers<[1], [0], [0], [1], [0, 0, 1, 1], [], []>} : vector<16x128xf32>, vector<128x128xf32>, vector<16x128xf32> -> vector<16x128xf32>
    %c0_272 = arith.constant 0 : index
    %c0_273 = arith.constant 0 : index
    %498 = vector.load %arg11[%c0_272, %c0_273] : memref<1x128xf32, #tpu.memory_space<vmem>>, vector<1x128xf32>
    %499 = vector.broadcast %498 : vector<1x128xf32> to vector<16x128xf32>
    %500 = arith.addf %497, %499 : vector<16x128xf32>
    %cst_274 = arith.constant 0.000000e+00 : f32
    %501 = vector.broadcast %cst_274 : f32 to vector<16x128xf32>
    %502 = arith.subf %501, %500 : vector<16x128xf32>
    %503 = math.exp %502 : vector<16x128xf32>
    %cst_275 = arith.constant 1.000000e+00 : f32
    %504 = vector.broadcast %cst_275 : f32 to vector<16x128xf32>
    %505 = arith.addf %504, %503 : vector<16x128xf32>
    %506 = tpu.reciprocal %505 {approx = true} : vector<16x128xf32> -> vector<16x128xf32>
    %507 = arith.mulf %505, %506 : vector<16x128xf32>
    %cst_276 = arith.constant 2.000000e+00 : f32
    %508 = vector.broadcast %cst_276 : f32 to vector<16x128xf32>
    %509 = arith.subf %508, %507 : vector<16x128xf32>
    %510 = arith.mulf %506, %509 : vector<16x128xf32>
    %511 = arith.mulf %510, %101 : vector<16x128xf32>
    %512 = arith.addf %511, %1 : vector<16x128xf32>
    %c0_277 = arith.constant 0 : index
    %c0_278 = arith.constant 0 : index
    %c0_279 = arith.constant 0 : index
    %513 = vector.load %arg12[%c0_277, %c0_278, %c0_279] : memref<1x16x128xf32, #tpu.memory_space<vmem>>, vector<1x16x128xf32>
    %514 = vector.shape_cast %513 : vector<1x16x128xf32> to vector<16x128xf32>
    %515 = vector.shape_cast %512 : vector<16x128xf32> to vector<1x16x128xf32>
    tpu.vector_store %arg12[%c0_277, %c0_278, %c0_279], %515 {strides = array<i32>} : memref<1x16x128xf32, #tpu.memory_space<vmem>>, vector<1x16x128xf32>,
    return
  }
  func.func @transform_0(%arg0: i32) -> (i32, i32, i32) {
    %c0_i32 = arith.constant 0 : i32
    %c0_i32_0 = arith.constant 0 : i32
    %c0_i32_1 = arith.constant 0 : i32
    return %arg0, %c0_i32, %c0_i32_0 : i32, i32, i32
  }
  func.func @transform_1(%arg0: i32) -> (i32, i32) {
    %c0_i32 = arith.constant 0 : i32
    %c0_i32_0 = arith.constant 0 : i32
    %c0_i32_1 = arith.constant 0 : i32
    return %c0_i32, %c0_i32_0 : i32, i32
  }
  func.func @transform_2(%arg0: i32) -> (i32, i32) {
    %c0_i32 = arith.constant 0 : i32
    %c0_i32_0 = arith.constant 0 : i32
    %c0_i32_1 = arith.constant 0 : i32
    return %c0_i32, %c0_i32_0 : i32, i32
  }
  func.func @transform_3(%arg0: i32) -> (i32, i32) {
    %c0_i32 = arith.constant 0 : i32
    %c0_i32_0 = arith.constant 0 : i32
    %c0_i32_1 = arith.constant 0 : i32
    return %c0_i32, %c0_i32_0 : i32, i32
  }
  func.func @transform_4(%arg0: i32) -> (i32, i32) {
    %c0_i32 = arith.constant 0 : i32
    %c0_i32_0 = arith.constant 0 : i32
    %c0_i32_1 = arith.constant 0 : i32
    return %c0_i32, %c0_i32_0 : i32, i32
  }
  func.func @transform_5(%arg0: i32) -> (i32, i32) {
    %c0_i32 = arith.constant 0 : i32
    %c0_i32_0 = arith.constant 0 : i32
    %c0_i32_1 = arith.constant 0 : i32
    return %c0_i32, %c0_i32_0 : i32, i32
  }
  func.func @transform_6(%arg0: i32) -> (i32, i32) {
    %c0_i32 = arith.constant 0 : i32
    %c0_i32_0 = arith.constant 0 : i32
    %c0_i32_1 = arith.constant 0 : i32
    return %c0_i32, %c0_i32_0 : i32, i32
  }
  func.func @transform_7(%arg0: i32) -> (i32, i32) {
    %c0_i32 = arith.constant 0 : i32
    %c0_i32_0 = arith.constant 0 : i32
    %c0_i32_1 = arith.constant 0 : i32
    return %c0_i32, %c0_i32_0 : i32, i32
  }
  func.func @transform_8(%arg0: i32) -> (i32, i32) {
    %c0_i32 = arith.constant 0 : i32
    %c0_i32_0 = arith.constant 0 : i32
    %c0_i32_1 = arith.constant 0 : i32
    return %c0_i32, %c0_i32_0 : i32, i32
  }
  func.func @transform_9(%arg0: i32) -> (i32, i32) {
    %c0_i32 = arith.constant 0 : i32
    %c0_i32_0 = arith.constant 0 : i32
    %c0_i32_1 = arith.constant 0 : i32
    return %c0_i32, %c0_i32_0 : i32, i32
  }
  func.func @transform_10(%arg0: i32) -> (i32, i32) {
    %c0_i32 = arith.constant 0 : i32
    %c0_i32_0 = arith.constant 0 : i32
    %c0_i32_1 = arith.constant 0 : i32
    return %c0_i32, %c0_i32_0 : i32, i32
  }
  func.func @transform_11(%arg0: i32) -> (i32, i32, i32) {
    %c0_i32 = arith.constant 0 : i32
    %c0_i32_0 = arith.constant 0 : i32
    %c0_i32_1 = arith.constant 0 : i32
    return %arg0, %c0_i32, %c0_i32_0 : i32, i32, i32
  }
}

</mosaic_0001>

<llo_original>
// kernel: tile.44
$region0: #{tile.44}
  #allocation0 [shape = 's32[1]{0}', space=sflag, size = 0x4, scoped, tag = 'scoped memory for tile.44']
  %s0 = inlined_call_operand.vmem [shape: f32[8], index: 0, kind: input, shape index: {}]
  %s1 = inlined_call_operand.vmem [shape: f32[16,8], index: 1, kind: output, shape index: {}]
  // Predicated region
  $region2: #{tile.44} parent=0 // pred_check
    _
  $region3: #{tile.44} parent=0 // pred_check_branch
    %3 = sbr.rel (0) target = $region5
  $region4: #{tile.44} parent=0 // pred_region
    _
  $region5: #{tile.44} parent=0 // pred_fallthru
    _
  %v4 = vld [vmem:[%s0] ss:$0 sm:$0xff]
  %5 = vst [vmem:[%s1] sm:$0xff] %v4
  %s6 = scalar_lea.vmem %s1, 8
  %7 = vst [vmem:[%s6] sm:$0xff] %v4

// kernel: tile.45
$region0: #{tile.45}
  %s0 = inlined_call_operand.vmem [shape: f32[16,8], index: 0, kind: input, shape index: {}]
  %s1 = inlined_call_operand.vmem [shape: f32[1,128], index: 1, kind: output, shape index: {}]
  $region1: #{tile.45} parent=0
    #allocation0 [shape = 'u8[4096]{0}', space=vmem, size = 0x1000, scoped, tag = 'scoped mem for output reshape']
    %v2 = vld [vmem:[%s0] sm:$0x1]
    %vm3 = vcmask 64512
    %4 = vst.msk [vmem:[#allocation0] sm:$0x1] %vm3, %v2
    %s5 = scalar_lea.vmem %s0, 15
    %v6 = vld [vmem:[%s5] sm:$0x1]
    %7 = vrot.lane.b32.xlu0 %v6, 120
    %v8 = vpop.permute.xlu0 %7
    %vm9 = vcmask 1048512
    %10 = vst.msk [vmem:[#allocation0] sm:$0x1] %vm9, %v8
    %s11 = scalar_lea.vmem %s0, 14
    %v12 = vld [vmem:[%s11] sm:$0x1]
    %13 = vrot.lane.b32.xlu0 %v12, 112
    %v14 = vpop.permute.xlu0 %13
    %vm15 = vcmask 982912
    %16 = vst.msk [vmem:[#allocation0] sm:$0x1] %vm15, %v14
    %s17 = scalar_lea.vmem %s0, 13
    %v18 = vld [vmem:[%s17] sm:$0x1]
    %19 = vrot.lane.b32.xlu0 %v18, 104
    %v20 = vpop.permute.xlu0 %19
    %vm21 = vcmask 917312
    %22 = vst.msk [vmem:[#allocation0] sm:$0x1] %vm21, %v20
    %s23 = scalar_lea.vmem %s0, 12
    %v24 = vld [vmem:[%s23] sm:$0x1]
    %25 = vrot.lane.b32.xlu0 %v24, 96
    %v26 = vpop.permute.xlu0 %25
    %vm27 = vcmask 851712
    %28 = vst.msk [vmem:[#allocation0] sm:$0x1] %vm27, %v26
    %s29 = scalar_lea.vmem %s0, 11
    %v30 = vld [vmem:[%s29] sm:$0x1]
    %31 = vrot.lane.b32.xlu0 %v30, 88
    %v32 = vpop.permute.xlu0 %31
    %vm33 = vcmask 786112
    %34 = vst.msk [vmem:[#allocation0] sm:$0x1] %vm33, %v32
    %s35 = scalar_lea.vmem %s0, 10
    %v36 = vld [vmem:[%s35] sm:$0x1]
    %37 = vrot.lane.b32.xlu0 %v36, 80
    %v38 = vpop.permute.xlu0 %37
    %vm39 = vcmask 720512
    %40 = vst.msk [vmem:[#allocation0] sm:$0x1] %vm39, %v38
    %s41 = scalar_lea.vmem %s0, 9
    %v42 = vld [vmem:[%s41] sm:$0x1]
    %43 = vrot.lane.b32.xlu0 %v42, 72
    %v44 = vpop.permute.xlu0 %43
    %vm45 = vcmask 654912
    %46 = vst.msk [vmem:[#allocation0] sm:$0x1] %vm45, %v44
    %s47 = scalar_lea.vmem %s0, 8
    %v48 = vld [vmem:[%s47] sm:$0x1]
    %49 = vrot.lane.b32.xlu0 %v48, 64
    %v50 = vpop.permute.xlu0 %49
    %vm51 = vcmask 589312
    %52 = vst.msk [vmem:[#allocation0] sm:$0x1] %vm51, %v50
    %s53 = scalar_lea.vmem %s0, 7
    %v54 = vld [vmem:[%s53] sm:$0x1]
    %55 = vrot.lane.b32.xlu0 %v54, 56
    %v56 = vpop.permute.xlu0 %55
    %vm57 = vcmask 523712
    %58 = vst.msk [vmem:[#allocation0] sm:$0x1] %vm57, %v56
    %s59 = scalar_lea.vmem %s0, 6
    %v60 = vld [vmem:[%s59] sm:$0x1]
    %61 = vrot.lane.b32.xlu0 %v60, 48
    %v62 = vpop.permute.xlu0 %61
    %vm63 = vcmask 458112
    %64 = vst.msk [vmem:[#allocation0] sm:$0x1] %vm63, %v62
    %s65 = scalar_lea.vmem %s0, 5
    %v66 = vld [vmem:[%s65] sm:$0x1]
    %67 = vrot.lane.b32.xlu0 %v66, 40
    %v68 = vpop.permute.xlu0 %67
    %vm69 = vcmask 392512
    %70 = vst.msk [vmem:[#allocation0] sm:$0x1] %vm69, %v68
    %s71 = scalar_lea.vmem %s0, 4
    %v72 = vld [vmem:[%s71] sm:$0x1]
    %73 = vrot.lane.b32.xlu0 %v72, 32
    %v74 = vpop.permute.xlu0 %73
    %vm75 = vcmask 326912
    %76 = vst.msk [vmem:[#allocation0] sm:$0x1] %vm75, %v74
    %s77 = scalar_lea.vmem %s0, 3
    %v78 = vld [vmem:[%s77] sm:$0x1]
    %79 = vrot.lane.b32.xlu0 %v78, 24
    %v80 = vpop.permute.xlu0 %79
    %vm81 = vcmask 261312
    %82 = vst.msk [vmem:[#allocation0] sm:$0x1] %vm81, %v80
    %s83 = scalar_lea.vmem %s0, 2
    %v84 = vld [vmem:[%s83] sm:$0x1]
    %85 = vrot.lane.b32.xlu0 %v84, 16
    %v86 = vpop.permute.xlu0 %85
    %vm87 = vcmask 195712
    %88 = vst.msk [vmem:[#allocation0] sm:$0x1] %vm87, %v86
    %s89 = scalar_lea.vmem %s0, 1
    %v90 = vld [vmem:[%s89] sm:$0x1]
    %91 = vrot.lane.b32.xlu0 %v90, 8
    %v92 = vpop.permute.xlu0 %91
    %vm93 = vcmask 130112
    %94 = vst.msk [vmem:[#allocation0] sm:$0x1] %vm93, %v92
    %s96 = sshllo.u32 0, 1
    %v98 = vld [vmem:[#allocation0] sm:%s96]
    %s99 = sshllo.u32 0, 1
    %100 = vst [vmem:[%s1] sm:%s99] %v98

// kernel: rcbv6_forward.1
$region0: #{rcbv6_forward.1}
  #allocation0 [shape = 'u32[]', space=smem, size = 0x4, offset = 0x4, fixed_abs, tag = 'smem constant byte address 0x4 - core index']
  #allocation1 [shape = 'u32[144,128]{1,0:T(1,128)}', space=vmem, size = 0x12000, scoped, tag = 'internal scratch']
  #allocation2 [shape = 'f32[18,144]{1,0:T(8,128)}', space=vmem, size = 0x6000, scoped, tag = 'scratch operand']
  #allocation3 [shape = 'f32[20,160]{1,0:T(8,128)}', space=vmem, size = 0x6000, scoped, tag = 'scratch operand']
  #allocation4 [shape = 'f32[34,272]{1,0:T(8,128)}', space=vmem, size = 0xf000, scoped, tag = 'scratch operand']
  #allocation5 [shape = 'f32[16,1152]{1,0:T(8,128)}', space=vmem, size = 0x12000, scoped, tag = 'scratch operand']
  %s0 = inlined_call_operand.vmem [shape: f32[2,16,128], index: 0, kind: input, shape index: {}]
  %s1 = inlined_call_operand.vmem [shape: f32[1152,128], index: 1, kind: input, shape index: {}]
  %s2 = inlined_call_operand.vmem [shape: f32[1,128], index: 2, kind: input, shape index: {}]
  %s3 = inlined_call_operand.vmem [shape: f32[1152,128], index: 3, kind: input, shape index: {}]
  %s4 = inlined_call_operand.vmem [shape: f32[1,128], index: 4, kind: input, shape index: {}]
  %s5 = inlined_call_operand.vmem [shape: f32[25,128], index: 5, kind: input, shape index: {}]
  %s6 = inlined_call_operand.vmem [shape: f32[1,128], index: 6, kind: input, shape index: {}]
  %s7 = inlined_call_operand.vmem [shape: f32[49,128], index: 7, kind: input, shape index: {}]
  %s8 = inlined_call_operand.vmem [shape: f32[1,128], index: 8, kind: input, shape index: {}]
  %s9 = inlined_call_operand.vmem [shape: f32[128,128], index: 9, kind: input, shape index: {}]
  %s10 = inlined_call_operand.vmem [shape: f32[1,128], index: 10, kind: input, shape index: {}]
  %s11 = inlined_call_operand.vmem [shape: f32[2,16,128], index: 11, kind: output, shape index: {}]
  %s12 = sld [smem:[#allocation0]]
  $region77: #{rcbv6_forward.1} parent=0
    _
  %s14 = ssub.s32 1, %s12
  %s15 = scalar_select 0, %s14, %s12
  loop: start=0, step=1, limit=4
  $region2: #{rcbv6_forward.1} parent=0 // loop_pre_header
    _
  $region3: #{rcbv6_forward.1} parent=0 // loop_header
    %s17 = sphi 0, %s21
    %p18 = scmp.ge.s32.totalorder %s17, 4
    %s27 = sphi 0, %s29
    %s30 = sphi 0, %s27
    %s31 = sphi 0, %s30
    %s47 = sphi 0, %s31
    %s51 = sphi 0, %s51
    %s53 = sphi 0, %s51
    %s54 = sphi 0, %s53
    %s68 = sphi 0, %s54
    %s72 = sphi 0, %s72
    %s74 = sphi 0, %s72
    %s75 = sphi 0, %s74
    %s89 = sphi 0, %s75
    %s93 = sphi 0, %s93
    %s95 = sphi 0, %s93
    %s96 = sphi 0, %s95
    %s110 = sphi 0, %s96
    %s114 = sphi 0, %s114
    %s116 = sphi 0, %s114
    %s117 = sphi 0, %s116
    %s131 = sphi 0, %s117
    %s135 = sphi 0, %s135
    %s137 = sphi 0, %s135
    %s138 = sphi 0, %s137
    %s152 = sphi 0, %s138
    %s156 = sphi 0, %s156
    %s158 = sphi 0, %s156
    %s159 = sphi 0, %s158
    %s173 = sphi 0, %s159
    %s177 = sphi 0, %s177
    %s179 = sphi 0, %s177
    %s180 = sphi 0, %s179
    %s194 = sphi 0, %s180
    %s198 = sphi 0, %s198
    %s200 = sphi 0, %s198
    %s201 = sphi 0, %s200
    %s215 = sphi 0, %s201
    %s219 = sphi 0, %s219
    %s221 = sphi 0, %s219
    %s222 = sphi 0, %s221
    %s236 = sphi 0, %s222
    %s240 = sphi 0, %s240
    %s242 = sphi 0, %s240
    %s243 = sphi 0, %s242
    %s257 = sphi 0, %s243
    %s263 = sphi 0, %s265
    %s266 = sphi 0, %s263
    %s267 = sphi 0, %s266
    %s283 = sphi 0, %s267
  $region4: #{rcbv6_forward.1} parent=0 // loop_header_branch
    %20 = sbr.rel (%p18) target = $region8
  $region5: #{rcbv6_forward.1} parent=0 // loop_body
    %s22 = ssub.s32 %s17, 1
    %s23 = ssub.s32 %s17, 2
    %s24 = sadd.s32 %s17, 1
    %s25 = ssub.s32 %s17, %s24
    %p26 = scmp.eq.s32.totalorder %s25, 0
    %s28 = sadd.s32 %s27, 1
    %s29 = scalar_select %p26, %s27, %s28
    %p32 = pneg %p26
    %p33 = scmp.eq.s32.totalorder %s17, 1
    %p34 = por %p32, %p33
    %p35 = scmp.ne.s32.totalorder %s27, %s30
    %p36 = scmp.eq.s32.totalorder %s17, 0
    %p37 = por %p35, %p36
    %p38 = scmp.ne.s32.totalorder %s27, %s30
    %p39 = scmp.eq.s32.totalorder %s22, 1
    %p40 = por %p38, %p39
    %p41 = scmp.ne.s32.totalorder %s30, %s31
    %p42 = scmp.eq.s32.totalorder %s22, 0
    %p43 = por %p41, %p42
    %p44 = scmp.ne.s32.totalorder %s30, %s31
    %p45 = scmp.eq.s32.totalorder %s23, 1
    %p46 = por %p44, %p45
    %p48 = scmp.ne.s32.totalorder %s31, %s47
    %p49 = scmp.eq.s32.totalorder %s23, 0
    %p50 = por %p48, %p49
    %s52 = sadd.s32 %s51, 1
    %p55 = scmp.eq.s32.totalorder %s17, 1
    %p56 = scmp.ne.s32.totalorder %s51, %s53
    %p57 = scmp.eq.s32.totalorder %s17, 0
    %p58 = por %p56, %p57
    %p59 = scmp.ne.s32.totalorder %s51, %s53
    %p60 = scmp.eq.s32.totalorder %s22, 1
    %p61 = por %p59, %p60
    %p62 = scmp.ne.s32.totalorder %s53, %s54
    %p63 = scmp.eq.s32.totalorder %s22, 0
    %p64 = por %p62, %p63
    %p65 = scmp.ne.s32.totalorder %s53, %s54
    %p66 = scmp.eq.s32.totalorder %s23, 1
    %p67 = por %p65, %p66
    %p69 = scmp.ne.s32.totalorder %s54, %s68
    %p70 = scmp.eq.s32.totalorder %s23, 0
    %p71 = por %p69, %p70
    %s73 = sadd.s32 %s72, 1
    %p76 = scmp.eq.s32.totalorder %s17, 1
    %p77 = scmp.ne.s32.totalorder %s72, %s74
    %p78 = scmp.eq.s32.totalorder %s17, 0
    %p79 = por %p77, %p78
    %p80 = scmp.ne.s32.totalorder %s72, %s74
    %p81 = scmp.eq.s32.totalorder %s22, 1
    %p82 = por %p80, %p81
    %p83 = scmp.ne.s32.totalorder %s74, %s75
    %p84 = scmp.eq.s32.totalorder %s22, 0
    %p85 = por %p83, %p84
    %p86 = scmp.ne.s32.totalorder %s74, %s75
    %p87 = scmp.eq.s32.totalorder %s23, 1
    %p88 = por %p86, %p87
    %p90 = scmp.ne.s32.totalorder %s75, %s89
    %p91 = scmp.eq.s32.totalorder %s23, 0
    %p92 = por %p90, %p91
    %s94 = sadd.s32 %s93, 1
    %p97 = scmp.eq.s32.totalorder %s17, 1
    %p98 = scmp.ne.s32.totalorder %s93, %s95
    %p99 = scmp.eq.s32.totalorder %s17, 0
    %p100 = por %p98, %p99
    %p101 = scmp.ne.s32.totalorder %s93, %s95
    %p102 = scmp.eq.s32.totalorder %s22, 1
    %p103 = por %p101, %p102
    %p104 = scmp.ne.s32.totalorder %s95, %s96
    %p105 = scmp.eq.s32.totalorder %s22, 0
    %p106 = por %p104, %p105
    %p107 = scmp.ne.s32.totalorder %s95, %s96
    %p108 = scmp.eq.s32.totalorder %s23, 1
    %p109 = por %p107, %p108
    %p111 = scmp.ne.s32.totalorder %s96, %s110
    %p112 = scmp.eq.s32.totalorder %s23, 0
    %p113 = por %p111, %p112
    %s115 = sadd.s32 %s114, 1
    %p118 = scmp.eq.s32.totalorder %s17, 1
    %p119 = scmp.ne.s32.totalorder %s114, %s116
    %p120 = scmp.eq.s32.totalorder %s17, 0
    %p121 = por %p119, %p120
    %p122 = scmp.ne.s32.totalorder %s114, %s116
    %p123 = scmp.eq.s32.totalorder %s22, 1
    %p124 = por %p122, %p123
    %p125 = scmp.ne.s32.totalorder %s116, %s117
    %p126 = scmp.eq.s32.totalorder %s22, 0
    %p127 = por %p125, %p126
    %p128 = scmp.ne.s32.totalorder %s116, %s117
    %p129 = scmp.eq.s32.totalorder %s23, 1
    %p130 = por %p128, %p129
    %p132 = scmp.ne.s32.totalorder %s117, %s131
    %p133 = scmp.eq.s32.totalorder %s23, 0
    %p134 = por %p132, %p133
    %s136 = sadd.s32 %s135, 1
    %p139 = scmp.eq.s32.totalorder %s17, 1
    %p140 = scmp.ne.s32.totalorder %s135, %s137
    %p141 = scmp.eq.s32.totalorder %s17, 0
    %p142 = por %p140, %p141
    %p143 = scmp.ne.s32.totalorder %s135, %s137
    %p144 = scmp.eq.s32.totalorder %s22, 1
    %p145 = por %p143, %p144
    %p146 = scmp.ne.s32.totalorder %s137, %s138
    %p147 = scmp.eq.s32.totalorder %s22, 0
    %p148 = por %p146, %p147
    %p149 = scmp.ne.s32.totalorder %s137, %s138
    %p150 = scmp.eq.s32.totalorder %s23, 1
    %p151 = por %p149, %p150
    %p153 = scmp.ne.s32.totalorder %s138, %s152
    %p154 = scmp.eq.s32.totalorder %s23, 0
    %p155 = por %p153, %p154
    %s157 = sadd.s32 %s156, 1
    %p160 = scmp.eq.s32.totalorder %s17, 1
    %p161 = scmp.ne.s32.totalorder %s156, %s158
    %p162 = scmp.eq.s32.totalorder %s17, 0
    %p163 = por %p161, %p162
    %p164 = scmp.ne.s32.totalorder %s156, %s158
    %p165 = scmp.eq.s32.totalorder %s22, 1
    %p166 = por %p164, %p165
    %p167 = scmp.ne.s32.totalorder %s158, %s159
    %p168 = scmp.eq.s32.totalorder %s22, 0
    %p169 = por %p167, %p168
    %p170 = scmp.ne.s32.totalorder %s158, %s159
    %p171 = scmp.eq.s32.totalorder %s23, 1
    %p172 = por %p170, %p171
    %p174 = scmp.ne.s32.totalorder %s159, %s173
    %p175 = scmp.eq.s32.totalorder %s23, 0
    %p176 = por %p174, %p175
    %s178 = sadd.s32 %s177, 1
    %p181 = scmp.eq.s32.totalorder %s17, 1
    %p182 = scmp.ne.s32.totalorder %s177, %s179
    %p183 = scmp.eq.s32.totalorder %s17, 0
    %p184 = por %p182, %p183
    %p185 = scmp.ne.s32.totalorder %s177, %s179
    %p186 = scmp.eq.s32.totalorder %s22, 1
    %p187 = por %p185, %p186
    %p188 = scmp.ne.s32.totalorder %s179, %s180
    %p189 = scmp.eq.s32.totalorder %s22, 0
    %p190 = por %p188, %p189
    %p191 = scmp.ne.s32.totalorder %s179, %s180
    %p192 = scmp.eq.s32.totalorder %s23, 1
    %p193 = por %p191, %p192
    %p195 = scmp.ne.s32.totalorder %s180, %s194
    %p196 = scmp.eq.s32.totalorder %s23, 0
    %p197 = por %p195, %p196
    %s199 = sadd.s32 %s198, 1
    %p202 = scmp.eq.s32.totalorder %s17, 1
    %p203 = scmp.ne.s32.totalorder %s198, %s200
    %p204 = scmp.eq.s32.totalorder %s17, 0
    %p205 = por %p203, %p204
    %p206 = scmp.ne.s32.totalorder %s198, %s200
    %p207 = scmp.eq.s32.totalorder %s22, 1
    %p208 = por %p206, %p207
    %p209 = scmp.ne.s32.totalorder %s200, %s201
    %p210 = scmp.eq.s32.totalorder %s22, 0
    %p211 = por %p209, %p210
    %p212 = scmp.ne.s32.totalorder %s200, %s201
    %p213 = scmp.eq.s32.totalorder %s23, 1
    %p214 = por %p212, %p213
    %p216 = scmp.ne.s32.totalorder %s201, %s215
    %p217 = scmp.eq.s32.totalorder %s23, 0
    %p218 = por %p216, %p217
    %s220 = sadd.s32 %s219, 1
    %p223 = scmp.eq.s32.totalorder %s17, 1
    %p224 = scmp.ne.s32.totalorder %s219, %s221
    %p225 = scmp.eq.s32.totalorder %s17, 0
    %p226 = por %p224, %p225
    %p227 = scmp.ne.s32.totalorder %s219, %s221
    %p228 = scmp.eq.s32.totalorder %s22, 1
    %p229 = por %p227, %p228
    %p230 = scmp.ne.s32.totalorder %s221, %s222
    %p231 = scmp.eq.s32.totalorder %s22, 0
    %p232 = por %p230, %p231
    %p233 = scmp.ne.s32.totalorder %s221, %s222
    %p234 = scmp.eq.s32.totalorder %s23, 1
    %p235 = por %p233, %p234
    %p237 = scmp.ne.s32.totalorder %s222, %s236
    %p238 = scmp.eq.s32.totalorder %s23, 0
    %p239 = por %p237, %p238
    %s241 = sadd.s32 %s240, 1
    %p244 = scmp.eq.s32.totalorder %s17, 1
    %p245 = scmp.ne.s32.totalorder %s240, %s242
    %p246 = scmp.eq.s32.totalorder %s17, 0
    %p247 = por %p245, %p246
    %p248 = scmp.ne.s32.totalorder %s240, %s242
    %p249 = scmp.eq.s32.totalorder %s22, 1
    %p250 = por %p248, %p249
    %p251 = scmp.ne.s32.totalorder %s242, %s243
    %p252 = scmp.eq.s32.totalorder %s22, 0
    %p253 = por %p251, %p252
    %p254 = scmp.ne.s32.totalorder %s242, %s243
    %p255 = scmp.eq.s32.totalorder %s23, 1
    %p256 = por %p254, %p255
    %p258 = scmp.ne.s32.totalorder %s243, %s257
    %p259 = scmp.eq.s32.totalorder %s23, 0
    %p260 = por %p258, %p259
    %s261 = ssub.s32 %s17, %s24
    %p262 = scmp.eq.s32.totalorder %s261, 0
    %s264 = sadd.s32 %s263, 1
    %s265 = scalar_select %p262, %s263, %s264
    %p268 = pneg %p262
    %p269 = scmp.eq.s32.totalorder %s17, 1
    %p270 = por %p268, %p269
    %p271 = scmp.ne.s32.totalorder %s263, %s266
    %p272 = scmp.eq.s32.totalorder %s17, 0
    %p273 = por %p271, %p272
    %p274 = scmp.ne.s32.totalorder %s263, %s266
    %p275 = scmp.eq.s32.totalorder %s22, 1
    %p276 = por %p274, %p275
    %p277 = scmp.ne.s32.totalorder %s266, %s267
    %p278 = scmp.eq.s32.totalorder %s22, 0
    %p279 = por %p277, %p278
    %p280 = scmp.ne.s32.totalorder %s266, %s267
    %p281 = scmp.eq.s32.totalorder %s23, 1
    %p282 = por %p280, %p281
    %p284 = scmp.ne.s32.totalorder %s267, %s283
    %p285 = scmp.eq.s32.totalorder %s23, 0
    %p286 = por %p284, %p285
    %p287 = scmp.le.s32.totalorder 1, %s17
    %p288 = scmp.lt.s32.totalorder %s17, 3
    %p289 = pnand %p287, %p288
    %p290 = pneg %p289
    // Predicated region
    $region9: #{rcbv6_forward.1} parent=5 // pred_check
      _
    $region10: #{rcbv6_forward.1} parent=5 // pred_check_branch
      %292 = sbr.rel (%p289) target = $region12
    $region11: #{rcbv6_forward.1} parent=5 // pred_region
      %s293 = ssub.s32 %s17, 1
      // Predicated region
      $region13: #{rcbv6_forward.1} parent=11 // pred_check
        %p294 = pneg %p64
      $region14: #{rcbv6_forward.1} parent=11 // pred_check_branch
        %296 = sbr.rel (%p294) target = $region16
      $region15: #{rcbv6_forward.1} parent=11 // pred_region
        _
      $region16: #{rcbv6_forward.1} parent=11 // pred_fallthru
        _
      // Predicated region
      $region17: #{rcbv6_forward.1} parent=11 // pred_check
        %p297 = pneg %p85
      $region18: #{rcbv6_forward.1} parent=11 // pred_check_branch
        %299 = sbr.rel (%p297) target = $region20
      $region19: #{rcbv6_forward.1} parent=11 // pred_region
        _
      $region20: #{rcbv6_forward.1} parent=11 // pred_fallthru
        _
      // Predicated region
      $region21: #{rcbv6_forward.1} parent=11 // pred_check
        %p300 = pneg %p106
      $region22: #{rcbv6_forward.1} parent=11 // pred_check_branch
        %302 = sbr.rel (%p300) target = $region24
      $region23: #{rcbv6_forward.1} parent=11 // pred_region
        _
      $region24: #{rcbv6_forward.1} parent=11 // pred_fallthru
        _
      // Predicated region
      $region25: #{rcbv6_forward.1} parent=11 // pred_check
        %p303 = pneg %p127
      $region26: #{rcbv6_forward.1} parent=11 // pred_check_branch
        %305 = sbr.rel (%p303) target = $region28
      $region27: #{rcbv6_forward.1} parent=11 // pred_region
        _
      $region28: #{rcbv6_forward.1} parent=11 // pred_fallthru
        _
      // Predicated region
      $region29: #{rcbv6_forward.1} parent=11 // pred_check
        %p306 = pneg %p148
      $region30: #{rcbv6_forward.1} parent=11 // pred_check_branch
        %308 = sbr.rel (%p306) target = $region32
      $region31: #{rcbv6_forward.1} parent=11 // pred_region
        _
      $region32: #{rcbv6_forward.1} parent=11 // pred_fallthru
        _
      // Predicated region
      $region33: #{rcbv6_forward.1} parent=11 // pred_check
        %p309 = pneg %p169
      $region34: #{rcbv6_forward.1} parent=11 // pred_check_branch
        %311 = sbr.rel (%p309) target = $region36
      $region35: #{rcbv6_forward.1} parent=11 // pred_region
        _
      $region36: #{rcbv6_forward.1} parent=11 // pred_fallthru
        _
      // Predicated region
      $region37: #{rcbv6_forward.1} parent=11 // pred_check
        %p312 = pneg %p190
      $region38: #{rcbv6_forward.1} parent=11 // pred_check_branch
        %314 = sbr.rel (%p312) target = $region40
      $region39: #{rcbv6_forward.1} parent=11 // pred_region
        _
      $region40: #{rcbv6_forward.1} parent=11 // pred_fallthru
        _
      // Predicated region
      $region41: #{rcbv6_forward.1} parent=11 // pred_check
        %p315 = pneg %p211
      $region42: #{rcbv6_forward.1} parent=11 // pred_check_branch
        %317 = sbr.rel (%p315) target = $region44
      $region43: #{rcbv6_forward.1} parent=11 // pred_region
        _
      $region44: #{rcbv6_forward.1} parent=11 // pred_fallthru
        _
      // Predicated region
      $region45: #{rcbv6_forward.1} parent=11 // pred_check
        %p318 = pneg %p232
      $region46: #{rcbv6_forward.1} parent=11 // pred_check_branch
        %320 = sbr.rel (%p318) target = $region48
      $region47: #{rcbv6_forward.1} parent=11 // pred_region
        _
      $region48: #{rcbv6_forward.1} parent=11 // pred_fallthru
        _
      // Predicated region
      $region49: #{rcbv6_forward.1} parent=11 // pred_check
        %p321 = pneg %p253
      $region50: #{rcbv6_forward.1} parent=11 // pred_check_branch
        %323 = sbr.rel (%p321) target = $region52
      $region51: #{rcbv6_forward.1} parent=11 // pred_region
        _
      $region52: #{rcbv6_forward.1} parent=11 // pred_fallthru
        _
    $region12: #{rcbv6_forward.1} parent=5 // pred_fallthru
      _
    %p324 = scmp.lt.s32.totalorder %s17, 2
    // Predicated region
    $region53: #{rcbv6_forward.1} parent=5 // pred_check
      %p325 = pneg %p324
    $region54: #{rcbv6_forward.1} parent=5 // pred_check_branch
      %327 = sbr.rel (%p325) target = $region56
    $region55: #{rcbv6_forward.1} parent=5 // pred_region
      // Predicated region
      $region57: #{rcbv6_forward.1} parent=55 // pred_check
        %p328 = pneg %p37
      $region58: #{rcbv6_forward.1} parent=55 // pred_check_branch
        %330 = sbr.rel (%p328) target = $region60
      $region59: #{rcbv6_forward.1} parent=55 // pred_region
        %p331 = scmp.lt.s32.totalorder %s17, 1
        %s332 = scalar_select %p331, %s17, 1
        %s333 = smul.addr %s332, 2
        %s334 = smul.addr %s333, 8
        %s335 = scalar_lea.vmem %s0, %s334
      $region60: #{rcbv6_forward.1} parent=55 // pred_fallthru
        _
    $region56: #{rcbv6_forward.1} parent=5 // pred_fallthru
      _
    %p336 = scmp.le.s32.totalorder 1, %s17
    %p337 = scmp.lt.s32.totalorder %s17, 3
    %p338 = pnand %p336, %p337
    %p339 = pneg %p338
    // Predicated region
    $region61: #{rcbv6_forward.1} parent=5 // pred_check
      _
    $region62: #{rcbv6_forward.1} parent=5 // pred_check_branch
      %341 = sbr.rel (%p338) target = $region64
    $region63: #{rcbv6_forward.1} parent=5 // pred_region
      %s342 = ssub.s32 %s17, 1
      %p343 = scmp.lt.s32.totalorder %s22, 1
      %s344 = scalar_select %p343, %s22, 1
      %s345 = smul.addr %s344, 2
      %s346 = smul.addr %s345, 8
      %s347 = scalar_lea.vmem %s0, %s346
      %p348 = pneg %p43
      %p349 = pneg %p40
      %p350 = pneg %p64
      %p351 = pneg %p61
      %p352 = pneg %p85
      %p353 = pneg %p82
      %p354 = pneg %p106
      %p355 = pneg %p103
      %p356 = pneg %p127
      %p357 = pneg %p124
      %p358 = pneg %p148
      %p359 = pneg %p145
      %p360 = pneg %p169
      %p361 = pneg %p166
      %p362 = pneg %p190
      %p363 = pneg %p187
      %p364 = pneg %p211
      %p365 = pneg %p208
      %p366 = pneg %p232
      %p367 = pneg %p229
      %p368 = pneg %p253
      %p369 = pneg %p250
      %p370 = pneg %p279
      %p371 = pneg %p276
      %p372 = scmp.lt.s32.totalorder %s22, 1
      %s373 = scalar_select %p372, %s22, 1
      %s374 = smul.addr %s373, 2
      %s375 = smul.addr %s374, 8
      %s376 = scalar_lea.vmem %s11, %s375
      %p377 = scmp.lt.s32.totalorder %s22, 1
      %s378 = scalar_select %p377, %s22, 1
      %s379 = smul.addr %s378, 2
      %s380 = smul.addr %s379, 8
      %s381 = scalar_lea.vmem %s0, %s380
      %p382 = scmp.lt.s32.totalorder %s22, 1
      %s383 = scalar_select %p382, %s22, 1
      %s384 = smul.addr %s383, 2
      %s385 = smul.addr %s384, 8
      %s386 = scalar_lea.vmem %s11, %s385
      %v387 = vld [vmem:[%s381] sm:$0xff]
      %v388 = vld [vmem:[%s381 + $0x8] sm:$0xff]
      %v389 = vlaneseq
      %vm390 = vcmp.ge.s32.totalorder %v389, 0
      %vm391 = vcmp.lt.s32.totalorder %v389, 144
      %vm392 = vmand %vm390, %vm391
      %393 = vst.msk [vmem:[#allocation2] ss:$8 sm:$0x3] %vm392, 0.0
      %394 = vst.msk [vmem:[#allocation2] ss:$8 sm:$0x0] %vm392, 0.0
      %s395 = scalar_lea.vmem [#allocation2], 33
      %396 = vst.msk [vmem:[%s395] ss:$8 sm:$0x3] %vm392, 0.0
      %397 = vst.msk [vmem:[%s395] ss:$8 sm:$0x0] %vm392, 0.0
      %vm398 = vcmask 64512
      %399 = vst.msk [vmem:[#allocation2] sm:$0xff] %vm398, 0.0
      %400 = vst.msk [vmem:[#allocation2 + $0x10] sm:$0xff] %vm398, 0.0
      %vm401 = vcmask 58368
      %402 = vst.msk [vmem:[#allocation2 + $0x20] sm:$0x3] %vm401, 0.0
      %vm403 = vcmask 130112
      %404 = vst.msk [vmem:[#allocation2 + $0x8] sm:$0xff] %vm403, 0.0
      %405 = vst.msk [vmem:[#allocation2 + $0x18] sm:$0xff] %vm403, 0.0
      %vm406 = vcmask 123968
      %407 = vst.msk [vmem:[#allocation2 + $0x28] sm:$0x3] %vm406, 0.0
      %vm410 = vcmask 1040384
      %v411 = vrot.slane %v387, 7
      %v412 = vrot.slane %v388, 7
      %v413 = vsel %vm410, %v411, %v412
      %414 = vrot.lane.b32.xlu0 %v411, 8
      %v415 = vpop.permute.xlu0 %414
      %416 = vrot.lane.b32.xlu0 %v413, 8
      %v417 = vpop.permute.xlu0 %416
      %418 = vrot.lane.b32.xlu0 %v412, 8
      %v419 = vpop.permute.xlu0 %418
      %vm423 = vcmask 1047617
      %424 = vst.msk [vmem:[#allocation2] sm:$0xfe] %vm423, %v415
      %vm425 = vcmask 64513
      %426 = vst.msk [vmem:[#allocation2 + $0x8] sm:$0xfe] %vm425, %v415
      %vm427 = vcmask 1047616
      %428 = vst.msk [vmem:[#allocation2 + $0x10] sm:$0xff] %vm427, %v417
      %429 = vst.msk [vmem:[#allocation2 + $0x18] sm:$0xff] %vm398, %v417
      %vm430 = vcmask 1040448
      %431 = vst.msk [vmem:[#allocation2 + $0x20] sm:$0x1] %vm430, %v419
      %vm432 = vcmask 57344
      %433 = vst.msk [vmem:[#allocation2 + $0x28] sm:$0x1] %vm432, %v419
      %v434 = vld [vmem:[#allocation2] sm:$0xff]
      %v435 = vld [vmem:[#allocation2 + $0x10] sm:$0xff]
      %436 = vst [vmem:[#allocation5] sm:$0xff] %v434
      %437 = vst [vmem:[#allocation5 + $0x48] sm:$0xff] %v435
      %v438 = vld [vmem:[#allocation2] sm:$0xff]
      %v439 = vld [vmem:[#allocation2 + $0x8] sm:$0xff]
      %v440 = vld [vmem:[#allocation2 + $0x10] sm:$0xff]
      %v441 = vld [vmem:[#allocation2 + $0x18] sm:$0xff]
      %446 = vrot.lane.b32.xlu0 %v438, 120
      %v447 = vpop.permute.xlu0 %446
      %448 = vrot.lane.b32.xlu0 %v439, 120
      %v449 = vpop.permute.xlu0 %448
      %450 = vrot.lane.b32.xlu0 %v440, 120
      %v451 = vpop.permute.xlu0 %450
      %452 = vrot.lane.b32.xlu0 %v441, 120
      %v453 = vpop.permute.xlu0 %452
      %vm454 = vcmask 982016
      %v455 = vsel %vm454, %v447, %v449
      %v456 = vsel %vm454, %v451, %v453
      %459 = vst [vmem:[#allocation5 + $0x8] sm:$0xff] %v455
      %460 = vst [vmem:[#allocation5 + $0x50] sm:$0xff] %v456
      %v461 = vld [vmem:[#allocation2] sm:$0xff]
      %v462 = vld [vmem:[#allocation2 + $0x8] sm:$0xff]
      %v463 = vld [vmem:[#allocation2 + $0x10] sm:$0xff]
      %v464 = vld [vmem:[#allocation2 + $0x18] sm:$0xff]
      %469 = vrot.lane.b32.xlu0 %v461, 112
      %v470 = vpop.permute.xlu0 %469
      %471 = vrot.lane.b32.xlu0 %v462, 112
      %v472 = vpop.permute.xlu0 %471
      %473 = vrot.lane.b32.xlu0 %v463, 112
      %v474 = vpop.permute.xlu0 %473
      %475 = vrot.lane.b32.xlu0 %v464, 112
      %v476 = vpop.permute.xlu0 %475
      %vm477 = vcmask 916480
      %v478 = vsel %vm477, %v470, %v472
      %v479 = vsel %vm477, %v474, %v476
      %482 = vst [vmem:[#allocation5 + $0x10] sm:$0xff] %v478
      %483 = vst [vmem:[#allocation5 + $0x58] sm:$0xff] %v479
      %v484 = vld [vmem:[#allocation2] sm:$0xfe]
      %v485 = vld [vmem:[#allocation2 + $0x10] sm:$0xff]
      %v486 = vld [vmem:[#allocation2 + $0x20] sm:$0x1]
      %vm490 = vcmask 1046528
      %v491 = vrot.slane %v484, 1
      %v492 = vrot.slane %v485, 1
      %v493 = vsel %vm490, %v491, %v492
      %v494 = vrot.slane %v486, 1
      %v495 = vsel %vm490, %v492, %v494
      %498 = vst [vmem:[#allocation5 + $0x18] sm:$0xff] %v493
      %499 = vst [vmem:[#allocation5 + $0x60] sm:$0xff] %v495
      %v500 = vld [vmem:[#allocation2] sm:$0xfe]
      %v501 = vld [vmem:[#allocation2 + $0x8] sm:$0xfe]
      %v502 = vld [vmem:[#allocation2 + $0x10] sm:$0xff]
      %v503 = vld [vmem:[#allocation2 + $0x18] sm:$0xff]
      %v504 = vld [vmem:[#allocation2 + $0x20] sm:$0x1]
      %v505 = vld [vmem:[#allocation2 + $0x28] sm:$0x1]
      %v512 = vrot.slane %v500, 1
      %v513 = vrot.slane %v502, 1
      %v514 = vsel %vm490, %v512, %v513
      %v515 = vrot.slane %v501, 1
      %v516 = vrot.slane %v503, 1
      %v517 = vsel %vm490, %v515, %v516
      %v518 = vrot.slane %v504, 1
      %v519 = vsel %vm490, %v513, %v518
      %v520 = vrot.slane %v505, 1
      %v521 = vsel %vm490, %v516, %v520
      %522 = vrot.lane.b32.xlu0 %v514, 120
      %v523 = vpop.permute.xlu0 %522
      %524 = vrot.lane.b32.xlu0 %v517, 120
      %v525 = vpop.permute.xlu0 %524
      %526 = vrot.lane.b32.xlu0 %v519, 120
      %v527 = vpop.permute.xlu0 %526
      %528 = vrot.lane.b32.xlu0 %v521, 120
      %v529 = vpop.permute.xlu0 %528
      %v530 = vsel %vm454, %v523, %v525
      %v531 = vsel %vm454, %v527, %v529
      %534 = vst [vmem:[#allocation5 + $0x20] sm:$0xff] %v530
      %535 = vst [vmem:[#allocation5 + $0x68] sm:$0xff] %v531
      %v536 = vld [vmem:[#allocation2] sm:$0xfe]
      %v537 = vld [vmem:[#allocation2 + $0x8] sm:$0xfe]
      %v538 = vld [vmem:[#allocation2 + $0x10] sm:$0xff]
      %v539 = vld [vmem:[#allocation2 + $0x18] sm:$0xff]
      %v540 = vld [vmem:[#allocation2 + $0x20] sm:$0x1]
      %v541 = vld [vmem:[#allocation2 + $0x28] sm:$0x1]
      %v548 = vrot.slane %v536, 1
      %v549 = vrot.slane %v538, 1
      %v550 = vsel %vm490, %v548, %v549
      %v551 = vrot.slane %v537, 1
      %v552 = vrot.slane %v539, 1
      %v553 = vsel %vm490, %v551, %v552
      %v554 = vrot.slane %v540, 1
      %v555 = vsel %vm490, %v549, %v554
      %v556 = vrot.slane %v541, 1
      %v557 = vsel %vm490, %v552, %v556
      %558 = vrot.lane.b32.xlu0 %v550, 112
      %v559 = vpop.permute.xlu0 %558
      %560 = vrot.lane.b32.xlu0 %v553, 112
      %v561 = vpop.permute.xlu0 %560
      %562 = vrot.lane.b32.xlu0 %v555, 112
      %v563 = vpop.permute.xlu0 %562
      %564 = vrot.lane.b32.xlu0 %v557, 112
      %v565 = vpop.permute.xlu0 %564
      %v566 = vsel %vm477, %v559, %v561
      %v567 = vsel %vm477, %v563, %v565
      %570 = vst [vmem:[#allocation5 + $0x28] sm:$0xff] %v566
      %571 = vst [vmem:[#allocation5 + $0x70] sm:$0xff] %v567
      %v572 = vld [vmem:[#allocation2] sm:$0xfc]
      %v573 = vld [vmem:[#allocation2 + $0x10] sm:$0xff]
      %v574 = vld [vmem:[#allocation2 + $0x20] sm:$0x3]
      %vm578 = vcmask 1045504
      %v579 = vrot.slane %v572, 2
      %v580 = vrot.slane %v573, 2
      %v581 = vsel %vm578, %v579, %v580
      %v582 = vrot.slane %v574, 2
      %v583 = vsel %vm578, %v580, %v582
      %586 = vst [vmem:[#allocation5 + $0x30] sm:$0xff] %v581
      %587 = vst [vmem:[#allocation5 + $0x78] sm:$0xff] %v583
      %v588 = vld [vmem:[#allocation2] sm:$0xfc]
      %v589 = vld [vmem:[#allocation2 + $0x8] sm:$0xfc]
      %v590 = vld [vmem:[#allocation2 + $0x10] sm:$0xff]
      %v591 = vld [vmem:[#allocation2 + $0x18] sm:$0xff]
      %v592 = vld [vmem:[#allocation2 + $0x20] sm:$0x3]
      %v593 = vld [vmem:[#allocation2 + $0x28] sm:$0x3]
      %v600 = vrot.slane %v588, 2
      %v601 = vrot.slane %v590, 2
      %v602 = vsel %vm578, %v600, %v601
      %v603 = vrot.slane %v589, 2
      %v604 = vrot.slane %v591, 2
      %v605 = vsel %vm578, %v603, %v604
      %v606 = vrot.slane %v592, 2
      %v607 = vsel %vm578, %v601, %v606
      %v608 = vrot.slane %v593, 2
      %v609 = vsel %vm578, %v604, %v608
      %610 = vrot.lane.b32.xlu0 %v602, 120
      %v611 = vpop.permute.xlu0 %610
      %612 = vrot.lane.b32.xlu0 %v605, 120
      %v613 = vpop.permute.xlu0 %612
      %614 = vrot.lane.b32.xlu0 %v607, 120
      %v615 = vpop.permute.xlu0 %614
      %616 = vrot.lane.b32.xlu0 %v609, 120
      %v617 = vpop.permute.xlu0 %616
      %v618 = vsel %vm454, %v611, %v613
      %v619 = vsel %vm454, %v615, %v617
      %622 = vst [vmem:[#allocation5 + $0x38] sm:$0xff] %v618
      %623 = vst [vmem:[#allocation5 + $0x80] sm:$0xff] %v619
      %v624 = vld [vmem:[#allocation2] sm:$0xfc]
      %v625 = vld [vmem:[#allocation2 + $0x8] sm:$0xfc]
      %v626 = vld [vmem:[#allocation2 + $0x10] sm:$0xff]
      %v627 = vld [vmem:[#allocation2 + $0x18] sm:$0xff]
      %v628 = vld [vmem:[#allocation2 + $0x20] sm:$0x3]
      %v629 = vld [vmem:[#allocation2 + $0x28] sm:$0x3]
      %v636 = vrot.slane %v624, 2
      %v637 = vrot.slane %v626, 2
      %v638 = vsel %vm578, %v636, %v637
      %v639 = vrot.slane %v625, 2
      %v640 = vrot.slane %v627, 2
      %v641 = vsel %vm578, %v639, %v640
      %v642 = vrot.slane %v628, 2
      %v643 = vsel %vm578, %v637, %v642
      %v644 = vrot.slane %v629, 2
      %v645 = vsel %vm578, %v640, %v644
      %646 = vrot.lane.b32.xlu0 %v638, 112
      %v647 = vpop.permute.xlu0 %646
      %648 = vrot.lane.b32.xlu0 %v641, 112
      %v649 = vpop.permute.xlu0 %648
      %650 = vrot.lane.b32.xlu0 %v643, 112
      %v651 = vpop.permute.xlu0 %650
      %652 = vrot.lane.b32.xlu0 %v645, 112
      %v653 = vpop.permute.xlu0 %652
      %v654 = vsel %vm477, %v647, %v649
      %v655 = vsel %vm477, %v651, %v653
      %658 = vst [vmem:[#allocation5 + $0x40] sm:$0xff] %v654
      %659 = vst [vmem:[#allocation5 + $0x88] sm:$0xff] %v655
      %v660 = vld [vmem:[#allocation5] sm:$0xff]
      %v661 = vld [vmem:[#allocation5 + $0x8] sm:$0xff]
      %v662 = vld [vmem:[#allocation5 + $0x10] sm:$0xff]
      %v663 = vld [vmem:[#allocation5 + $0x18] sm:$0xff]
      %v664 = vld [vmem:[#allocation5 + $0x20] sm:$0xff]
      %v665 = vld [vmem:[#allocation5 + $0x28] sm:$0xff]
      %v666 = vld [vmem:[#allocation5 + $0x30] sm:$0xff]
      %v667 = vld [vmem:[#allocation5 + $0x38] sm:$0xff]
      %v668 = vld [vmem:[#allocation5 + $0x40] sm:$0xff]
      %v669 = vld [vmem:[#allocation5 + $0x48] sm:$0xff]
      %v670 = vld [vmem:[#allocation5 + $0x50] sm:$0xff]
      %v671 = vld [vmem:[#allocation5 + $0x58] sm:$0xff]
      %v672 = vld [vmem:[#allocation5 + $0x60] sm:$0xff]
      %v673 = vld [vmem:[#allocation5 + $0x68] sm:$0xff]
      %v674 = vld [vmem:[#allocation5 + $0x70] sm:$0xff]
      %v675 = vld [vmem:[#allocation5 + $0x78] sm:$0xff]
      %v676 = vld [vmem:[#allocation5 + $0x80] sm:$0xff]
      %v677 = vld [vmem:[#allocation5 + $0x88] sm:$0xff]
      %v678 = vld [vmem:[%s1] sm:$0xff]
      %v679 = vld [vmem:[%s1 + $0x8] sm:$0xff]
      %v680 = vld [vmem:[%s1 + $0x10] sm:$0xff]
      %v681 = vld [vmem:[%s1 + $0x18] sm:$0xff]
      %v682 = vld [vmem:[%s1 + $0x20] sm:$0xff]
      %v683 = vld [vmem:[%s1 + $0x28] sm:$0xff]
      %v684 = vld [vmem:[%s1 + $0x30] sm:$0xff]
      %v685 = vld [vmem:[%s1 + $0x38] sm:$0xff]
      %v686 = vld [vmem:[%s1 + $0x40] sm:$0xff]
      %v687 = vld [vmem:[%s1 + $0x48] sm:$0xff]
      %v688 = vld [vmem:[%s1 + $0x50] sm:$0xff]
      %v689 = vld [vmem:[%s1 + $0x58] sm:$0xff]
      %v690 = vld [vmem:[%s1 + $0x60] sm:$0xff]
      %v691 = vld [vmem:[%s1 + $0x68] sm:$0xff]
      %v692 = vld [vmem:[%s1 + $0x70] sm:$0xff]
      %v693 = vld [vmem:[%s1 + $0x78] sm:$0xff]
      %v694 = vld [vmem:[%s1 + $0x80] sm:$0xff]
      %v695 = vld [vmem:[%s1 + $0x88] sm:$0xff]
      %v696 = vld [vmem:[%s1 + $0x90] sm:$0xff]
      %v697 = vld [vmem:[%s1 + $0x98] sm:$0xff]
      %v698 = vld [vmem:[%s1 + $0xa0] sm:$0xff]
      %v699 = vld [vmem:[%s1 + $0xa8] sm:$0xff]
      %v700 = vld [vmem:[%s1 + $0xb0] sm:$0xff]
      %v701 = vld [vmem:[%s1 + $0xb8] sm:$0xff]
      %v702 = vld [vmem:[%s1 + $0xc0] sm:$0xff]
      %v703 = vld [vmem:[%s1 + $0xc8] sm:$0xff]
      %v704 = vld [vmem:[%s1 + $0xd0] sm:$0xff]
      %v705 = vld [vmem:[%s1 + $0xd8] sm:$0xff]
      %v706 = vld [vmem:[%s1 + $0xe0] sm:$0xff]
      %v707 = vld [vmem:[%s1 + $0xe8] sm:$0xff]
      %v708 = vld [vmem:[%s1 + $0xf0] sm:$0xff]
      %v709 = vld [vmem:[%s1 + $0xf8] sm:$0xff]
      %v710 = vld [vmem:[%s1 + $0x100] sm:$0xff]
      %v711 = vld [vmem:[%s1 + $0x108] sm:$0xff]
      %v712 = vld [vmem:[%s1 + $0x110] sm:$0xff]
      %v713 = vld [vmem:[%s1 + $0x118] sm:$0xff]
      %v714 = vld [vmem:[%s1 + $0x120] sm:$0xff]
      %v715 = vld [vmem:[%s1 + $0x128] sm:$0xff]
      %v716 = vld [vmem:[%s1 + $0x130] sm:$0xff]
      %v717 = vld [vmem:[%s1 + $0x138] sm:$0xff]
      %v718 = vld [vmem:[%s1 + $0x140] sm:$0xff]
      %v719 = vld [vmem:[%s1 + $0x148] sm:$0xff]
      %v720 = vld [vmem:[%s1 + $0x150] sm:$0xff]
      %v721 = vld [vmem:[%s1 + $0x158] sm:$0xff]
      %v722 = vld [vmem:[%s1 + $0x160] sm:$0xff]
      %v723 = vld [vmem:[%s1 + $0x168] sm:$0xff]
      %v724 = vld [vmem:[%s1 + $0x170] sm:$0xff]
      %v725 = vld [vmem:[%s1 + $0x178] sm:$0xff]
      %v726 = vld [vmem:[%s1 + $0x180] sm:$0xff]
      %v727 = vld [vmem:[%s1 + $0x188] sm:$0xff]
      %v728 = vld [vmem:[%s1 + $0x190] sm:$0xff]
      %v729 = vld [vmem:[%s1 + $0x198] sm:$0xff]
      %v730 = vld [vmem:[%s1 + $0x1a0] sm:$0xff]
      %v731 = vld [vmem:[%s1 + $0x1a8] sm:$0xff]
      %v732 = vld [vmem:[%s1 + $0x1b0] sm:$0xff]
      %v733 = vld [vmem:[%s1 + $0x1b8] sm:$0xff]
      %v734 = vld [vmem:[%s1 + $0x1c0] sm:$0xff]
      %v735 = vld [vmem:[%s1 + $0x1c8] sm:$0xff]
      %v736 = vld [vmem:[%s1 + $0x1d0] sm:$0xff]
      %v737 = vld [vmem:[%s1 + $0x1d8] sm:$0xff]
      %v738 = vld [vmem:[%s1 + $0x1e0] sm:$0xff]
      %v739 = vld [vmem:[%s1 + $0x1e8] sm:$0xff]
      %v740 = vld [vmem:[%s1 + $0x1f0] sm:$0xff]
      %v741 = vld [vmem:[%s1 + $0x1f8] sm:$0xff]
      %v742 = vld [vmem:[%s1 + $0x200] sm:$0xff]
      %v743 = vld [vmem:[%s1 + $0x208] sm:$0xff]
      %v744 = vld [vmem:[%s1 + $0x210] sm:$0xff]
      %v745 = vld [vmem:[%s1 + $0x218] sm:$0xff]
      %v746 = vld [vmem:[%s1 + $0x220] sm:$0xff]
      %v747 = vld [vmem:[%s1 + $0x228] sm:$0xff]
      %v748 = vld [vmem:[%s1 + $0x230] sm:$0xff]
      %v749 = vld [vmem:[%s1 + $0x238] sm:$0xff]
      %v750 = vld [vmem:[%s1 + $0x240] sm:$0xff]
      %v751 = vld [vmem:[%s1 + $0x248] sm:$0xff]
      %v752 = vld [vmem:[%s1 + $0x250] sm:$0xff]
      %v753 = vld [vmem:[%s1 + $0x258] sm:$0xff]
      %v754 = vld [vmem:[%s1 + $0x260] sm:$0xff]
      %v755 = vld [vmem:[%s1 + $0x268] sm:$0xff]
      %v756 = vld [vmem:[%s1 + $0x270] sm:$0xff]
      %v757 = vld [vmem:[%s1 + $0x278] sm:$0xff]
      %v758 = vld [vmem:[%s1 + $0x280] sm:$0xff]
      %v759 = vld [vmem:[%s1 + $0x288] sm:$0xff]
      %v760 = vld [vmem:[%s1 + $0x290] sm:$0xff]
      %v761 = vld [vmem:[%s1 + $0x298] sm:$0xff]
      %v762 = vld [vmem:[%s1 + $0x2a0] sm:$0xff]
      %v763 = vld [vmem:[%s1 + $0x2a8] sm:$0xff]
      %v764 = vld [vmem:[%s1 + $0x2b0] sm:$0xff]
      %v765 = vld [vmem:[%s1 + $0x2b8] sm:$0xff]
      %v766 = vld [vmem:[%s1 + $0x2c0] sm:$0xff]
      %v767 = vld [vmem:[%s1 + $0x2c8] sm:$0xff]
      %v768 = vld [vmem:[%s1 + $0x2d0] sm:$0xff]
      %v769 = vld [vmem:[%s1 + $0x2d8] sm:$0xff]
      %v770 = vld [vmem:[%s1 + $0x2e0] sm:$0xff]
      %v771 = vld [vmem:[%s1 + $0x2e8] sm:$0xff]
      %v772 = vld [vmem:[%s1 + $0x2f0] sm:$0xff]
      %v773 = vld [vmem:[%s1 + $0x2f8] sm:$0xff]
      %v774 = vld [vmem:[%s1 + $0x300] sm:$0xff]
      %v775 = vld [vmem:[%s1 + $0x308] sm:$0xff]
      %v776 = vld [vmem:[%s1 + $0x310] sm:$0xff]
      %v777 = vld [vmem:[%s1 + $0x318] sm:$0xff]
      %v778 = vld [vmem:[%s1 + $0x320] sm:$0xff]
      %v779 = vld [vmem:[%s1 + $0x328] sm:$0xff]
      %v780 = vld [vmem:[%s1 + $0x330] sm:$0xff]
      %v781 = vld [vmem:[%s1 + $0x338] sm:$0xff]
      %v782 = vld [vmem:[%s1 + $0x340] sm:$0xff]
      %v783 = vld [vmem:[%s1 + $0x348] sm:$0xff]
      %v784 = vld [vmem:[%s1 + $0x350] sm:$0xff]
      %v785 = vld [vmem:[%s1 + $0x358] sm:$0xff]
      %v786 = vld [vmem:[%s1 + $0x360] sm:$0xff]
      %v787 = vld [vmem:[%s1 + $0x368] sm:$0xff]
      %v788 = vld [vmem:[%s1 + $0x370] sm:$0xff]
      %v789 = vld [vmem:[%s1 + $0x378] sm:$0xff]
      %v790 = vld [vmem:[%s1 + $0x380] sm:$0xff]
      %v791 = vld [vmem:[%s1 + $0x388] sm:$0xff]
      %v792 = vld [vmem:[%s1 + $0x390] sm:$0xff]
      %v793 = vld [vmem:[%s1 + $0x398] sm:$0xff]
      %v794 = vld [vmem:[%s1 + $0x3a0] sm:$0xff]
      %v795 = vld [vmem:[%s1 + $0x3a8] sm:$0xff]
      %v796 = vld [vmem:[%s1 + $0x3b0] sm:$0xff]
      %v797 = vld [vmem:[%s1 + $0x3b8] sm:$0xff]
      %v798 = vld [vmem:[%s1 + $0x3c0] sm:$0xff]
      %v799 = vld [vmem:[%s1 + $0x3c8] sm:$0xff]
      %v800 = vld [vmem:[%s1 + $0x3d0] sm:$0xff]
      %v801 = vld [vmem:[%s1 + $0x3d8] sm:$0xff]
      %v802 = vld [vmem:[%s1 + $0x3e0] sm:$0xff]
      %v803 = vld [vmem:[%s1 + $0x3e8] sm:$0xff]
      %v804 = vld [vmem:[%s1 + $0x3f0] sm:$0xff]
      %v805 = vld [vmem:[%s1 + $0x3f8] sm:$0xff]
      %v806 = vld [vmem:[%s1 + $0x400] sm:$0xff]
      %v807 = vld [vmem:[%s1 + $0x408] sm:$0xff]
      %v808 = vld [vmem:[%s1 + $0x410] sm:$0xff]
      %v809 = vld [vmem:[%s1 + $0x418] sm:$0xff]
      %v810 = vld [vmem:[%s1 + $0x420] sm:$0xff]
      %v811 = vld [vmem:[%s1 + $0x428] sm:$0xff]
      %v812 = vld [vmem:[%s1 + $0x430] sm:$0xff]
      %v813 = vld [vmem:[%s1 + $0x438] sm:$0xff]
      %v814 = vld [vmem:[%s1 + $0x440] sm:$0xff]
      %v815 = vld [vmem:[%s1 + $0x448] sm:$0xff]
      %v816 = vld [vmem:[%s1 + $0x450] sm:$0xff]
      %v817 = vld [vmem:[%s1 + $0x458] sm:$0xff]
      %v818 = vld [vmem:[%s1 + $0x460] sm:$0xff]
      %v819 = vld [vmem:[%s1 + $0x468] sm:$0xff]
      %v820 = vld [vmem:[%s1 + $0x470] sm:$0xff]
      %v821 = vld [vmem:[%s1 + $0x478] sm:$0xff]
      %v822 = vld [vmem:[%s2] sm:$0x1]
      %v824 = vlaneseq
      %v825 = vshrl.u32 %v824, 7
      %v826 = vsub.s32 0, %v825
      %v827 = vrot.slane %v822, %v826
      %829 = vmatprep.subr.mxu0 0.0
      %830 = vmatpush1.msra.mxu0 %v678
      %831 = vmatprep.subr.mxu0 0.0
      %832 = vmatpush1.msra.mxu0 %v679
      %833 = vmatprep.subr.mxu0 0.0
      %834 = vmatpush1.msra.mxu0 %v680
      %835 = vmatprep.subr.mxu0 0.0
      %836 = vmatpush1.msra.mxu0 %v681
      %837 = vmatprep.subr.mxu0 0.0
      %838 = vmatpush1.msra.mxu0 %v682
      %839 = vmatprep.subr.mxu0 0.0
      %840 = vmatpush1.msra.mxu0 %v683
      %841 = vmatprep.subr.mxu0 0.0
      %842 = vmatpush1.msra.mxu0 %v684
      %843 = vmatprep.subr.mxu0 0.0
      %844 = vmatpush1.msra.mxu0 %v685
      %845 = vmatprep.subr.mxu0 0.0
      %846 = vmatpush1.msra.mxu0 %v686
      %847 = vmatprep.subr.mxu0 0.0
      %848 = vmatpush1.msra.mxu0 %v687
      %849 = vmatprep.subr.mxu0 0.0
      %850 = vmatpush1.msra.mxu0 %v688
      %851 = vmatprep.subr.mxu0 0.0
      %852 = vmatpush1.msra.mxu0 %v689
      %853 = vmatprep.subr.mxu0 0.0
      %854 = vmatpush1.msra.mxu0 %v690
      %855 = vmatprep.subr.mxu0 0.0
      %856 = vmatpush1.msra.mxu0 %v691
      %857 = vmatprep.subr.mxu0 0.0
      %858 = vmatpush1.msra.mxu0 %v692
      %859 = vmatprep.subr.mxu0 0.0
      %860 = vmatpush1.msra.mxu0 %v693
      %861 = vmatprep.subr.mxu0 0.0
      %862 = vmatpush1.msra.mxu0 %v694
      %863 = vmatprep.subr.mxu0 0.0
      %864 = vmatpush1.msra.mxu0 %v695
      %865 = vmatprep.subr.mxu0 0.0
      %866 = vmatpush1.msra.mxu0 %v696
      %867 = vmatprep.subr.mxu0 0.0
      %868 = vmatpush1.msra.mxu0 %v697
      %869 = vmatprep.subr.mxu0 0.0
      %870 = vmatpush1.msra.mxu0 %v698
      %871 = vmatprep.subr.mxu0 0.0
      %872 = vmatpush1.msra.mxu0 %v699
      %873 = vmatprep.subr.mxu0 0.0
      %874 = vmatpush1.msra.mxu0 %v700
      %875 = vmatprep.subr.mxu0 0.0
      %876 = vmatpush1.msra.mxu0 %v701
      %877 = vmatprep.subr.mxu0 0.0
      %878 = vmatpush1.msra.mxu0 %v702
      %879 = vmatprep.subr.mxu0 0.0
      %880 = vmatpush1.msra.mxu0 %v703
      %881 = vmatprep.subr.mxu0 0.0
      %882 = vmatpush1.msra.mxu0 %v704
      %883 = vmatprep.subr.mxu0 0.0
      %884 = vmatpush1.msra.mxu0 %v705
      %885 = vmatprep.subr.mxu0 0.0
      %886 = vmatpush1.msra.mxu0 %v706
      %887 = vmatprep.subr.mxu0 0.0
      %888 = vmatpush1.msra.mxu0 %v707
      %889 = vmatprep.subr.mxu0 0.0
      %890 = vmatpush1.msra.mxu0 %v708
      %891 = vmatprep.subr.mxu0 0.0
      %892 = vmatpush1.msra.mxu0 %v709
      %893 = vmatprep.mubr.f32.mxu0 %v661
      %894 = vmatmul.mubr.f32.gmra.mrb[0].mxu0 %v660
      %v895 = vpop.f32.mrb[0].mxu0
      %v896 = vadd.f32 %v827, %v895
      %v897 = vpop.f32.mrb[0].mxu0
      %898 = vmatprep.mubr.f32.mxu0 %v670
      %899 = vmatmul.mubr.f32.gmra.mrb[0].mxu0 %v669
      %v900 = vpop.f32.mrb[0].mxu0
      %v901 = vadd.f32 %v827, %v900
      %v902 = vpop.f32.mrb[0].mxu0
      %903 = vdwg.mxu0
      %904 = vmatprep.subr.mxu0 0.0
      %905 = vmatpush1.msra.mxu0 %v710
      %906 = vmatprep.subr.mxu0 0.0
      %907 = vmatpush1.msra.mxu0 %v711
      %908 = vmatprep.subr.mxu0 0.0
      %909 = vmatpush1.msra.mxu0 %v712
      %910 = vmatprep.subr.mxu0 0.0
      %911 = vmatpush1.msra.mxu0 %v713
      %912 = vmatprep.subr.mxu0 0.0
      %913 = vmatpush1.msra.mxu0 %v714
      %914 = vmatprep.subr.mxu0 0.0
      %915 = vmatpush1.msra.mxu0 %v715
      %916 = vmatprep.subr.mxu0 0.0
      %917 = vmatpush1.msra.mxu0 %v716
      %918 = vmatprep.subr.mxu0 0.0
      %919 = vmatpush1.msra.mxu0 %v717
      %920 = vmatprep.subr.mxu0 0.0
      %921 = vmatpush1.msra.mxu0 %v718
      %922 = vmatprep.subr.mxu0 0.0
      %923 = vmatpush1.msra.mxu0 %v719
      %924 = vmatprep.subr.mxu0 0.0
      %925 = vmatpush1.msra.mxu0 %v720
      %926 = vmatprep.subr.mxu0 0.0
      %927 = vmatpush1.msra.mxu0 %v721
      %928 = vmatprep.subr.mxu0 0.0
      %929 = vmatpush1.msra.mxu0 %v722
      %930 = vmatprep.subr.mxu0 0.0
      %931 = vmatpush1.msra.mxu0 %v723
      %932 = vmatprep.subr.mxu0 0.0
      %933 = vmatpush1.msra.mxu0 %v724
      %934 = vmatprep.subr.mxu0 0.0
      %935 = vmatpush1.msra.mxu0 %v725
      %936 = vmatprep.subr.mxu0 0.0
      %937 = vmatpush1.msra.mxu0 %v726
      %938 = vmatprep.subr.mxu0 0.0
      %939 = vmatpush1.msra.mxu0 %v727
      %940 = vmatprep.subr.mxu0 0.0
      %941 = vmatpush1.msra.mxu0 %v728
      %942 = vmatprep.subr.mxu0 0.0
      %943 = vmatpush1.msra.mxu0 %v729
      %944 = vmatprep.subr.mxu0 0.0
      %945 = vmatpush1.msra.mxu0 %v730
      %946 = vmatprep.subr.mxu0 0.0
      %947 = vmatpush1.msra.mxu0 %v731
      %948 = vmatprep.subr.mxu0 0.0
      %949 = vmatpush1.msra.mxu0 %v732
      %950 = vmatprep.subr.mxu0 0.0
      %951 = vmatpush1.msra.mxu0 %v733
      %952 = vmatprep.subr.mxu0 0.0
      %953 = vmatpush1.msra.mxu0 %v734
      %954 = vmatprep.subr.mxu0 0.0
      %955 = vmatpush1.msra.mxu0 %v735
      %956 = vmatprep.subr.mxu0 0.0
      %957 = vmatpush1.msra.mxu0 %v736
      %958 = vmatprep.subr.mxu0 0.0
      %959 = vmatpush1.msra.mxu0 %v737
      %960 = vmatprep.subr.mxu0 0.0
      %961 = vmatpush1.msra.mxu0 %v738
      %962 = vmatprep.subr.mxu0 0.0
      %963 = vmatpush1.msra.mxu0 %v739
      %964 = vmatprep.subr.mxu0 0.0
      %965 = vmatpush1.msra.mxu0 %v740
      %966 = vmatprep.subr.mxu0 0.0
      %967 = vmatpush1.msra.mxu0 %v741
      %968 = vmatprep.mubr.f32.mxu0 %v663
      %969 = vmatmul.mubr.f32.gmra.mrb[0].mxu0 %v662
      %v970 = vpop.f32.mrb[0].mxu0
      %v971 = vadd.f32 %v896, %v970
      %v972 = vpop.f32.mrb[0].mxu0
      %973 = vmatprep.mubr.f32.mxu0 %v672
      %974 = vmatmul.mubr.f32.gmra.mrb[0].mxu0 %v671
      %v975 = vpop.f32.mrb[0].mxu0
      %v976 = vadd.f32 %v901, %v975
      %v977 = vpop.f32.mrb[0].mxu0
      %978 = vdwg.mxu0
      %979 = vmatprep.subr.mxu0 0.0
      %980 = vmatpush1.msra.mxu0 %v742
      %981 = vmatprep.subr.mxu0 0.0
      %982 = vmatpush1.msra.mxu0 %v743
      %983 = vmatprep.subr.mxu0 0.0
      %984 = vmatpush1.msra.mxu0 %v744
      %985 = vmatprep.subr.mxu0 0.0
      %986 = vmatpush1.msra.mxu0 %v745
      %987 = vmatprep.subr.mxu0 0.0
      %988 = vmatpush1.msra.mxu0 %v746
      %989 = vmatprep.subr.mxu0 0.0
      %990 = vmatpush1.msra.mxu0 %v747
      %991 = vmatprep.subr.mxu0 0.0
      %992 = vmatpush1.msra.mxu0 %v748
      %993 = vmatprep.subr.mxu0 0.0
      %994 = vmatpush1.msra.mxu0 %v749
      %995 = vmatprep.subr.mxu0 0.0
      %996 = vmatpush1.msra.mxu0 %v750
      %997 = vmatprep.subr.mxu0 0.0
      %998 = vmatpush1.msra.mxu0 %v751
      %999 = vmatprep.subr.mxu0 0.0
      %1000 = vmatpush1.msra.mxu0 %v752
      %1001 = vmatprep.subr.mxu0 0.0
      %1002 = vmatpush1.msra.mxu0 %v753
      %1003 = vmatprep.subr.mxu0 0.0
      %1004 = vmatpush1.msra.mxu0 %v754
      %1005 = vmatprep.subr.mxu0 0.0
      %1006 = vmatpush1.msra.mxu0 %v755
      %1007 = vmatprep.subr.mxu0 0.0
      %1008 = vmatpush1.msra.mxu0 %v756
      %1009 = vmatprep.subr.mxu0 0.0
      %1010 = vmatpush1.msra.mxu0 %v757
      %1011 = vmatprep.subr.mxu0 0.0
      %1012 = vmatpush1.msra.mxu0 %v758
      %1013 = vmatprep.subr.mxu0 0.0
      %1014 = vmatpush1.msra.mxu0 %v759
      %1015 = vmatprep.subr.mxu0 0.0
      %1016 = vmatpush1.msra.mxu0 %v760
      %1017 = vmatprep.subr.mxu0 0.0
      %1018 = vmatpush1.msra.mxu0 %v761
      %1019 = vmatprep.subr.mxu0 0.0
      %1020 = vmatpush1.msra.mxu0 %v762
      %1021 = vmatprep.subr.mxu0 0.0
      %1022 = vmatpush1.msra.mxu0 %v763
      %1023 = vmatprep.subr.mxu0 0.0
      %1024 = vmatpush1.msra.mxu0 %v764
      %1025 = vmatprep.subr.mxu0 0.0
      %1026 = vmatpush1.msra.mxu0 %v765
      %1027 = vmatprep.subr.mxu0 0.0
      %1028 = vmatpush1.msra.mxu0 %v766
      %1029 = vmatprep.subr.mxu0 0.0
      %1030 = vmatpush1.msra.mxu0 %v767
      %1031 = vmatprep.subr.mxu0 0.0
      %1032 = vmatpush1.msra.mxu0 %v768
      %1033 = vmatprep.subr.mxu0 0.0
      %1034 = vmatpush1.msra.mxu0 %v769
      %1035 = vmatprep.subr.mxu0 0.0
      %1036 = vmatpush1.msra.mxu0 %v770
      %1037 = vmatprep.subr.mxu0 0.0
      %1038 = vmatpush1.msra.mxu0 %v771
      %1039 = vmatprep.subr.mxu0 0.0
      %1040 = vmatpush1.msra.mxu0 %v772
      %1041 = vmatprep.subr.mxu0 0.0
      %1042 = vmatpush1.msra.mxu0 %v773
      %1043 = vmatprep.mubr.f32.mxu0 %v665
      %1044 = vmatmul.mubr.f32.gmra.mrb[0].mxu0 %v664
      %v1045 = vpop.f32.mrb[0].mxu0
      %v1046 = vadd.f32 %v971, %v1045
      %v1047 = vpop.f32.mrb[0].mxu0
      %1048 = vmatprep.mubr.f32.mxu0 %v674
      %1049 = vmatmul.mubr.f32.gmra.mrb[0].mxu0 %v673
      %v1050 = vpop.f32.mrb[0].mxu0
      %v1051 = vadd.f32 %v976, %v1050
      %v1052 = vpop.f32.mrb[0].mxu0
      %1053 = vdwg.mxu0
      %1054 = vmatprep.subr.mxu0 0.0
      %1055 = vmatpush1.msra.mxu0 %v774
      %1056 = vmatprep.subr.mxu0 0.0
      %1057 = vmatpush1.msra.mxu0 %v775
      %1058 = vmatprep.subr.mxu0 0.0
      %1059 = vmatpush1.msra.mxu0 %v776
      %1060 = vmatprep.subr.mxu0 0.0
      %1061 = vmatpush1.msra.mxu0 %v777
      %1062 = vmatprep.subr.mxu0 0.0
      %1063 = vmatpush1.msra.mxu0 %v778
      %1064 = vmatprep.subr.mxu0 0.0
      %1065 = vmatpush1.msra.mxu0 %v779
      %1066 = vmatprep.subr.mxu0 0.0
      %1067 = vmatpush1.msra.mxu0 %v780
      %1068 = vmatprep.subr.mxu0 0.0
      %1069 = vmatpush1.msra.mxu0 %v781
      %1070 = vmatprep.subr.mxu0 0.0
      %1071 = vmatpush1.msra.mxu0 %v782
      %1072 = vmatprep.subr.mxu0 0.0
      %1073 = vmatpush1.msra.mxu0 %v783
      %1074 = vmatprep.subr.mxu0 0.0
      %1075 = vmatpush1.msra.mxu0 %v784
      %1076 = vmatprep.subr.mxu0 0.0
      %1077 = vmatpush1.msra.mxu0 %v785
      %1078 = vmatprep.subr.mxu0 0.0
      %1079 = vmatpush1.msra.mxu0 %v786
      %1080 = vmatprep.subr.mxu0 0.0
      %1081 = vmatpush1.msra.mxu0 %v787
      %1082 = vmatprep.subr.mxu0 0.0
      %1083 = vmatpush1.msra.mxu0 %v788
      %1084 = vmatprep.subr.mxu0 0.0
      %1085 = vmatpush1.msra.mxu0 %v789
      %1086 = vmatprep.subr.mxu0 0.0
      %1087 = vmatpush1.msra.mxu0 %v790
      %1088 = vmatprep.subr.mxu0 0.0
      %1089 = vmatpush1.msra.mxu0 %v791
      %1090 = vmatprep.subr.mxu0 0.0
      %1091 = vmatpush1.msra.mxu0 %v792
      %1092 = vmatprep.subr.mxu0 0.0
      %1093 = vmatpush1.msra.mxu0 %v793
      %1094 = vmatprep.subr.mxu0 0.0
      %1095 = vmatpush1.msra.mxu0 %v794
      %1096 = vmatprep.subr.mxu0 0.0
      %1097 = vmatpush1.msra.mxu0 %v795
      %1098 = vmatprep.subr.mxu0 0.0
      %1099 = vmatpush1.msra.mxu0 %v796
      %1100 = vmatprep.subr.mxu0 0.0
      %1101 = vmatpush1.msra.mxu0 %v797
      %1102 = vmatprep.subr.mxu0 0.0
      %1103 = vmatpush1.msra.mxu0 %v798
      %1104 = vmatprep.subr.mxu0 0.0
      %1105 = vmatpush1.msra.mxu0 %v799
      %1106 = vmatprep.subr.mxu0 0.0
      %1107 = vmatpush1.msra.mxu0 %v800
      %1108 = vmatprep.subr.mxu0 0.0
      %1109 = vmatpush1.msra.mxu0 %v801
      %1110 = vmatprep.subr.mxu0 0.0
      %1111 = vmatpush1.msra.mxu0 %v802
      %1112 = vmatprep.subr.mxu0 0.0
      %1113 = vmatpush1.msra.mxu0 %v803
      %1114 = vmatprep.subr.mxu0 0.0
      %1115 = vmatpush1.msra.mxu0 %v804
      %1116 = vmatprep.subr.mxu0 0.0
      %1117 = vmatpush1.msra.mxu0 %v805
      %1118 = vmatprep.mubr.f32.mxu0 %v667
      %1119 = vmatmul.mubr.f32.gmra.mrb[0].mxu0 %v666
      %v1120 = vpop.f32.mrb[0].mxu0
      %v1121 = vadd.f32 %v1046, %v1120
      %v1122 = vpop.f32.mrb[0].mxu0
      %1123 = vmatprep.mubr.f32.mxu0 %v676
      %1124 = vmatmul.mubr.f32.gmra.mrb[0].mxu0 %v675
      %v1125 = vpop.f32.mrb[0].mxu0
      %v1126 = vadd.f32 %v1051, %v1125
      %v1127 = vpop.f32.mrb[0].mxu0
      %1128 = vdwg.mxu0
      %1129 = vmatprep.subr.mxu0 0.0
      %1130 = vmatpush1.msra.mxu0 %v806
      %1131 = vmatprep.subr.mxu0 0.0
      %1132 = vmatpush1.msra.mxu0 %v807
      %1133 = vmatprep.subr.mxu0 0.0
      %1134 = vmatpush1.msra.mxu0 %v808
      %1135 = vmatprep.subr.mxu0 0.0
      %1136 = vmatpush1.msra.mxu0 %v809
      %1137 = vmatprep.subr.mxu0 0.0
      %1138 = vmatpush1.msra.mxu0 %v810
      %1139 = vmatprep.subr.mxu0 0.0
      %1140 = vmatpush1.msra.mxu0 %v811
      %1141 = vmatprep.subr.mxu0 0.0
      %1142 = vmatpush1.msra.mxu0 %v812
      %1143 = vmatprep.subr.mxu0 0.0
      %1144 = vmatpush1.msra.mxu0 %v813
      %1145 = vmatprep.subr.mxu0 0.0
      %1146 = vmatpush1.msra.mxu0 %v814
      %1147 = vmatprep.subr.mxu0 0.0
      %1148 = vmatpush1.msra.mxu0 %v815
      %1149 = vmatprep.subr.mxu0 0.0
      %1150 = vmatpush1.msra.mxu0 %v816
      %1151 = vmatprep.subr.mxu0 0.0
      %1152 = vmatpush1.msra.mxu0 %v817
      %1153 = vmatprep.subr.mxu0 0.0
      %1154 = vmatpush1.msra.mxu0 %v818
      %1155 = vmatprep.subr.mxu0 0.0
      %1156 = vmatpush1.msra.mxu0 %v819
      %1157 = vmatprep.subr.mxu0 0.0
      %1158 = vmatpush1.msra.mxu0 %v820
      %1159 = vmatprep.subr.mxu0 0.0
      %1160 = vmatpush1.msra.mxu0 %v821
      %1161 = vmatprep.subr.mxu0 0.0
      %1162 = vmatpush1.msra.mxu0 0.0
      %1163 = vmatprep.subr.mxu0 0.0
      %1164 = vmatpush1.msra.mxu0 0.0
      %1165 = vmatprep.subr.mxu0 0.0
      %1166 = vmatpush1.msra.mxu0 0.0
      %1167 = vmatprep.subr.mxu0 0.0
      %1168 = vmatpush1.msra.mxu0 0.0
      %1169 = vmatprep.subr.mxu0 0.0
      %1170 = vmatpush1.msra.mxu0 0.0
      %1171 = vmatprep.subr.mxu0 0.0
      %1172 = vmatpush1.msra.mxu0 0.0
      %1173 = vmatprep.subr.mxu0 0.0
      %1174 = vmatpush1.msra.mxu0 0.0
      %1175 = vmatprep.subr.mxu0 0.0
      %1176 = vmatpush1.msra.mxu0 0.0
      %1177 = vmatprep.subr.mxu0 0.0
      %1178 = vmatpush1.msra.mxu0 0.0
      %1179 = vmatprep.subr.mxu0 0.0
      %1180 = vmatpush1.msra.mxu0 0.0
      %1181 = vmatprep.subr.mxu0 0.0
      %1182 = vmatpush1.msra.mxu0 0.0
      %1183 = vmatprep.subr.mxu0 0.0
      %1184 = vmatpush1.msra.mxu0 0.0
      %1185 = vmatprep.subr.mxu0 0.0
      %1186 = vmatpush1.msra.mxu0 0.0
      %1187 = vmatprep.subr.mxu0 0.0
      %1188 = vmatpush1.msra.mxu0 0.0
      %1189 = vmatprep.subr.mxu0 0.0
      %1190 = vmatpush1.msra.mxu0 0.0
      %1191 = vmatprep.subr.mxu0 0.0
      %1192 = vmatpush1.msra.mxu0 0.0
      %1193 = vmatprep.mubr.f32.mxu0 0.0
      %1194 = vmatmul.mubr.f32.gmra.mrb[0].mxu0 %v668
      %v1195 = vpop.f32.mrb[0].mxu0
      %v1196 = vadd.f32 %v1121, %v1195
      %v1197 = vpop.f32.mrb[0].mxu0
      %1198 = vmatprep.mubr.f32.mxu0 0.0
      %1199 = vmatmul.mubr.f32.gmra.mrb[0].mxu0 %v677
      %v1200 = vpop.f32.mrb[0].mxu0
      %v1201 = vadd.f32 %v1126, %v1200
      %v1202 = vpop.f32.mrb[0].mxu0
      %1203 = vdwg.mxu0
      %v1204 = vmul.f32 %v1196, 0.5
      %v1205 = vmul.f32 %v1201, 0.5
      %v1206 = vmul.f32 %v1196, 0.70710677
      %v1207 = vmul.f32 %v1201, 0.70710677
      %vm1208 = vcmp.ge.f32.partialorder %v1206, 0.0
      %vm1209 = vcmp.ge.f32.partialorder %v1207, 0.0
      %v1210 = vsel %vm1208, 1.0, -1.0
      %v1211 = vsel %vm1209, 1.0, -1.0
      %v1212 = vand.u32 2147483647, %v1206
      %v1213 = vand.u32 2147483647, %v1207
      %v1214 = vmul.f32 %v1212, 0.3275911
      %v1215 = vmul.f32 %v1213, 0.3275911
      %v1216 = vadd.f32 %v1214, 1.0
      %v1217 = vadd.f32 %v1215, 1.0
      %v1218 = vrcp.pop %v1216
      %v1219 = vrcp.pop %v1217
      %v1220 = vmul.f32 %v1216, %v1218
      %v1221 = vmul.f32 %v1217, %v1219
      %v1222 = vsub.f32 2.0, %v1220
      %v1223 = vsub.f32 2.0, %v1221
      %v1224 = vmul.f32 %v1218, %v1222
      %v1225 = vmul.f32 %v1219, %v1223
      %v1226 = vmul.f32 %v1224, 1.0614054
      %v1227 = vmul.f32 %v1225, 1.0614054
      %v1228 = vadd.f32 %v1226, -1.4531521
      %v1229 = vadd.f32 %v1227, -1.4531521
      %v1230 = vmul.f32 %v1228, %v1224
      %v1231 = vmul.f32 %v1229, %v1225
      %v1232 = vadd.f32 %v1230, 1.4214138
      %v1233 = vadd.f32 %v1231, 1.4214138
      %v1234 = vmul.f32 %v1232, %v1224
      %v1235 = vmul.f32 %v1233, %v1225
      %v1236 = vadd.f32 %v1234, -0.28449672
      %v1237 = vadd.f32 %v1235, -0.28449672
      %v1238 = vmul.f32 %v1236, %v1224
      %v1239 = vmul.f32 %v1237, %v1225
      %v1240 = vadd.f32 %v1238, 0.2548296
      %v1241 = vadd.f32 %v1239, 0.2548296
      %v1242 = vmul.f32 %v1240, %v1224
      %v1243 = vmul.f32 %v1241, %v1225
      %v1244 = vsub.f32 0.0, %v1212
      %v1245 = vsub.f32 0.0, %v1213
      %v1246 = vmul.f32 %v1244, %v1212
      %v1247 = vmul.f32 %v1245, %v1213
      %v1248 = vmul.f32 %v1246, 1.442695
      %v1249 = vpow.pop %v1248
      %v1250 = vmul.f32 %v1247, 1.442695
      %v1251 = vpow.pop %v1250
      %v1252 = vmul.f32 %v1242, %v1249
      %v1253 = vmul.f32 %v1243, %v1251
      %v1254 = vsub.f32 1.0, %v1252
      %v1255 = vsub.f32 1.0, %v1253
      %v1256 = vmul.f32 %v1210, %v1254
      %v1257 = vmul.f32 %v1211, %v1255
      %v1258 = vadd.f32 %v1256, 1.0
      %v1259 = vadd.f32 %v1257, 1.0
      %v1260 = vmul.f32 %v1204, %v1258
      %v1261 = vmul.f32 %v1205, %v1259
      %v1264 = vrot.slane %v1260, 7
      %v1265 = vrot.slane %v1261, 7
      %v1266 = vsel %vm410, %v1264, %v1265
      %1267 = vrot.lane.b32.xlu0 %v1264, 8
      %v1268 = vpop.permute.xlu0 %1267
      %1269 = vrot.lane.b32.xlu0 %v1266, 8
      %v1270 = vpop.permute.xlu0 %1269
      %1271 = vrot.lane.b32.xlu0 %v1265, 8
      %v1272 = vpop.permute.xlu0 %1271
      %1276 = vst.msk [vmem:[#allocation2] sm:$0xfe] %vm423, %v1268
      %1277 = vst.msk [vmem:[#allocation2 + $0x8] sm:$0xfe] %vm425, %v1268
      %1278 = vst.msk [vmem:[#allocation2 + $0x10] sm:$0xff] %vm427, %v1270
      %1279 = vst.msk [vmem:[#allocation2 + $0x18] sm:$0xff] %vm398, %v1270
      %1280 = vst.msk [vmem:[#allocation2 + $0x20] sm:$0x1] %vm430, %v1272
      %1281 = vst.msk [vmem:[#allocation2 + $0x28] sm:$0x1] %vm432, %v1272
      %v1282 = vld [vmem:[#allocation2] sm:$0xff]
      %v1283 = vld [vmem:[#allocation2 + $0x10] sm:$0xff]
      %1284 = vst [vmem:[#allocation5] sm:$0xff] %v1282
      %1285 = vst [vmem:[#allocation5 + $0x48] sm:$0xff] %v1283
      %v1286 = vld [vmem:[#allocation2] sm:$0xff]
      %v1287 = vld [vmem:[#allocation2 + $0x8] sm:$0xff]
      %v1288 = vld [vmem:[#allocation2 + $0x10] sm:$0xff]
      %v1289 = vld [vmem:[#allocation2 + $0x18] sm:$0xff]
      %1294 = vrot.lane.b32.xlu0 %v1286, 120
      %v1295 = vpop.permute.xlu0 %1294
      %1296 = vrot.lane.b32.xlu0 %v1287, 120
      %v1297 = vpop.permute.xlu0 %1296
      %1298 = vrot.lane.b32.xlu0 %v1288, 120
      %v1299 = vpop.permute.xlu0 %1298
      %1300 = vrot.lane.b32.xlu0 %v1289, 120
      %v1301 = vpop.permute.xlu0 %1300
      %v1302 = vsel %vm454, %v1295, %v1297
      %v1303 = vsel %vm454, %v1299, %v1301
      %1306 = vst [vmem:[#allocation5 + $0x8] sm:$0xff] %v1302
      %1307 = vst [vmem:[#allocation5 + $0x50] sm:$0xff] %v1303
      %v1308 = vld [vmem:[#allocation2] sm:$0xff]
      %v1309 = vld [vmem:[#allocation2 + $0x8] sm:$0xff]
      %v1310 = vld [vmem:[#allocation2 + $0x10] sm:$0xff]
      %v1311 = vld [vmem:[#allocation2 + $0x18] sm:$0xff]
      %1316 = vrot.lane.b32.xlu0 %v1308, 112
      %v1317 = vpop.permute.xlu0 %1316
      %1318 = vrot.lane.b32.xlu0 %v1309, 112
      %v1319 = vpop.permute.xlu0 %1318
      %1320 = vrot.lane.b32.xlu0 %v1310, 112
      %v1321 = vpop.permute.xlu0 %1320
      %1322 = vrot.lane.b32.xlu0 %v1311, 112
      %v1323 = vpop.permute.xlu0 %1322
      %v1324 = vsel %vm477, %v1317, %v1319
      %v1325 = vsel %vm477, %v1321, %v1323
      %1328 = vst [vmem:[#allocation5 + $0x10] sm:$0xff] %v1324
      %1329 = vst [vmem:[#allocation5 + $0x58] sm:$0xff] %v1325
      %v1330 = vld [vmem:[#allocation2] sm:$0xfe]
      %v1331 = vld [vmem:[#allocation2 + $0x10] sm:$0xff]
      %v1332 = vld [vmem:[#allocation2 + $0x20] sm:$0x1]
      %v1336 = vrot.slane %v1330, 1
      %v1337 = vrot.slane %v1331, 1
      %v1338 = vsel %vm490, %v1336, %v1337
      %v1339 = vrot.slane %v1332, 1
      %v1340 = vsel %vm490, %v1337, %v1339
      %1343 = vst [vmem:[#allocation5 + $0x18] sm:$0xff] %v1338
      %1344 = vst [vmem:[#allocation5 + $0x60] sm:$0xff] %v1340
      %v1345 = vld [vmem:[#allocation2] sm:$0xfe]
      %v1346 = vld [vmem:[#allocation2 + $0x8] sm:$0xfe]
      %v1347 = vld [vmem:[#allocation2 + $0x10] sm:$0xff]
      %v1348 = vld [vmem:[#allocation2 + $0x18] sm:$0xff]
      %v1349 = vld [vmem:[#allocation2 + $0x20] sm:$0x1]
      %v1350 = vld [vmem:[#allocation2 + $0x28] sm:$0x1]
      %v1357 = vrot.slane %v1345, 1
      %v1358 = vrot.slane %v1347, 1
      %v1359 = vsel %vm490, %v1357, %v1358
      %v1360 = vrot.slane %v1346, 1
      %v1361 = vrot.slane %v1348, 1
      %v1362 = vsel %vm490, %v1360, %v1361
      %v1363 = vrot.slane %v1349, 1
      %v1364 = vsel %vm490, %v1358, %v1363
      %v1365 = vrot.slane %v1350, 1
      %v1366 = vsel %vm490, %v1361, %v1365
      %1367 = vrot.lane.b32.xlu0 %v1359, 120
      %v1368 = vpop.permute.xlu0 %1367
      %1369 = vrot.lane.b32.xlu0 %v1362, 120
      %v1370 = vpop.permute.xlu0 %1369
      %1371 = vrot.lane.b32.xlu0 %v1364, 120
      %v1372 = vpop.permute.xlu0 %1371
      %1373 = vrot.lane.b32.xlu0 %v1366, 120
      %v1374 = vpop.permute.xlu0 %1373
      %v1375 = vsel %vm454, %v1368, %v1370
      %v1376 = vsel %vm454, %v1372, %v1374
      %1379 = vst [vmem:[#allocation5 + $0x20] sm:$0xff] %v1375
      %1380 = vst [vmem:[#allocation5 + $0x68] sm:$0xff] %v1376
      %v1381 = vld [vmem:[#allocation2] sm:$0xfe]
      %v1382 = vld [vmem:[#allocation2 + $0x8] sm:$0xfe]
      %v1383 = vld [vmem:[#allocation2 + $0x10] sm:$0xff]
      %v1384 = vld [vmem:[#allocation2 + $0x18] sm:$0xff]
      %v1385 = vld [vmem:[#allocation2 + $0x20] sm:$0x1]
      %v1386 = vld [vmem:[#allocation2 + $0x28] sm:$0x1]
      %v1393 = vrot.slane %v1381, 1
      %v1394 = vrot.slane %v1383, 1
      %v1395 = vsel %vm490, %v1393, %v1394
      %v1396 = vrot.slane %v1382, 1
      %v1397 = vrot.slane %v1384, 1
      %v1398 = vsel %vm490, %v1396, %v1397
      %v1399 = vrot.slane %v1385, 1
      %v1400 = vsel %vm490, %v1394, %v1399
      %v1401 = vrot.slane %v1386, 1
      %v1402 = vsel %vm490, %v1397, %v1401
      %1403 = vrot.lane.b32.xlu0 %v1395, 112
      %v1404 = vpop.permute.xlu0 %1403
      %1405 = vrot.lane.b32.xlu0 %v1398, 112
      %v1406 = vpop.permute.xlu0 %1405
      %1407 = vrot.lane.b32.xlu0 %v1400, 112
      %v1408 = vpop.permute.xlu0 %1407
      %1409 = vrot.lane.b32.xlu0 %v1402, 112
      %v1410 = vpop.permute.xlu0 %1409
      %v1411 = vsel %vm477, %v1404, %v1406
      %v1412 = vsel %vm477, %v1408, %v1410
      %1415 = vst [vmem:[#allocation5 + $0x28] sm:$0xff] %v1411
      %1416 = vst [vmem:[#allocation5 + $0x70] sm:$0xff] %v1412
      %v1417 = vld [vmem:[#allocation2] sm:$0xfc]
      %v1418 = vld [vmem:[#allocation2 + $0x10] sm:$0xff]
      %v1419 = vld [vmem:[#allocation2 + $0x20] sm:$0x3]
      %v1423 = vrot.slane %v1417, 2
      %v1424 = vrot.slane %v1418, 2
      %v1425 = vsel %vm578, %v1423, %v1424
      %v1426 = vrot.slane %v1419, 2
      %v1427 = vsel %vm578, %v1424, %v1426
      %1430 = vst [vmem:[#allocation5 + $0x30] sm:$0xff] %v1425
      %1431 = vst [vmem:[#allocation5 + $0x78] sm:$0xff] %v1427
      %v1432 = vld [vmem:[#allocation2] sm:$0xfc]
      %v1433 = vld [vmem:[#allocation2 + $0x8] sm:$0xfc]
      %v1434 = vld [vmem:[#allocation2 + $0x10] sm:$0xff]
      %v1435 = vld [vmem:[#allocation2 + $0x18] sm:$0xff]
      %v1436 = vld [vmem:[#allocation2 + $0x20] sm:$0x3]
      %v1437 = vld [vmem:[#allocation2 + $0x28] sm:$0x3]
      %v1444 = vrot.slane %v1432, 2
      %v1445 = vrot.slane %v1434, 2
      %v1446 = vsel %vm578, %v1444, %v1445
      %v1447 = vrot.slane %v1433, 2
      %v1448 = vrot.slane %v1435, 2
      %v1449 = vsel %vm578, %v1447, %v1448
      %v1450 = vrot.slane %v1436, 2
      %v1451 = vsel %vm578, %v1445, %v1450
      %v1452 = vrot.slane %v1437, 2
      %v1453 = vsel %vm578, %v1448, %v1452
      %1454 = vrot.lane.b32.xlu0 %v1446, 120
      %v1455 = vpop.permute.xlu0 %1454
      %1456 = vrot.lane.b32.xlu0 %v1449, 120
      %v1457 = vpop.permute.xlu0 %1456
      %1458 = vrot.lane.b32.xlu0 %v1451, 120
      %v1459 = vpop.permute.xlu0 %1458
      %1460 = vrot.lane.b32.xlu0 %v1453, 120
      %v1461 = vpop.permute.xlu0 %1460
      %v1462 = vsel %vm454, %v1455, %v1457
      %v1463 = vsel %vm454, %v1459, %v1461
      %1466 = vst [vmem:[#allocation5 + $0x38] sm:$0xff] %v1462
      %1467 = vst [vmem:[#allocation5 + $0x80] sm:$0xff] %v1463
      %v1468 = vld [vmem:[#allocation2] sm:$0xfc]
      %v1469 = vld [vmem:[#allocation2 + $0x8] sm:$0xfc]
      %v1470 = vld [vmem:[#allocation2 + $0x10] sm:$0xff]
      %v1471 = vld [vmem:[#allocation2 + $0x18] sm:$0xff]
      %v1472 = vld [vmem:[#allocation2 + $0x20] sm:$0x3]
      %v1473 = vld [vmem:[#allocation2 + $0x28] sm:$0x3]
      %v1480 = vrot.slane %v1468, 2
      %v1481 = vrot.slane %v1470, 2
      %v1482 = vsel %vm578, %v1480, %v1481
      %v1483 = vrot.slane %v1469, 2
      %v1484 = vrot.slane %v1471, 2
      %v1485 = vsel %vm578, %v1483, %v1484
      %v1486 = vrot.slane %v1472, 2
      %v1487 = vsel %vm578, %v1481, %v1486
      %v1488 = vrot.slane %v1473, 2
      %v1489 = vsel %vm578, %v1484, %v1488
      %1490 = vrot.lane.b32.xlu0 %v1482, 112
      %v1491 = vpop.permute.xlu0 %1490
      %1492 = vrot.lane.b32.xlu0 %v1485, 112
      %v1493 = vpop.permute.xlu0 %1492
      %1494 = vrot.lane.b32.xlu0 %v1487, 112
      %v1495 = vpop.permute.xlu0 %1494
      %1496 = vrot.lane.b32.xlu0 %v1489, 112
      %v1497 = vpop.permute.xlu0 %1496
      %v1498 = vsel %vm477, %v1491, %v1493
      %v1499 = vsel %vm477, %v1495, %v1497
      %1502 = vst [vmem:[#allocation5 + $0x40] sm:$0xff] %v1498
      %1503 = vst [vmem:[#allocation5 + $0x88] sm:$0xff] %v1499
      %v1504 = vld [vmem:[#allocation5] sm:$0xff]
      %v1505 = vld [vmem:[#allocation5 + $0x8] sm:$0xff]
      %v1506 = vld [vmem:[#allocation5 + $0x10] sm:$0xff]
      %v1507 = vld [vmem:[#allocation5 + $0x18] sm:$0xff]
      %v1508 = vld [vmem:[#allocation5 + $0x20] sm:$0xff]
      %v1509 = vld [vmem:[#allocation5 + $0x28] sm:$0xff]
      %v1510 = vld [vmem:[#allocation5 + $0x30] sm:$0xff]
      %v1511 = vld [vmem:[#allocation5 + $0x38] sm:$0xff]
      %v1512 = vld [vmem:[#allocation5 + $0x40] sm:$0xff]
      %v1513 = vld [vmem:[#allocation5 + $0x48] sm:$0xff]
      %v1514 = vld [vmem:[#allocation5 + $0x50] sm:$0xff]
      %v1515 = vld [vmem:[#allocation5 + $0x58] sm:$0xff]
      %v1516 = vld [vmem:[#allocation5 + $0x60] sm:$0xff]
      %v1517 = vld [vmem:[#allocation5 + $0x68] sm:$0xff]
      %v1518 = vld [vmem:[#allocation5 + $0x70] sm:$0xff]
      %v1519 = vld [vmem:[#allocation5 + $0x78] sm:$0xff]
      %v1520 = vld [vmem:[#allocation5 + $0x80] sm:$0xff]
      %v1521 = vld [vmem:[#allocation5 + $0x88] sm:$0xff]
      %v1522 = vld [vmem:[%s3] sm:$0xff]
      %v1523 = vld [vmem:[%s3 + $0x8] sm:$0xff]
      %v1524 = vld [vmem:[%s3 + $0x10] sm:$0xff]
      %v1525 = vld [vmem:[%s3 + $0x18] sm:$0xff]
      %v1526 = vld [vmem:[%s3 + $0x20] sm:$0xff]
      %v1527 = vld [vmem:[%s3 + $0x28] sm:$0xff]
      %v1528 = vld [vmem:[%s3 + $0x30] sm:$0xff]
      %v1529 = vld [vmem:[%s3 + $0x38] sm:$0xff]
      %v1530 = vld [vmem:[%s3 + $0x40] sm:$0xff]
      %v1531 = vld [vmem:[%s3 + $0x48] sm:$0xff]
      %v1532 = vld [vmem:[%s3 + $0x50] sm:$0xff]
      %v1533 = vld [vmem:[%s3 + $0x58] sm:$0xff]
      %v1534 = vld [vmem:[%s3 + $0x60] sm:$0xff]
      %v1535 = vld [vmem:[%s3 + $0x68] sm:$0xff]
      %v1536 = vld [vmem:[%s3 + $0x70] sm:$0xff]
      %v1537 = vld [vmem:[%s3 + $0x78] sm:$0xff]
      %v1538 = vld [vmem:[%s3 + $0x80] sm:$0xff]
      %v1539 = vld [vmem:[%s3 + $0x88] sm:$0xff]
      %v1540 = vld [vmem:[%s3 + $0x90] sm:$0xff]
      %v1541 = vld [vmem:[%s3 + $0x98] sm:$0xff]
      %v1542 = vld [vmem:[%s3 + $0xa0] sm:$0xff]
      %v1543 = vld [vmem:[%s3 + $0xa8] sm:$0xff]
      %v1544 = vld [vmem:[%s3 + $0xb0] sm:$0xff]
      %v1545 = vld [vmem:[%s3 + $0xb8] sm:$0xff]
      %v1546 = vld [vmem:[%s3 + $0xc0] sm:$0xff]
      %v1547 = vld [vmem:[%s3 + $0xc8] sm:$0xff]
      %v1548 = vld [vmem:[%s3 + $0xd0] sm:$0xff]
      %v1549 = vld [vmem:[%s3 + $0xd8] sm:$0xff]
      %v1550 = vld [vmem:[%s3 + $0xe0] sm:$0xff]
      %v1551 = vld [vmem:[%s3 + $0xe8] sm:$0xff]
      %v1552 = vld [vmem:[%s3 + $0xf0] sm:$0xff]
      %v1553 = vld [vmem:[%s3 + $0xf8] sm:$0xff]
      %v1554 = vld [vmem:[%s3 + $0x100] sm:$0xff]
      %v1555 = vld [vmem:[%s3 + $0x108] sm:$0xff]
      %v1556 = vld [vmem:[%s3 + $0x110] sm:$0xff]
      %v1557 = vld [vmem:[%s3 + $0x118] sm:$0xff]
      %v1558 = vld [vmem:[%s3 + $0x120] sm:$0xff]
      %v1559 = vld [vmem:[%s3 + $0x128] sm:$0xff]
      %v1560 = vld [vmem:[%s3 + $0x130] sm:$0xff]
      %v1561 = vld [vmem:[%s3 + $0x138] sm:$0xff]
      %v1562 = vld [vmem:[%s3 + $0x140] sm:$0xff]
      %v1563 = vld [vmem:[%s3 + $0x148] sm:$0xff]
      %v1564 = vld [vmem:[%s3 + $0x150] sm:$0xff]
      %v1565 = vld [vmem:[%s3 + $0x158] sm:$0xff]
      %v1566 = vld [vmem:[%s3 + $0x160] sm:$0xff]
      %v1567 = vld [vmem:[%s3 + $0x168] sm:$0xff]
      %v1568 = vld [vmem:[%s3 + $0x170] sm:$0xff]
      %v1569 = vld [vmem:[%s3 + $0x178] sm:$0xff]
      %v1570 = vld [vmem:[%s3 + $0x180] sm:$0xff]
      %v1571 = vld [vmem:[%s3 + $0x188] sm:$0xff]
      %v1572 = vld [vmem:[%s3 + $0x190] sm:$0xff]
      %v1573 = vld [vmem:[%s3 + $0x198] sm:$0xff]
      %v1574 = vld [vmem:[%s3 + $0x1a0] sm:$0xff]
      %v1575 = vld [vmem:[%s3 + $0x1a8] sm:$0xff]
      %v1576 = vld [vmem:[%s3 + $0x1b0] sm:$0xff]
      %v1577 = vld [vmem:[%s3 + $0x1b8] sm:$0xff]
      %v1578 = vld [vmem:[%s3 + $0x1c0] sm:$0xff]
      %v1579 = vld [vmem:[%s3 + $0x1c8] sm:$0xff]
      %v1580 = vld [vmem:[%s3 + $0x1d0] sm:$0xff]
      %v1581 = vld [vmem:[%s3 + $0x1d8] sm:$0xff]
      %v1582 = vld [vmem:[%s3 + $0x1e0] sm:$0xff]
      %v1583 = vld [vmem:[%s3 + $0x1e8] sm:$0xff]
      %v1584 = vld [vmem:[%s3 + $0x1f0] sm:$0xff]
      %v1585 = vld [vmem:[%s3 + $0x1f8] sm:$0xff]
      %v1586 = vld [vmem:[%s3 + $0x200] sm:$0xff]
      %v1587 = vld [vmem:[%s3 + $0x208] sm:$0xff]
      %v1588 = vld [vmem:[%s3 + $0x210] sm:$0xff]
      %v1589 = vld [vmem:[%s3 + $0x218] sm:$0xff]
      %v1590 = vld [vmem:[%s3 + $0x220] sm:$0xff]
      %v1591 = vld [vmem:[%s3 + $0x228] sm:$0xff]
      %v1592 = vld [vmem:[%s3 + $0x230] sm:$0xff]
      %v1593 = vld [vmem:[%s3 + $0x238] sm:$0xff]
      %v1594 = vld [vmem:[%s3 + $0x240] sm:$0xff]
      %v1595 = vld [vmem:[%s3 + $0x248] sm:$0xff]
      %v1596 = vld [vmem:[%s3 + $0x250] sm:$0xff]
      %v1597 = vld [vmem:[%s3 + $0x258] sm:$0xff]
      %v1598 = vld [vmem:[%s3 + $0x260] sm:$0xff]
      %v1599 = vld [vmem:[%s3 + $0x268] sm:$0xff]
      %v1600 = vld [vmem:[%s3 + $0x270] sm:$0xff]
      %v1601 = vld [vmem:[%s3 + $0x278] sm:$0xff]
      %v1602 = vld [vmem:[%s3 + $0x280] sm:$0xff]
      %v1603 = vld [vmem:[%s3 + $0x288] sm:$0xff]
      %v1604 = vld [vmem:[%s3 + $0x290] sm:$0xff]
      %v1605 = vld [vmem:[%s3 + $0x298] sm:$0xff]
      %v1606 = vld [vmem:[%s3 + $0x2a0] sm:$0xff]
      %v1607 = vld [vmem:[%s3 + $0x2a8] sm:$0xff]
      %v1608 = vld [vmem:[%s3 + $0x2b0] sm:$0xff]
      %v1609 = vld [vmem:[%s3 + $0x2b8] sm:$0xff]
      %v1610 = vld [vmem:[%s3 + $0x2c0] sm:$0xff]
      %v1611 = vld [vmem:[%s3 + $0x2c8] sm:$0xff]
      %v1612 = vld [vmem:[%s3 + $0x2d0] sm:$0xff]
      %v1613 = vld [vmem:[%s3 + $0x2d8] sm:$0xff]
      %v1614 = vld [vmem:[%s3 + $0x2e0] sm:$0xff]
      %v1615 = vld [vmem:[%s3 + $0x2e8] sm:$0xff]
      %v1616 = vld [vmem:[%s3 + $0x2f0] sm:$0xff]
      %v1617 = vld [vmem:[%s3 + $0x2f8] sm:$0xff]
      %v1618 = vld [vmem:[%s3 + $0x300] sm:$0xff]
      %v1619 = vld [vmem:[%s3 + $0x308] sm:$0xff]
      %v1620 = vld [vmem:[%s3 + $0x310] sm:$0xff]
      %v1621 = vld [vmem:[%s3 + $0x318] sm:$0xff]
      %v1622 = vld [vmem:[%s3 + $0x320] sm:$0xff]
      %v1623 = vld [vmem:[%s3 + $0x328] sm:$0xff]
      %v1624 = vld [vmem:[%s3 + $0x330] sm:$0xff]
      %v1625 = vld [vmem:[%s3 + $0x338] sm:$0xff]
      %v1626 = vld [vmem:[%s3 + $0x340] sm:$0xff]
      %v1627 = vld [vmem:[%s3 + $0x348] sm:$0xff]
      %v1628 = vld [vmem:[%s3 + $0x350] sm:$0xff]
      %v1629 = vld [vmem:[%s3 + $0x358] sm:$0xff]
      %v1630 = vld [vmem:[%s3 + $0x360] sm:$0xff]
      %v1631 = vld [vmem:[%s3 + $0x368] sm:$0xff]
      %v1632 = vld [vmem:[%s3 + $0x370] sm:$0xff]
      %v1633 = vld [vmem:[%s3 + $0x378] sm:$0xff]
      %v1634 = vld [vmem:[%s3 + $0x380] sm:$0xff]
      %v1635 = vld [vmem:[%s3 + $0x388] sm:$0xff]
      %v1636 = vld [vmem:[%s3 + $0x390] sm:$0xff]
      %v1637 = vld [vmem:[%s3 + $0x398] sm:$0xff]
      %v1638 = vld [vmem:[%s3 + $0x3a0] sm:$0xff]
      %v1639 = vld [vmem:[%s3 + $0x3a8] sm:$0xff]
      %v1640 = vld [vmem:[%s3 + $0x3b0] sm:$0xff]
      %v1641 = vld [vmem:[%s3 + $0x3b8] sm:$0xff]
      %v1642 = vld [vmem:[%s3 + $0x3c0] sm:$0xff]
      %v1643 = vld [vmem:[%s3 + $0x3c8] sm:$0xff]
      %v1644 = vld [vmem:[%s3 + $0x3d0] sm:$0xff]
      %v1645 = vld [vmem:[%s3 + $0x3d8] sm:$0xff]
      %v1646 = vld [vmem:[%s3 + $0x3e0] sm:$0xff]
      %v1647 = vld [vmem:[%s3 + $0x3e8] sm:$0xff]
      %v1648 = vld [vmem:[%s3 + $0x3f0] sm:$0xff]
      %v1649 = vld [vmem:[%s3 + $0x3f8] sm:$0xff]
      %v1650 = vld [vmem:[%s3 + $0x400] sm:$0xff]
      %v1651 = vld [vmem:[%s3 + $0x408] sm:$0xff]
      %v1652 = vld [vmem:[%s3 + $0x410] sm:$0xff]
      %v1653 = vld [vmem:[%s3 + $0x418] sm:$0xff]
      %v1654 = vld [vmem:[%s3 + $0x420] sm:$0xff]
      %v1655 = vld [vmem:[%s3 + $0x428] sm:$0xff]
      %v1656 = vld [vmem:[%s3 + $0x430] sm:$0xff]
      %v1657 = vld [vmem:[%s3 + $0x438] sm:$0xff]
      %v1658 = vld [vmem:[%s3 + $0x440] sm:$0xff]
      %v1659 = vld [vmem:[%s3 + $0x448] sm:$0xff]
      %v1660 = vld [vmem:[%s3 + $0x450] sm:$0xff]
      %v1661 = vld [vmem:[%s3 + $0x458] sm:$0xff]
      %v1662 = vld [vmem:[%s3 + $0x460] sm:$0xff]
      %v1663 = vld [vmem:[%s3 + $0x468] sm:$0xff]
      %v1664 = vld [vmem:[%s3 + $0x470] sm:$0xff]
      %v1665 = vld [vmem:[%s3 + $0x478] sm:$0xff]
      %v1666 = vld [vmem:[%s4] sm:$0x1]
      %v1668 = vlaneseq
      %v1669 = vshrl.u32 %v1668, 7
      %v1670 = vsub.s32 0, %v1669
      %v1671 = vrot.slane %v1666, %v1670
      %1673 = vmatprep.subr.mxu0 0.0
      %1674 = vmatpush1.msra.mxu0 %v1522
      %1675 = vmatprep.subr.mxu0 0.0
      %1676 = vmatpush1.msra.mxu0 %v1523
      %1677 = vmatprep.subr.mxu0 0.0
      %1678 = vmatpush1.msra.mxu0 %v1524
      %1679 = vmatprep.subr.mxu0 0.0
      %1680 = vmatpush1.msra.mxu0 %v1525
      %1681 = vmatprep.subr.mxu0 0.0
      %1682 = vmatpush1.msra.mxu0 %v1526
      %1683 = vmatprep.subr.mxu0 0.0
      %1684 = vmatpush1.msra.mxu0 %v1527
      %1685 = vmatprep.subr.mxu0 0.0
      %1686 = vmatpush1.msra.mxu0 %v1528
      %1687 = vmatprep.subr.mxu0 0.0
      %1688 = vmatpush1.msra.mxu0 %v1529
      %1689 = vmatprep.subr.mxu0 0.0
      %1690 = vmatpush1.msra.mxu0 %v1530
      %1691 = vmatprep.subr.mxu0 0.0
      %1692 = vmatpush1.msra.mxu0 %v1531
      %1693 = vmatprep.subr.mxu0 0.0
      %1694 = vmatpush1.msra.mxu0 %v1532
      %1695 = vmatprep.subr.mxu0 0.0
      %1696 = vmatpush1.msra.mxu0 %v1533
      %1697 = vmatprep.subr.mxu0 0.0
      %1698 = vmatpush1.msra.mxu0 %v1534
      %1699 = vmatprep.subr.mxu0 0.0
      %1700 = vmatpush1.msra.mxu0 %v1535
      %1701 = vmatprep.subr.mxu0 0.0
      %1702 = vmatpush1.msra.mxu0 %v1536
      %1703 = vmatprep.subr.mxu0 0.0
      %1704 = vmatpush1.msra.mxu0 %v1537
      %1705 = vmatprep.subr.mxu0 0.0
      %1706 = vmatpush1.msra.mxu0 %v1538
      %1707 = vmatprep.subr.mxu0 0.0
      %1708 = vmatpush1.msra.mxu0 %v1539
      %1709 = vmatprep.subr.mxu0 0.0
      %1710 = vmatpush1.msra.mxu0 %v1540
      %1711 = vmatprep.subr.mxu0 0.0
      %1712 = vmatpush1.msra.mxu0 %v1541
      %1713 = vmatprep.subr.mxu0 0.0
      %1714 = vmatpush1.msra.mxu0 %v1542
      %1715 = vmatprep.subr.mxu0 0.0
      %1716 = vmatpush1.msra.mxu0 %v1543
      %1717 = vmatprep.subr.mxu0 0.0
      %1718 = vmatpush1.msra.mxu0 %v1544
      %1719 = vmatprep.subr.mxu0 0.0
      %1720 = vmatpush1.msra.mxu0 %v1545
      %1721 = vmatprep.subr.mxu0 0.0
      %1722 = vmatpush1.msra.mxu0 %v1546
      %1723 = vmatprep.subr.mxu0 0.0
      %1724 = vmatpush1.msra.mxu0 %v1547
      %1725 = vmatprep.subr.mxu0 0.0
      %1726 = vmatpush1.msra.mxu0 %v1548
      %1727 = vmatprep.subr.mxu0 0.0
      %1728 = vmatpush1.msra.mxu0 %v1549
      %1729 = vmatprep.subr.mxu0 0.0
      %1730 = vmatpush1.msra.mxu0 %v1550
      %1731 = vmatprep.subr.mxu0 0.0
      %1732 = vmatpush1.msra.mxu0 %v1551
      %1733 = vmatprep.subr.mxu0 0.0
      %1734 = vmatpush1.msra.mxu0 %v1552
      %1735 = vmatprep.subr.mxu0 0.0
      %1736 = vmatpush1.msra.mxu0 %v1553
      %1737 = vmatprep.mubr.f32.mxu0 %v1505
      %1738 = vmatmul.mubr.f32.gmra.mrb[0].mxu0 %v1504
      %v1739 = vpop.f32.mrb[0].mxu0
      %v1740 = vadd.f32 %v1671, %v1739
      %v1741 = vpop.f32.mrb[0].mxu0
      %1742 = vmatprep.mubr.f32.mxu0 %v1514
      %1743 = vmatmul.mubr.f32.gmra.mrb[0].mxu0 %v1513
      %v1744 = vpop.f32.mrb[0].mxu0
      %v1745 = vadd.f32 %v1671, %v1744
      %v1746 = vpop.f32.mrb[0].mxu0
      %1747 = vdwg.mxu0
      %1748 = vmatprep.subr.mxu0 0.0
      %1749 = vmatpush1.msra.mxu0 %v1554
      %1750 = vmatprep.subr.mxu0 0.0
      %1751 = vmatpush1.msra.mxu0 %v1555
      %1752 = vmatprep.subr.mxu0 0.0
      %1753 = vmatpush1.msra.mxu0 %v1556
      %1754 = vmatprep.subr.mxu0 0.0
      %1755 = vmatpush1.msra.mxu0 %v1557
      %1756 = vmatprep.subr.mxu0 0.0
      %1757 = vmatpush1.msra.mxu0 %v1558
      %1758 = vmatprep.subr.mxu0 0.0
      %1759 = vmatpush1.msra.mxu0 %v1559
      %1760 = vmatprep.subr.mxu0 0.0
      %1761 = vmatpush1.msra.mxu0 %v1560
      %1762 = vmatprep.subr.mxu0 0.0
      %1763 = vmatpush1.msra.mxu0 %v1561
      %1764 = vmatprep.subr.mxu0 0.0
      %1765 = vmatpush1.msra.mxu0 %v1562
      %1766 = vmatprep.subr.mxu0 0.0
      %1767 = vmatpush1.msra.mxu0 %v1563
      %1768 = vmatprep.subr.mxu0 0.0
      %1769 = vmatpush1.msra.mxu0 %v1564
      %1770 = vmatprep.subr.mxu0 0.0
      %1771 = vmatpush1.msra.mxu0 %v1565
      %1772 = vmatprep.subr.mxu0 0.0
      %1773 = vmatpush1.msra.mxu0 %v1566
      %1774 = vmatprep.subr.mxu0 0.0
      %1775 = vmatpush1.msra.mxu0 %v1567
      %1776 = vmatprep.subr.mxu0 0.0
      %1777 = vmatpush1.msra.mxu0 %v1568
      %1778 = vmatprep.subr.mxu0 0.0
      %1779 = vmatpush1.msra.mxu0 %v1569
      %1780 = vmatprep.subr.mxu0 0.0
      %1781 = vmatpush1.msra.mxu0 %v1570
      %1782 = vmatprep.subr.mxu0 0.0
      %1783 = vmatpush1.msra.mxu0 %v1571
      %1784 = vmatprep.subr.mxu0 0.0
      %1785 = vmatpush1.msra.mxu0 %v1572
      %1786 = vmatprep.subr.mxu0 0.0
      %1787 = vmatpush1.msra.mxu0 %v1573
      %1788 = vmatprep.subr.mxu0 0.0
      %1789 = vmatpush1.msra.mxu0 %v1574
      %1790 = vmatprep.subr.mxu0 0.0
      %1791 = vmatpush1.msra.mxu0 %v1575
      %1792 = vmatprep.subr.mxu0 0.0
      %1793 = vmatpush1.msra.mxu0 %v1576
      %1794 = vmatprep.subr.mxu0 0.0
      %1795 = vmatpush1.msra.mxu0 %v1577
      %1796 = vmatprep.subr.mxu0 0.0
      %1797 = vmatpush1.msra.mxu0 %v1578
      %1798 = vmatprep.subr.mxu0 0.0
      %1799 = vmatpush1.msra.mxu0 %v1579
      %1800 = vmatprep.subr.mxu0 0.0
      %1801 = vmatpush1.msra.mxu0 %v1580
      %1802 = vmatprep.subr.mxu0 0.0
      %1803 = vmatpush1.msra.mxu0 %v1581
      %1804 = vmatprep.subr.mxu0 0.0
      %1805 = vmatpush1.msra.mxu0 %v1582
      %1806 = vmatprep.subr.mxu0 0.0
      %1807 = vmatpush1.msra.mxu0 %v1583
      %1808 = vmatprep.subr.mxu0 0.0
      %1809 = vmatpush1.msra.mxu0 %v1584
      %1810 = vmatprep.subr.mxu0 0.0
      %1811 = vmatpush1.msra.mxu0 %v1585
      %1812 = vmatprep.mubr.f32.mxu0 %v1507
      %1813 = vmatmul.mubr.f32.gmra.mrb[0].mxu0 %v1506
      %v1814 = vpop.f32.mrb[0].mxu0
      %v1815 = vadd.f32 %v1740, %v1814
      %v1816 = vpop.f32.mrb[0].mxu0
      %1817 = vmatprep.mubr.f32.mxu0 %v1516
      %1818 = vmatmul.mubr.f32.gmra.mrb[0].mxu0 %v1515
      %v1819 = vpop.f32.mrb[0].mxu0
      %v1820 = vadd.f32 %v1745, %v1819
      %v1821 = vpop.f32.mrb[0].mxu0
      %1822 = vdwg.mxu0
      %1823 = vmatprep.subr.mxu0 0.0
      %1824 = vmatpush1.msra.mxu0 %v1586
      %1825 = vmatprep.subr.mxu0 0.0
      %1826 = vmatpush1.msra.mxu0 %v1587
      %1827 = vmatprep.subr.mxu0 0.0
      %1828 = vmatpush1.msra.mxu0 %v1588
      %1829 = vmatprep.subr.mxu0 0.0
      %1830 = vmatpush1.msra.mxu0 %v1589
      %1831 = vmatprep.subr.mxu0 0.0
      %1832 = vmatpush1.msra.mxu0 %v1590
      %1833 = vmatprep.subr.mxu0 0.0
      %1834 = vmatpush1.msra.mxu0 %v1591
      %1835 = vmatprep.subr.mxu0 0.0
      %1836 = vmatpush1.msra.mxu0 %v1592
      %1837 = vmatprep.subr.mxu0 0.0
      %1838 = vmatpush1.msra.mxu0 %v1593
      %1839 = vmatprep.subr.mxu0 0.0
      %1840 = vmatpush1.msra.mxu0 %v1594
      %1841 = vmatprep.subr.mxu0 0.0
      %1842 = vmatpush1.msra.mxu0 %v1595
      %1843 = vmatprep.subr.mxu0 0.0
      %1844 = vmatpush1.msra.mxu0 %v1596
      %1845 = vmatprep.subr.mxu0 0.0
      %1846 = vmatpush1.msra.mxu0 %v1597
      %1847 = vmatprep.subr.mxu0 0.0
      %1848 = vmatpush1.msra.mxu0 %v1598
      %1849 = vmatprep.subr.mxu0 0.0
      %1850 = vmatpush1.msra.mxu0 %v1599
      %1851 = vmatprep.subr.mxu0 0.0
      %1852 = vmatpush1.msra.mxu0 %v1600
      %1853 = vmatprep.subr.mxu0 0.0
      %1854 = vmatpush1.msra.mxu0 %v1601
      %1855 = vmatprep.subr.mxu0 0.0
      %1856 = vmatpush1.msra.mxu0 %v1602
      %1857 = vmatprep.subr.mxu0 0.0
      %1858 = vmatpush1.msra.mxu0 %v1603
      %1859 = vmatprep.subr.mxu0 0.0
      %1860 = vmatpush1.msra.mxu0 %v1604
      %1861 = vmatprep.subr.mxu0 0.0
      %1862 = vmatpush1.msra.mxu0 %v1605
      %1863 = vmatprep.subr.mxu0 0.0
      %1864 = vmatpush1.msra.mxu0 %v1606
      %1865 = vmatprep.subr.mxu0 0.0
      %1866 = vmatpush1.msra.mxu0 %v1607
      %1867 = vmatprep.subr.mxu0 0.0
      %1868 = vmatpush1.msra.mxu0 %v1608
      %1869 = vmatprep.subr.mxu0 0.0
      %1870 = vmatpush1.msra.mxu0 %v1609
      %1871 = vmatprep.subr.mxu0 0.0
      %1872 = vmatpush1.msra.mxu0 %v1610
      %1873 = vmatprep.subr.mxu0 0.0
      %1874 = vmatpush1.msra.mxu0 %v1611
      %1875 = vmatprep.subr.mxu0 0.0
      %1876 = vmatpush1.msra.mxu0 %v1612
      %1877 = vmatprep.subr.mxu0 0.0
      %1878 = vmatpush1.msra.mxu0 %v1613
      %1879 = vmatprep.subr.mxu0 0.0
      %1880 = vmatpush1.msra.mxu0 %v1614
      %1881 = vmatprep.subr.mxu0 0.0
      %1882 = vmatpush1.msra.mxu0 %v1615
      %1883 = vmatprep.subr.mxu0 0.0
      %1884 = vmatpush1.msra.mxu0 %v1616
      %1885 = vmatprep.subr.mxu0 0.0
      %1886 = vmatpush1.msra.mxu0 %v1617
      %1887 = vmatprep.mubr.f32.mxu0 %v1509
      %1888 = vmatmul.mubr.f32.gmra.mrb[0].mxu0 %v1508
      %v1889 = vpop.f32.mrb[0].mxu0
      %v1890 = vadd.f32 %v1815, %v1889
      %v1891 = vpop.f32.mrb[0].mxu0
      %1892 = vmatprep.mubr.f32.mxu0 %v1518
      %1893 = vmatmul.mubr.f32.gmra.mrb[0].mxu0 %v1517
      %v1894 = vpop.f32.mrb[0].mxu0
      %v1895 = vadd.f32 %v1820, %v1894
      %v1896 = vpop.f32.mrb[0].mxu0
      %1897 = vdwg.mxu0
      %1898 = vmatprep.subr.mxu0 0.0
      %1899 = vmatpush1.msra.mxu0 %v1618
      %1900 = vmatprep.subr.mxu0 0.0
      %1901 = vmatpush1.msra.mxu0 %v1619
      %1902 = vmatprep.subr.mxu0 0.0
      %1903 = vmatpush1.msra.mxu0 %v1620
      %1904 = vmatprep.subr.mxu0 0.0
      %1905 = vmatpush1.msra.mxu0 %v1621
      %1906 = vmatprep.subr.mxu0 0.0
      %1907 = vmatpush1.msra.mxu0 %v1622
      %1908 = vmatprep.subr.mxu0 0.0
      %1909 = vmatpush1.msra.mxu0 %v1623
      %1910 = vmatprep.subr.mxu0 0.0
      %1911 = vmatpush1.msra.mxu0 %v1624
      %1912 = vmatprep.subr.mxu0 0.0
      %1913 = vmatpush1.msra.mxu0 %v1625
      %1914 = vmatprep.subr.mxu0 0.0
      %1915 = vmatpush1.msra.mxu0 %v1626
      %1916 = vmatprep.subr.mxu0 0.0
      %1917 = vmatpush1.msra.mxu0 %v1627
      %1918 = vmatprep.subr.mxu0 0.0
      %1919 = vmatpush1.msra.mxu0 %v1628
      %1920 = vmatprep.subr.mxu0 0.0
      %1921 = vmatpush1.msra.mxu0 %v1629
      %1922 = vmatprep.subr.mxu0 0.0
      %1923 = vmatpush1.msra.mxu0 %v1630
      %1924 = vmatprep.subr.mxu0 0.0
      %1925 = vmatpush1.msra.mxu0 %v1631
      %1926 = vmatprep.subr.mxu0 0.0
      %1927 = vmatpush1.msra.mxu0 %v1632
      %1928 = vmatprep.subr.mxu0 0.0
      %1929 = vmatpush1.msra.mxu0 %v1633
      %1930 = vmatprep.subr.mxu0 0.0
      %1931 = vmatpush1.msra.mxu0 %v1634
      %1932 = vmatprep.subr.mxu0 0.0
      %1933 = vmatpush1.msra.mxu0 %v1635
      %1934 = vmatprep.subr.mxu0 0.0
      %1935 = vmatpush1.msra.mxu0 %v1636
      %1936 = vmatprep.subr.mxu0 0.0
      %1937 = vmatpush1.msra.mxu0 %v1637
      %1938 = vmatprep.subr.mxu0 0.0
      %1939 = vmatpush1.msra.mxu0 %v1638
      %1940 = vmatprep.subr.mxu0 0.0
      %1941 = vmatpush1.msra.mxu0 %v1639
      %1942 = vmatprep.subr.mxu0 0.0
      %1943 = vmatpush1.msra.mxu0 %v1640
      %1944 = vmatprep.subr.mxu0 0.0
      %1945 = vmatpush1.msra.mxu0 %v1641
      %1946 = vmatprep.subr.mxu0 0.0
      %1947 = vmatpush1.msra.mxu0 %v1642
      %1948 = vmatprep.subr.mxu0 0.0
      %1949 = vmatpush1.msra.mxu0 %v1643
      %1950 = vmatprep.subr.mxu0 0.0
      %1951 = vmatpush1.msra.mxu0 %v1644
      %1952 = vmatprep.subr.mxu0 0.0
      %1953 = vmatpush1.msra.mxu0 %v1645
      %1954 = vmatprep.subr.mxu0 0.0
      %1955 = vmatpush1.msra.mxu0 %v1646
      %1956 = vmatprep.subr.mxu0 0.0
      %1957 = vmatpush1.msra.mxu0 %v1647
      %1958 = vmatprep.subr.mxu0 0.0
      %1959 = vmatpush1.msra.mxu0 %v1648
      %1960 = vmatprep.subr.mxu0 0.0
      %1961 = vmatpush1.msra.mxu0 %v1649
      %1962 = vmatprep.mubr.f32.mxu0 %v1511
      %1963 = vmatmul.mubr.f32.gmra.mrb[0].mxu0 %v1510
      %v1964 = vpop.f32.mrb[0].mxu0
      %v1965 = vadd.f32 %v1890, %v1964
      %v1966 = vpop.f32.mrb[0].mxu0
      %1967 = vmatprep.mubr.f32.mxu0 %v1520
      %1968 = vmatmul.mubr.f32.gmra.mrb[0].mxu0 %v1519
      %v1969 = vpop.f32.mrb[0].mxu0
      %v1970 = vadd.f32 %v1895, %v1969
      %v1971 = vpop.f32.mrb[0].mxu0
      %1972 = vdwg.mxu0
      %1973 = vmatprep.subr.mxu0 0.0
      %1974 = vmatpush1.msra.mxu0 %v1650
      %1975 = vmatprep.subr.mxu0 0.0
      %1976 = vmatpush1.msra.mxu0 %v1651
      %1977 = vmatprep.subr.mxu0 0.0
      %1978 = vmatpush1.msra.mxu0 %v1652
      %1979 = vmatprep.subr.mxu0 0.0
      %1980 = vmatpush1.msra.mxu0 %v1653
      %1981 = vmatprep.subr.mxu0 0.0
      %1982 = vmatpush1.msra.mxu0 %v1654
      %1983 = vmatprep.subr.mxu0 0.0
      %1984 = vmatpush1.msra.mxu0 %v1655
      %1985 = vmatprep.subr.mxu0 0.0
      %1986 = vmatpush1.msra.mxu0 %v1656
      %1987 = vmatprep.subr.mxu0 0.0
      %1988 = vmatpush1.msra.mxu0 %v1657
      %1989 = vmatprep.subr.mxu0 0.0
      %1990 = vmatpush1.msra.mxu0 %v1658
      %1991 = vmatprep.subr.mxu0 0.0
      %1992 = vmatpush1.msra.mxu0 %v1659
      %1993 = vmatprep.subr.mxu0 0.0
      %1994 = vmatpush1.msra.mxu0 %v1660
      %1995 = vmatprep.subr.mxu0 0.0
      %1996 = vmatpush1.msra.mxu0 %v1661
      %1997 = vmatprep.subr.mxu0 0.0
      %1998 = vmatpush1.msra.mxu0 %v1662
      %1999 = vmatprep.subr.mxu0 0.0
      %2000 = vmatpush1.msra.mxu0 %v1663
      %2001 = vmatprep.subr.mxu0 0.0
      %2002 = vmatpush1.msra.mxu0 %v1664
      %2003 = vmatprep.subr.mxu0 0.0
      %2004 = vmatpush1.msra.mxu0 %v1665
      %2005 = vmatprep.subr.mxu0 0.0
      %2006 = vmatpush1.msra.mxu0 0.0
      %2007 = vmatprep.subr.mxu0 0.0
      %2008 = vmatpush1.msra.mxu0 0.0
      %2009 = vmatprep.subr.mxu0 0.0
      %2010 = vmatpush1.msra.mxu0 0.0
      %2011 = vmatprep.subr.mxu0 0.0
      %2012 = vmatpush1.msra.mxu0 0.0
      %2013 = vmatprep.subr.mxu0 0.0
      %2014 = vmatpush1.msra.mxu0 0.0
      %2015 = vmatprep.subr.mxu0 0.0
      %2016 = vmatpush1.msra.mxu0 0.0
      %2017 = vmatprep.subr.mxu0 0.0
      %2018 = vmatpush1.msra.mxu0 0.0
      %2019 = vmatprep.subr.mxu0 0.0
      %2020 = vmatpush1.msra.mxu0 0.0
      %2021 = vmatprep.subr.mxu0 0.0
      %2022 = vmatpush1.msra.mxu0 0.0
      %2023 = vmatprep.subr.mxu0 0.0
      %2024 = vmatpush1.msra.mxu0 0.0
      %2025 = vmatprep.subr.mxu0 0.0
      %2026 = vmatpush1.msra.mxu0 0.0
      %2027 = vmatprep.subr.mxu0 0.0
      %2028 = vmatpush1.msra.mxu0 0.0
      %2029 = vmatprep.subr.mxu0 0.0
      %2030 = vmatpush1.msra.mxu0 0.0
      %2031 = vmatprep.subr.mxu0 0.0
      %2032 = vmatpush1.msra.mxu0 0.0
      %2033 = vmatprep.subr.mxu0 0.0
      %2034 = vmatpush1.msra.mxu0 0.0
      %2035 = vmatprep.subr.mxu0 0.0
      %2036 = vmatpush1.msra.mxu0 0.0
      %2037 = vmatprep.mubr.f32.mxu0 0.0
      %2038 = vmatmul.mubr.f32.gmra.mrb[0].mxu0 %v1512
      %v2039 = vpop.f32.mrb[0].mxu0
      %v2040 = vadd.f32 %v1965, %v2039
      %v2041 = vpop.f32.mrb[0].mxu0
      %2042 = vmatprep.mubr.f32.mxu0 0.0
      %2043 = vmatmul.mubr.f32.gmra.mrb[0].mxu0 %v1521
      %v2044 = vpop.f32.mrb[0].mxu0
      %v2045 = vadd.f32 %v1970, %v2044
      %v2046 = vpop.f32.mrb[0].mxu0
      %2047 = vdwg.mxu0
      %2048 = vst [vmem:[#allocation3] sm:$0x3] 0.0
      %vm2049 = vcmask 254976
      %2050 = vst.msk [vmem:[#allocation3 + $0x8] sm:$0x3] %vm2049, 0.0
      %2051 = vst [vmem:[#allocation3 + $0x20] sm:$0xc] 0.0
      %vm2052 = vcmask 257026
      %2053 = vst.msk [vmem:[#allocation3 + $0x28] sm:$0xc] %vm2052, 0.0
      %vm2054 = vcmask 130048
      %2055 = vst.msk [vmem:[#allocation3] sm:$0xff] %vm2054, 0.0
      %2056 = vst.msk [vmem:[#allocation3 + $0x10] sm:$0xff] %vm2054, 0.0
      %vm2057 = vcmask 125952
      %2058 = vst.msk [vmem:[#allocation3 + $0x20] sm:$0xf] %vm2057, 0.0
      %vm2059 = vcmask 261248
      %2060 = vst.msk [vmem:[#allocation3 + $0x8] sm:$0xff] %vm2059, 0.0
      %2061 = vst.msk [vmem:[#allocation3 + $0x18] sm:$0xff] %vm2059, 0.0
      %vm2062 = vcmask 257152
      %2063 = vst.msk [vmem:[#allocation3 + $0x28] sm:$0xf] %vm2062, 0.0
      %vm2066 = vcmask 1041408
      %v2067 = vrot.slane %v2040, 6
      %v2068 = vrot.slane %v2045, 6
      %v2069 = vsel %vm2066, %v2067, %v2068
      %2070 = vrot.lane.b32.xlu0 %v2067, 16
      %v2071 = vpop.permute.xlu0 %2070
      %2072 = vrot.lane.b32.xlu0 %v2069, 16
      %v2073 = vpop.permute.xlu0 %2072
      %2074 = vrot.lane.b32.xlu0 %v2068, 16
      %v2075 = vpop.permute.xlu0 %2074
      %vm2079 = vcmask 1047682
      %2080 = vst.msk [vmem:[#allocation3] sm:$0xfc] %vm2079, %v2071
      %vm2081 = vcmask 130050
      %2082 = vst.msk [vmem:[#allocation3 + $0x8] sm:$0xfc] %vm2081, %v2071
      %vm2083 = vcmask 1047680
      %2084 = vst.msk [vmem:[#allocation3 + $0x10] sm:$0xff] %vm2083, %v2073
      %2085 = vst.msk [vmem:[#allocation3 + $0x18] sm:$0xff] %vm2054, %v2073
      %vm2086 = vcmask 1041536
      %2087 = vst.msk [vmem:[#allocation3 + $0x20] sm:$0x3] %vm2086, %v2075
      %vm2088 = vcmask 123904
      %2089 = vst.msk [vmem:[#allocation3 + $0x28] sm:$0x3] %vm2088, %v2075
      %v2090 = vld [vmem:[%s5] sm:$0xff]
      %v2091 = vld [vmem:[%s5 + $0x8] sm:$0xff]
      %v2092 = vld [vmem:[%s5 + $0x10] sm:$0xff]
      %v2093 = vld [vmem:[%s5 + $0x18] sm:$0x1]
      %v2094 = vld [vmem:[#allocation3] sm:$0xff]
      %v2095 = vld [vmem:[#allocation3 + $0x10] sm:$0xff]
      %v2096 = vlaneseq
      %v2097 = vshrl.u32 %v2096, 7
      %v2098 = vsub.s32 0, %v2097
      %v2099 = vrot.slane %v2090, %v2098
      %v2100 = vmul.f32 %v2094, %v2099
      %v2101 = vmul.f32 %v2095, %v2099
      %v2102 = vadd.f32 %v2100, 0.0
      %v2103 = vadd.f32 %v2101, 0.0
      %v2104 = vld [vmem:[#allocation3 + $0x8] sm:$0xff]
      %v2105 = vld [vmem:[#allocation3 + $0x18] sm:$0xff]
      %v2106 = vlaneseq
      %v2107 = vshrl.u32 %v2106, 7
      %v2108 = vsub.s32 1, %v2107
      %v2109 = vrot.slane %v2090, %v2108
      %2111 = vrot.lane.b32.xlu0 %v2109, 8
      %v2112 = vpop.permute.xlu0 %2111
      %v2114 = vmul.f32 %v2094, %v2112
      %v2115 = vmul.f32 %v2104, %v2112
      %v2116 = vmul.f32 %v2095, %v2112
      %v2117 = vmul.f32 %v2105, %v2112
      %2122 = vrot.lane.b32.xlu0 %v2114, 120
      %v2123 = vpop.permute.xlu0 %2122
      %2124 = vrot.lane.b32.xlu0 %v2115, 120
      %v2125 = vpop.permute.xlu0 %2124
      %2126 = vrot.lane.b32.xlu0 %v2116, 120
      %v2127 = vpop.permute.xlu0 %2126
      %2128 = vrot.lane.b32.xlu0 %v2117, 120
      %v2129 = vpop.permute.xlu0 %2128
      %v2130 = vsel %vm454, %v2123, %v2125
      %v2131 = vsel %vm454, %v2127, %v2129
      %v2134 = vadd.f32 %v2102, %v2130
      %v2135 = vadd.f32 %v2103, %v2131
      %v2136 = vlaneseq
      %v2137 = vshrl.u32 %v2136, 7
      %v2138 = vsub.s32 2, %v2137
      %v2139 = vrot.slane %v2090, %v2138
      %2141 = vrot.lane.b32.xlu0 %v2139, 16
      %v2142 = vpop.permute.xlu0 %2141
      %v2144 = vmul.f32 %v2094, %v2142
      %v2145 = vmul.f32 %v2104, %v2142
      %v2146 = vmul.f32 %v2095, %v2142
      %v2147 = vmul.f32 %v2105, %v2142
      %2152 = vrot.lane.b32.xlu0 %v2144, 112
      %v2153 = vpop.permute.xlu0 %2152
      %2154 = vrot.lane.b32.xlu0 %v2145, 112
      %v2155 = vpop.permute.xlu0 %2154
      %2156 = vrot.lane.b32.xlu0 %v2146, 112
      %v2157 = vpop.permute.xlu0 %2156
      %2158 = vrot.lane.b32.xlu0 %v2147, 112
      %v2159 = vpop.permute.xlu0 %2158
      %v2160 = vsel %vm477, %v2153, %v2155
      %v2161 = vsel %vm477, %v2157, %v2159
      %v2164 = vadd.f32 %v2134, %v2160
      %v2165 = vadd.f32 %v2135, %v2161
      %v2166 = vlaneseq
      %v2167 = vshrl.u32 %v2166, 7
      %v2168 = vsub.s32 3, %v2167
      %v2169 = vrot.slane %v2090, %v2168
      %2171 = vrot.lane.b32.xlu0 %v2169, 24
      %v2172 = vpop.permute.xlu0 %2171
      %v2174 = vmul.f32 %v2094, %v2172
      %v2175 = vmul.f32 %v2104, %v2172
      %v2176 = vmul.f32 %v2095, %v2172
      %v2177 = vmul.f32 %v2105, %v2172
      %2182 = vrot.lane.b32.xlu0 %v2174, 104
      %v2183 = vpop.permute.xlu0 %2182
      %2184 = vrot.lane.b32.xlu0 %v2175, 104
      %v2185 = vpop.permute.xlu0 %2184
      %2186 = vrot.lane.b32.xlu0 %v2176, 104
      %v2187 = vpop.permute.xlu0 %2186
      %2188 = vrot.lane.b32.xlu0 %v2177, 104
      %v2189 = vpop.permute.xlu0 %2188
      %vm2190 = vcmask 850944
      %v2191 = vsel %vm2190, %v2183, %v2185
      %v2192 = vsel %vm2190, %v2187, %v2189
      %v2195 = vadd.f32 %v2164, %v2191
      %v2196 = vadd.f32 %v2165, %v2192
      %v2197 = vlaneseq
      %v2198 = vshrl.u32 %v2197, 7
      %v2199 = vsub.s32 4, %v2198
      %v2200 = vrot.slane %v2090, %v2199
      %2202 = vrot.lane.b32.xlu0 %v2200, 32
      %v2203 = vpop.permute.xlu0 %2202
      %v2205 = vmul.f32 %v2094, %v2203
      %v2206 = vmul.f32 %v2104, %v2203
      %v2207 = vmul.f32 %v2095, %v2203
      %v2208 = vmul.f32 %v2105, %v2203
      %2213 = vrot.lane.b32.xlu0 %v2205, 96
      %v2214 = vpop.permute.xlu0 %2213
      %2215 = vrot.lane.b32.xlu0 %v2206, 96
      %v2216 = vpop.permute.xlu0 %2215
      %2217 = vrot.lane.b32.xlu0 %v2207, 96
      %v2218 = vpop.permute.xlu0 %2217
      %2219 = vrot.lane.b32.xlu0 %v2208, 96
      %v2220 = vpop.permute.xlu0 %2219
      %vm2221 = vcmask 785408
      %v2222 = vsel %vm2221, %v2214, %v2216
      %v2223 = vsel %vm2221, %v2218, %v2220
      %v2226 = vadd.f32 %v2195, %v2222
      %v2227 = vadd.f32 %v2196, %v2223
      %v2228 = vld [vmem:[#allocation3] sm:$0xfe]
      %v2229 = vld [vmem:[#allocation3 + $0x20] sm:$0x1]
      %v2230 = vlaneseq
      %v2231 = vshrl.u32 %v2230, 7
      %v2232 = vsub.s32 5, %v2231
      %v2233 = vrot.slane %v2090, %v2232
      %v2234 = vmul.f32 %v2228, %v2233
      %v2235 = vmul.f32 %v2095, %v2233
      %v2236 = vmul.f32 %v2229, %v2233
      %v2240 = vrot.slane %v2234, 1
      %v2241 = vrot.slane %v2235, 1
      %v2242 = vsel %vm490, %v2240, %v2241
      %v2243 = vrot.slane %v2236, 1
      %v2244 = vsel %vm490, %v2241, %v2243
      %v2247 = vadd.f32 %v2226, %v2242
      %v2248 = vadd.f32 %v2227, %v2244
      %v2249 = vld [vmem:[#allocation3 + $0x8] sm:$0xfe]
      %v2250 = vld [vmem:[#allocation3 + $0x28] sm:$0x1]
      %v2251 = vlaneseq
      %v2252 = vshrl.u32 %v2251, 7
      %v2253 = vsub.s32 6, %v2252
      %v2254 = vrot.slane %v2090, %v2253
      %2256 = vrot.lane.b32.xlu0 %v2254, 8
      %v2257 = vpop.permute.xlu0 %2256
      %v2259 = vmul.f32 %v2228, %v2257
      %v2260 = vmul.f32 %v2249, %v2257
      %v2261 = vmul.f32 %v2095, %v2257
      %v2262 = vmul.f32 %v2105, %v2257
      %v2263 = vmul.f32 %v2229, %v2257
      %v2264 = vmul.f32 %v2250, %v2257
      %v2271 = vrot.slane %v2259, 1
      %v2272 = vrot.slane %v2261, 1
      %v2273 = vsel %vm490, %v2271, %v2272
      %v2274 = vrot.slane %v2260, 1
      %v2275 = vrot.slane %v2262, 1
      %v2276 = vsel %vm490, %v2274, %v2275
      %v2277 = vrot.slane %v2263, 1
      %v2278 = vsel %vm490, %v2272, %v2277
      %v2279 = vrot.slane %v2264, 1
      %v2280 = vsel %vm490, %v2275, %v2279
      %2281 = vrot.lane.b32.xlu0 %v2273, 120
      %v2282 = vpop.permute.xlu0 %2281
      %2283 = vrot.lane.b32.xlu0 %v2276, 120
      %v2284 = vpop.permute.xlu0 %2283
      %2285 = vrot.lane.b32.xlu0 %v2278, 120
      %v2286 = vpop.permute.xlu0 %2285
      %2287 = vrot.lane.b32.xlu0 %v2280, 120
      %v2288 = vpop.permute.xlu0 %2287
      %v2289 = vsel %vm454, %v2282, %v2284
      %v2290 = vsel %vm454, %v2286, %v2288
      %v2293 = vadd.f32 %v2247, %v2289
      %v2294 = vadd.f32 %v2248, %v2290
      %v2295 = vlaneseq
      %v2296 = vshrl.u32 %v2295, 7
      %v2297 = vsub.s32 7, %v2296
      %v2298 = vrot.slane %v2090, %v2297
      %2300 = vrot.lane.b32.xlu0 %v2298, 16
      %v2301 = vpop.permute.xlu0 %2300
      %v2303 = vmul.f32 %v2228, %v2301
      %v2304 = vmul.f32 %v2249, %v2301
      %v2305 = vmul.f32 %v2095, %v2301
      %v2306 = vmul.f32 %v2105, %v2301
      %v2307 = vmul.f32 %v2229, %v2301
      %v2308 = vmul.f32 %v2250, %v2301
      %v2315 = vrot.slane %v2303, 1
      %v2316 = vrot.slane %v2305, 1
      %v2317 = vsel %vm490, %v2315, %v2316
      %v2318 = vrot.slane %v2304, 1
      %v2319 = vrot.slane %v2306, 1
      %v2320 = vsel %vm490, %v2318, %v2319
      %v2321 = vrot.slane %v2307, 1
      %v2322 = vsel %vm490, %v2316, %v2321
      %v2323 = vrot.slane %v2308, 1
      %v2324 = vsel %vm490, %v2319, %v2323
      %2325 = vrot.lane.b32.xlu0 %v2317, 112
      %v2326 = vpop.permute.xlu0 %2325
      %2327 = vrot.lane.b32.xlu0 %v2320, 112
      %v2328 = vpop.permute.xlu0 %2327
      %2329 = vrot.lane.b32.xlu0 %v2322, 112
      %v2330 = vpop.permute.xlu0 %2329
      %2331 = vrot.lane.b32.xlu0 %v2324, 112
      %v2332 = vpop.permute.xlu0 %2331
      %v2333 = vsel %vm477, %v2326, %v2328
      %v2334 = vsel %vm477, %v2330, %v2332
      %v2337 = vadd.f32 %v2293, %v2333
      %v2338 = vadd.f32 %v2294, %v2334
      %v2339 = vlaneseq
      %v2340 = vshrl.u32 %v2339, 7
      %v2341 = vsub.s32 0, %v2340
      %v2342 = vrot.slane %v2091, %v2341
      %2344 = vrot.lane.b32.xlu0 %v2342, 24
      %v2345 = vpop.permute.xlu0 %2344
      %v2347 = vmul.f32 %v2228, %v2345
      %v2348 = vmul.f32 %v2249, %v2345
      %v2349 = vmul.f32 %v2095, %v2345
      %v2350 = vmul.f32 %v2105, %v2345
      %v2351 = vmul.f32 %v2229, %v2345
      %v2352 = vmul.f32 %v2250, %v2345
      %v2359 = vrot.slane %v2347, 1
      %v2360 = vrot.slane %v2349, 1
      %v2361 = vsel %vm490, %v2359, %v2360
      %v2362 = vrot.slane %v2348, 1
      %v2363 = vrot.slane %v2350, 1
      %v2364 = vsel %vm490, %v2362, %v2363
      %v2365 = vrot.slane %v2351, 1
      %v2366 = vsel %vm490, %v2360, %v2365
      %v2367 = vrot.slane %v2352, 1
      %v2368 = vsel %vm490, %v2363, %v2367
      %2369 = vrot.lane.b32.xlu0 %v2361, 104
      %v2370 = vpop.permute.xlu0 %2369
      %2371 = vrot.lane.b32.xlu0 %v2364, 104
      %v2372 = vpop.permute.xlu0 %2371
      %2373 = vrot.lane.b32.xlu0 %v2366, 104
      %v2374 = vpop.permute.xlu0 %2373
      %2375 = vrot.lane.b32.xlu0 %v2368, 104
      %v2376 = vpop.permute.xlu0 %2375
      %v2377 = vsel %vm2190, %v2370, %v2372
      %v2378 = vsel %vm2190, %v2374, %v2376
      %v2381 = vadd.f32 %v2337, %v2377
      %v2382 = vadd.f32 %v2338, %v2378
      %v2383 = vlaneseq
      %v2384 = vshrl.u32 %v2383, 7
      %v2385 = vsub.s32 1, %v2384
      %v2386 = vrot.slane %v2091, %v2385
      %2388 = vrot.lane.b32.xlu0 %v2386, 32
      %v2389 = vpop.permute.xlu0 %2388
      %v2391 = vmul.f32 %v2228, %v2389
      %v2392 = vmul.f32 %v2249, %v2389
      %v2393 = vmul.f32 %v2095, %v2389
      %v2394 = vmul.f32 %v2105, %v2389
      %v2395 = vmul.f32 %v2229, %v2389
      %v2396 = vmul.f32 %v2250, %v2389
      %v2403 = vrot.slane %v2391, 1
      %v2404 = vrot.slane %v2393, 1
      %v2405 = vsel %vm490, %v2403, %v2404
      %v2406 = vrot.slane %v2392, 1
      %v2407 = vrot.slane %v2394, 1
      %v2408 = vsel %vm490, %v2406, %v2407
      %v2409 = vrot.slane %v2395, 1
      %v2410 = vsel %vm490, %v2404, %v2409
      %v2411 = vrot.slane %v2396, 1
      %v2412 = vsel %vm490, %v2407, %v2411
      %2413 = vrot.lane.b32.xlu0 %v2405, 96
      %v2414 = vpop.permute.xlu0 %2413
      %2415 = vrot.lane.b32.xlu0 %v2408, 96
      %v2416 = vpop.permute.xlu0 %2415
      %2417 = vrot.lane.b32.xlu0 %v2410, 96
      %v2418 = vpop.permute.xlu0 %2417
      %2419 = vrot.lane.b32.xlu0 %v2412, 96
      %v2420 = vpop.permute.xlu0 %2419
      %v2421 = vsel %vm2221, %v2414, %v2416
      %v2422 = vsel %vm2221, %v2418, %v2420
      %v2425 = vadd.f32 %v2381, %v2421
      %v2426 = vadd.f32 %v2382, %v2422
      %v2427 = vld [vmem:[#allocation3] sm:$0xfc]
      %v2428 = vld [vmem:[#allocation3 + $0x20] sm:$0x3]
      %v2429 = vlaneseq
      %v2430 = vshrl.u32 %v2429, 7
      %v2431 = vsub.s32 2, %v2430
      %v2432 = vrot.slane %v2091, %v2431
      %v2433 = vmul.f32 %v2427, %v2432
      %v2434 = vmul.f32 %v2095, %v2432
      %v2435 = vmul.f32 %v2428, %v2432
      %v2439 = vrot.slane %v2433, 2
      %v2440 = vrot.slane %v2434, 2
      %v2441 = vsel %vm578, %v2439, %v2440
      %v2442 = vrot.slane %v2435, 2
      %v2443 = vsel %vm578, %v2440, %v2442
      %v2446 = vadd.f32 %v2425, %v2441
      %v2447 = vadd.f32 %v2426, %v2443
      %v2448 = vld [vmem:[#allocation3 + $0x8] sm:$0xfc]
      %v2449 = vld [vmem:[#allocation3 + $0x28] sm:$0x3]
      %v2450 = vlaneseq
      %v2451 = vshrl.u32 %v2450, 7
      %v2452 = vsub.s32 3, %v2451
      %v2453 = vrot.slane %v2091, %v2452
      %2455 = vrot.lane.b32.xlu0 %v2453, 8
      %v2456 = vpop.permute.xlu0 %2455
      %v2458 = vmul.f32 %v2427, %v2456
      %v2459 = vmul.f32 %v2448, %v2456
      %v2460 = vmul.f32 %v2095, %v2456
      %v2461 = vmul.f32 %v2105, %v2456
      %v2462 = vmul.f32 %v2428, %v2456
      %v2463 = vmul.f32 %v2449, %v2456
      %v2470 = vrot.slane %v2458, 2
      %v2471 = vrot.slane %v2460, 2
      %v2472 = vsel %vm578, %v2470, %v2471
      %v2473 = vrot.slane %v2459, 2
      %v2474 = vrot.slane %v2461, 2
      %v2475 = vsel %vm578, %v2473, %v2474
      %v2476 = vrot.slane %v2462, 2
      %v2477 = vsel %vm578, %v2471, %v2476
      %v2478 = vrot.slane %v2463, 2
      %v2479 = vsel %vm578, %v2474, %v2478
      %2480 = vrot.lane.b32.xlu0 %v2472, 120
      %v2481 = vpop.permute.xlu0 %2480
      %2482 = vrot.lane.b32.xlu0 %v2475, 120
      %v2483 = vpop.permute.xlu0 %2482
      %2484 = vrot.lane.b32.xlu0 %v2477, 120
      %v2485 = vpop.permute.xlu0 %2484
      %2486 = vrot.lane.b32.xlu0 %v2479, 120
      %v2487 = vpop.permute.xlu0 %2486
      %v2488 = vsel %vm454, %v2481, %v2483
      %v2489 = vsel %vm454, %v2485, %v2487
      %v2492 = vadd.f32 %v2446, %v2488
      %v2493 = vadd.f32 %v2447, %v2489
      %v2494 = vlaneseq
      %v2495 = vshrl.u32 %v2494, 7
      %v2496 = vsub.s32 4, %v2495
      %v2497 = vrot.slane %v2091, %v2496
      %2499 = vrot.lane.b32.xlu0 %v2497, 16
      %v2500 = vpop.permute.xlu0 %2499
      %v2502 = vmul.f32 %v2427, %v2500
      %v2503 = vmul.f32 %v2448, %v2500
      %v2504 = vmul.f32 %v2095, %v2500
      %v2505 = vmul.f32 %v2105, %v2500
      %v2506 = vmul.f32 %v2428, %v2500
      %v2507 = vmul.f32 %v2449, %v2500
      %v2514 = vrot.slane %v2502, 2
      %v2515 = vrot.slane %v2504, 2
      %v2516 = vsel %vm578, %v2514, %v2515
      %v2517 = vrot.slane %v2503, 2
      %v2518 = vrot.slane %v2505, 2
      %v2519 = vsel %vm578, %v2517, %v2518
      %v2520 = vrot.slane %v2506, 2
      %v2521 = vsel %vm578, %v2515, %v2520
      %v2522 = vrot.slane %v2507, 2
      %v2523 = vsel %vm578, %v2518, %v2522
      %2524 = vrot.lane.b32.xlu0 %v2516, 112
      %v2525 = vpop.permute.xlu0 %2524
      %2526 = vrot.lane.b32.xlu0 %v2519, 112
      %v2527 = vpop.permute.xlu0 %2526
      %2528 = vrot.lane.b32.xlu0 %v2521, 112
      %v2529 = vpop.permute.xlu0 %2528
      %2530 = vrot.lane.b32.xlu0 %v2523, 112
      %v2531 = vpop.permute.xlu0 %2530
      %v2532 = vsel %vm477, %v2525, %v2527
      %v2533 = vsel %vm477, %v2529, %v2531
      %v2536 = vadd.f32 %v2492, %v2532
      %v2537 = vadd.f32 %v2493, %v2533
      %v2538 = vlaneseq
      %v2539 = vshrl.u32 %v2538, 7
      %v2540 = vsub.s32 5, %v2539
      %v2541 = vrot.slane %v2091, %v2540
      %2543 = vrot.lane.b32.xlu0 %v2541, 24
      %v2544 = vpop.permute.xlu0 %2543
      %v2546 = vmul.f32 %v2427, %v2544
      %v2547 = vmul.f32 %v2448, %v2544
      %v2548 = vmul.f32 %v2095, %v2544
      %v2549 = vmul.f32 %v2105, %v2544
      %v2550 = vmul.f32 %v2428, %v2544
      %v2551 = vmul.f32 %v2449, %v2544
      %v2558 = vrot.slane %v2546, 2
      %v2559 = vrot.slane %v2548, 2
      %v2560 = vsel %vm578, %v2558, %v2559
      %v2561 = vrot.slane %v2547, 2
      %v2562 = vrot.slane %v2549, 2
      %v2563 = vsel %vm578, %v2561, %v2562
      %v2564 = vrot.slane %v2550, 2
      %v2565 = vsel %vm578, %v2559, %v2564
      %v2566 = vrot.slane %v2551, 2
      %v2567 = vsel %vm578, %v2562, %v2566
      %2568 = vrot.lane.b32.xlu0 %v2560, 104
      %v2569 = vpop.permute.xlu0 %2568
      %2570 = vrot.lane.b32.xlu0 %v2563, 104
      %v2571 = vpop.permute.xlu0 %2570
      %2572 = vrot.lane.b32.xlu0 %v2565, 104
      %v2573 = vpop.permute.xlu0 %2572
      %2574 = vrot.lane.b32.xlu0 %v2567, 104
      %v2575 = vpop.permute.xlu0 %2574
      %v2576 = vsel %vm2190, %v2569, %v2571
      %v2577 = vsel %vm2190, %v2573, %v2575
      %v2580 = vadd.f32 %v2536, %v2576
      %v2581 = vadd.f32 %v2537, %v2577
      %v2582 = vlaneseq
      %v2583 = vshrl.u32 %v2582, 7
      %v2584 = vsub.s32 6, %v2583
      %v2585 = vrot.slane %v2091, %v2584
      %2587 = vrot.lane.b32.xlu0 %v2585, 32
      %v2588 = vpop.permute.xlu0 %2587
      %v2590 = vmul.f32 %v2427, %v2588
      %v2591 = vmul.f32 %v2448, %v2588
      %v2592 = vmul.f32 %v2095, %v2588
      %v2593 = vmul.f32 %v2105, %v2588
      %v2594 = vmul.f32 %v2428, %v2588
      %v2595 = vmul.f32 %v2449, %v2588
      %v2602 = vrot.slane %v2590, 2
      %v2603 = vrot.slane %v2592, 2
      %v2604 = vsel %vm578, %v2602, %v2603
      %v2605 = vrot.slane %v2591, 2
      %v2606 = vrot.slane %v2593, 2
      %v2607 = vsel %vm578, %v2605, %v2606
      %v2608 = vrot.slane %v2594, 2
      %v2609 = vsel %vm578, %v2603, %v2608
      %v2610 = vrot.slane %v2595, 2
      %v2611 = vsel %vm578, %v2606, %v2610
      %2612 = vrot.lane.b32.xlu0 %v2604, 96
      %v2613 = vpop.permute.xlu0 %2612
      %2614 = vrot.lane.b32.xlu0 %v2607, 96
      %v2615 = vpop.permute.xlu0 %2614
      %2616 = vrot.lane.b32.xlu0 %v2609, 96
      %v2617 = vpop.permute.xlu0 %2616
      %2618 = vrot.lane.b32.xlu0 %v2611, 96
      %v2619 = vpop.permute.xlu0 %2618
      %v2620 = vsel %vm2221, %v2613, %v2615
      %v2621 = vsel %vm2221, %v2617, %v2619
      %v2624 = vadd.f32 %v2580, %v2620
      %v2625 = vadd.f32 %v2581, %v2621
      %v2626 = vld [vmem:[#allocation3] sm:$0xf8]
      %v2627 = vld [vmem:[#allocation3 + $0x20] sm:$0x7]
      %v2628 = vlaneseq
      %v2629 = vshrl.u32 %v2628, 7
      %v2630 = vsub.s32 7, %v2629
      %v2631 = vrot.slane %v2091, %v2630
      %v2632 = vmul.f32 %v2626, %v2631
      %v2633 = vmul.f32 %v2095, %v2631
      %v2634 = vmul.f32 %v2627, %v2631
      %vm2638 = vcmask 1044480
      %v2639 = vrot.slane %v2632, 3
      %v2640 = vrot.slane %v2633, 3
      %v2641 = vsel %vm2638, %v2639, %v2640
      %v2642 = vrot.slane %v2634, 3
      %v2643 = vsel %vm2638, %v2640, %v2642
      %v2646 = vadd.f32 %v2624, %v2641
      %v2647 = vadd.f32 %v2625, %v2643
      %v2648 = vld [vmem:[#allocation3 + $0x8] sm:$0xf8]
      %v2649 = vld [vmem:[#allocation3 + $0x28] sm:$0x7]
      %v2650 = vlaneseq
      %v2651 = vshrl.u32 %v2650, 7
      %v2652 = vsub.s32 0, %v2651
      %v2653 = vrot.slane %v2092, %v2652
      %2655 = vrot.lane.b32.xlu0 %v2653, 8
      %v2656 = vpop.permute.xlu0 %2655
      %v2658 = vmul.f32 %v2626, %v2656
      %v2659 = vmul.f32 %v2648, %v2656
      %v2660 = vmul.f32 %v2095, %v2656
      %v2661 = vmul.f32 %v2105, %v2656
      %v2662 = vmul.f32 %v2627, %v2656
      %v2663 = vmul.f32 %v2649, %v2656
      %v2670 = vrot.slane %v2658, 3
      %v2671 = vrot.slane %v2660, 3
      %v2672 = vsel %vm2638, %v2670, %v2671
      %v2673 = vrot.slane %v2659, 3
      %v2674 = vrot.slane %v2661, 3
      %v2675 = vsel %vm2638, %v2673, %v2674
      %v2676 = vrot.slane %v2662, 3
      %v2677 = vsel %vm2638, %v2671, %v2676
      %v2678 = vrot.slane %v2663, 3
      %v2679 = vsel %vm2638, %v2674, %v2678
      %2680 = vrot.lane.b32.xlu0 %v2672, 120
      %v2681 = vpop.permute.xlu0 %2680
      %2682 = vrot.lane.b32.xlu0 %v2675, 120
      %v2683 = vpop.permute.xlu0 %2682
      %2684 = vrot.lane.b32.xlu0 %v2677, 120
      %v2685 = vpop.permute.xlu0 %2684
      %2686 = vrot.lane.b32.xlu0 %v2679, 120
      %v2687 = vpop.permute.xlu0 %2686
      %v2688 = vsel %vm454, %v2681, %v2683
      %v2689 = vsel %vm454, %v2685, %v2687
      %v2692 = vadd.f32 %v2646, %v2688
      %v2693 = vadd.f32 %v2647, %v2689
      %v2694 = vlaneseq
      %v2695 = vshrl.u32 %v2694, 7
      %v2696 = vsub.s32 1, %v2695
      %v2697 = vrot.slane %v2092, %v2696
      %2699 = vrot.lane.b32.xlu0 %v2697, 16
      %v2700 = vpop.permute.xlu0 %2699
      %v2702 = vmul.f32 %v2626, %v2700
      %v2703 = vmul.f32 %v2648, %v2700
      %v2704 = vmul.f32 %v2095, %v2700
      %v2705 = vmul.f32 %v2105, %v2700
      %v2706 = vmul.f32 %v2627, %v2700
      %v2707 = vmul.f32 %v2649, %v2700
      %v2714 = vrot.slane %v2702, 3
      %v2715 = vrot.slane %v2704, 3
      %v2716 = vsel %vm2638, %v2714, %v2715
      %v2717 = vrot.slane %v2703, 3
      %v2718 = vrot.slane %v2705, 3
      %v2719 = vsel %vm2638, %v2717, %v2718
      %v2720 = vrot.slane %v2706, 3
      %v2721 = vsel %vm2638, %v2715, %v2720
      %v2722 = vrot.slane %v2707, 3
      %v2723 = vsel %vm2638, %v2718, %v2722
      %2724 = vrot.lane.b32.xlu0 %v2716, 112
      %v2725 = vpop.permute.xlu0 %2724
      %2726 = vrot.lane.b32.xlu0 %v2719, 112
      %v2727 = vpop.permute.xlu0 %2726
      %2728 = vrot.lane.b32.xlu0 %v2721, 112
      %v2729 = vpop.permute.xlu0 %2728
      %2730 = vrot.lane.b32.xlu0 %v2723, 112
      %v2731 = vpop.permute.xlu0 %2730
      %v2732 = vsel %vm477, %v2725, %v2727
      %v2733 = vsel %vm477, %v2729, %v2731
      %v2736 = vadd.f32 %v2692, %v2732
      %v2737 = vadd.f32 %v2693, %v2733
      %v2738 = vlaneseq
      %v2739 = vshrl.u32 %v2738, 7
      %v2740 = vsub.s32 2, %v2739
      %v2741 = vrot.slane %v2092, %v2740
      %2743 = vrot.lane.b32.xlu0 %v2741, 24
      %v2744 = vpop.permute.xlu0 %2743
      %v2746 = vmul.f32 %v2626, %v2744
      %v2747 = vmul.f32 %v2648, %v2744
      %v2748 = vmul.f32 %v2095, %v2744
      %v2749 = vmul.f32 %v2105, %v2744
      %v2750 = vmul.f32 %v2627, %v2744
      %v2751 = vmul.f32 %v2649, %v2744
      %v2758 = vrot.slane %v2746, 3
      %v2759 = vrot.slane %v2748, 3
      %v2760 = vsel %vm2638, %v2758, %v2759
      %v2761 = vrot.slane %v2747, 3
      %v2762 = vrot.slane %v2749, 3
      %v2763 = vsel %vm2638, %v2761, %v2762
      %v2764 = vrot.slane %v2750, 3
      %v2765 = vsel %vm2638, %v2759, %v2764
      %v2766 = vrot.slane %v2751, 3
      %v2767 = vsel %vm2638, %v2762, %v2766
      %2768 = vrot.lane.b32.xlu0 %v2760, 104
      %v2769 = vpop.permute.xlu0 %2768
      %2770 = vrot.lane.b32.xlu0 %v2763, 104
      %v2771 = vpop.permute.xlu0 %2770
      %2772 = vrot.lane.b32.xlu0 %v2765, 104
      %v2773 = vpop.permute.xlu0 %2772
      %2774 = vrot.lane.b32.xlu0 %v2767, 104
      %v2775 = vpop.permute.xlu0 %2774
      %v2776 = vsel %vm2190, %v2769, %v2771
      %v2777 = vsel %vm2190, %v2773, %v2775
      %v2780 = vadd.f32 %v2736, %v2776
      %v2781 = vadd.f32 %v2737, %v2777
      %v2782 = vlaneseq
      %v2783 = vshrl.u32 %v2782, 7
      %v2784 = vsub.s32 3, %v2783
      %v2785 = vrot.slane %v2092, %v2784
      %2787 = vrot.lane.b32.xlu0 %v2785, 32
      %v2788 = vpop.permute.xlu0 %2787
      %v2790 = vmul.f32 %v2626, %v2788
      %v2791 = vmul.f32 %v2648, %v2788
      %v2792 = vmul.f32 %v2095, %v2788
      %v2793 = vmul.f32 %v2105, %v2788
      %v2794 = vmul.f32 %v2627, %v2788
      %v2795 = vmul.f32 %v2649, %v2788
      %v2802 = vrot.slane %v2790, 3
      %v2803 = vrot.slane %v2792, 3
      %v2804 = vsel %vm2638, %v2802, %v2803
      %v2805 = vrot.slane %v2791, 3
      %v2806 = vrot.slane %v2793, 3
      %v2807 = vsel %vm2638, %v2805, %v2806
      %v2808 = vrot.slane %v2794, 3
      %v2809 = vsel %vm2638, %v2803, %v2808
      %v2810 = vrot.slane %v2795, 3
      %v2811 = vsel %vm2638, %v2806, %v2810
      %2812 = vrot.lane.b32.xlu0 %v2804, 96
      %v2813 = vpop.permute.xlu0 %2812
      %2814 = vrot.lane.b32.xlu0 %v2807, 96
      %v2815 = vpop.permute.xlu0 %2814
      %2816 = vrot.lane.b32.xlu0 %v2809, 96
      %v2817 = vpop.permute.xlu0 %2816
      %2818 = vrot.lane.b32.xlu0 %v2811, 96
      %v2819 = vpop.permute.xlu0 %2818
      %v2820 = vsel %vm2221, %v2813, %v2815
      %v2821 = vsel %vm2221, %v2817, %v2819
      %v2824 = vadd.f32 %v2780, %v2820
      %v2825 = vadd.f32 %v2781, %v2821
      %v2826 = vld [vmem:[#allocation3] sm:$0xf0]
      %v2827 = vld [vmem:[#allocation3 + $0x20] sm:$0xf]
      %v2828 = vlaneseq
      %v2829 = vshrl.u32 %v2828, 7
      %v2830 = vsub.s32 4, %v2829
      %v2831 = vrot.slane %v2092, %v2830
      %v2832 = vmul.f32 %v2826, %v2831
      %v2833 = vmul.f32 %v2095, %v2831
      %v2834 = vmul.f32 %v2827, %v2831
      %vm2838 = vcmask 1043456
      %v2839 = vrot.slane %v2832, 4
      %v2840 = vrot.slane %v2833, 4
      %v2841 = vsel %vm2838, %v2839, %v2840
      %v2842 = vrot.slane %v2834, 4
      %v2843 = vsel %vm2838, %v2840, %v2842
      %v2846 = vadd.f32 %v2824, %v2841
      %v2847 = vadd.f32 %v2825, %v2843
      %v2848 = vld [vmem:[#allocation3 + $0x8] sm:$0xf0]
      %v2849 = vld [vmem:[#allocation3 + $0x28] sm:$0xf]
      %v2850 = vlaneseq
      %v2851 = vshrl.u32 %v2850, 7
      %v2852 = vsub.s32 5, %v2851
      %v2853 = vrot.slane %v2092, %v2852
      %2855 = vrot.lane.b32.xlu0 %v2853, 8
      %v2856 = vpop.permute.xlu0 %2855
      %v2858 = vmul.f32 %v2826, %v2856
      %v2859 = vmul.f32 %v2848, %v2856
      %v2860 = vmul.f32 %v2095, %v2856
      %v2861 = vmul.f32 %v2105, %v2856
      %v2862 = vmul.f32 %v2827, %v2856
      %v2863 = vmul.f32 %v2849, %v2856
      %v2870 = vrot.slane %v2858, 4
      %v2871 = vrot.slane %v2860, 4
      %v2872 = vsel %vm2838, %v2870, %v2871
      %v2873 = vrot.slane %v2859, 4
      %v2874 = vrot.slane %v2861, 4
      %v2875 = vsel %vm2838, %v2873, %v2874
      %v2876 = vrot.slane %v2862, 4
      %v2877 = vsel %vm2838, %v2871, %v2876
      %v2878 = vrot.slane %v2863, 4
      %v2879 = vsel %vm2838, %v2874, %v2878
      %2880 = vrot.lane.b32.xlu0 %v2872, 120
      %v2881 = vpop.permute.xlu0 %2880
      %2882 = vrot.lane.b32.xlu0 %v2875, 120
      %v2883 = vpop.permute.xlu0 %2882
      %2884 = vrot.lane.b32.xlu0 %v2877, 120
      %v2885 = vpop.permute.xlu0 %2884
      %2886 = vrot.lane.b32.xlu0 %v2879, 120
      %v2887 = vpop.permute.xlu0 %2886
      %v2888 = vsel %vm454, %v2881, %v2883
      %v2889 = vsel %vm454, %v2885, %v2887
      %v2892 = vadd.f32 %v2846, %v2888
      %v2893 = vadd.f32 %v2847, %v2889
      %v2894 = vlaneseq
      %v2895 = vshrl.u32 %v2894, 7
      %v2896 = vsub.s32 6, %v2895
      %v2897 = vrot.slane %v2092, %v2896
      %2899 = vrot.lane.b32.xlu0 %v2897, 16
      %v2900 = vpop.permute.xlu0 %2899
      %v2902 = vmul.f32 %v2826, %v2900
      %v2903 = vmul.f32 %v2848, %v2900
      %v2904 = vmul.f32 %v2095, %v2900
      %v2905 = vmul.f32 %v2105, %v2900
      %v2906 = vmul.f32 %v2827, %v2900
      %v2907 = vmul.f32 %v2849, %v2900
      %v2914 = vrot.slane %v2902, 4
      %v2915 = vrot.slane %v2904, 4
      %v2916 = vsel %vm2838, %v2914, %v2915
      %v2917 = vrot.slane %v2903, 4
      %v2918 = vrot.slane %v2905, 4
      %v2919 = vsel %vm2838, %v2917, %v2918
      %v2920 = vrot.slane %v2906, 4
      %v2921 = vsel %vm2838, %v2915, %v2920
      %v2922 = vrot.slane %v2907, 4
      %v2923 = vsel %vm2838, %v2918, %v2922
      %2924 = vrot.lane.b32.xlu0 %v2916, 112
      %v2925 = vpop.permute.xlu0 %2924
      %2926 = vrot.lane.b32.xlu0 %v2919, 112
      %v2927 = vpop.permute.xlu0 %2926
      %2928 = vrot.lane.b32.xlu0 %v2921, 112
      %v2929 = vpop.permute.xlu0 %2928
      %2930 = vrot.lane.b32.xlu0 %v2923, 112
      %v2931 = vpop.permute.xlu0 %2930
      %v2932 = vsel %vm477, %v2925, %v2927
      %v2933 = vsel %vm477, %v2929, %v2931
      %v2936 = vadd.f32 %v2892, %v2932
      %v2937 = vadd.f32 %v2893, %v2933
      %v2938 = vlaneseq
      %v2939 = vshrl.u32 %v2938, 7
      %v2940 = vsub.s32 7, %v2939
      %v2941 = vrot.slane %v2092, %v2940
      %2943 = vrot.lane.b32.xlu0 %v2941, 24
      %v2944 = vpop.permute.xlu0 %2943
      %v2946 = vmul.f32 %v2826, %v2944
      %v2947 = vmul.f32 %v2848, %v2944
      %v2948 = vmul.f32 %v2095, %v2944
      %v2949 = vmul.f32 %v2105, %v2944
      %v2950 = vmul.f32 %v2827, %v2944
      %v2951 = vmul.f32 %v2849, %v2944
      %v2958 = vrot.slane %v2946, 4
      %v2959 = vrot.slane %v2948, 4
      %v2960 = vsel %vm2838, %v2958, %v2959
      %v2961 = vrot.slane %v2947, 4
      %v2962 = vrot.slane %v2949, 4
      %v2963 = vsel %vm2838, %v2961, %v2962
      %v2964 = vrot.slane %v2950, 4
      %v2965 = vsel %vm2838, %v2959, %v2964
      %v2966 = vrot.slane %v2951, 4
      %v2967 = vsel %vm2838, %v2962, %v2966
      %2968 = vrot.lane.b32.xlu0 %v2960, 104
      %v2969 = vpop.permute.xlu0 %2968
      %2970 = vrot.lane.b32.xlu0 %v2963, 104
      %v2971 = vpop.permute.xlu0 %2970
      %2972 = vrot.lane.b32.xlu0 %v2965, 104
      %v2973 = vpop.permute.xlu0 %2972
      %2974 = vrot.lane.b32.xlu0 %v2967, 104
      %v2975 = vpop.permute.xlu0 %2974
      %v2976 = vsel %vm2190, %v2969, %v2971
      %v2977 = vsel %vm2190, %v2973, %v2975
      %v2980 = vadd.f32 %v2936, %v2976
      %v2981 = vadd.f32 %v2937, %v2977
      %v2982 = vlaneseq
      %v2983 = vshrl.u32 %v2982, 7
      %v2984 = vsub.s32 0, %v2983
      %v2985 = vrot.slane %v2093, %v2984
      %2987 = vrot.lane.b32.xlu0 %v2985, 32
      %v2988 = vpop.permute.xlu0 %2987
      %v2990 = vmul.f32 %v2826, %v2988
      %v2991 = vmul.f32 %v2848, %v2988
      %v2992 = vmul.f32 %v2095, %v2988
      %v2993 = vmul.f32 %v2105, %v2988
      %v2994 = vmul.f32 %v2827, %v2988
      %v2995 = vmul.f32 %v2849, %v2988
      %v3002 = vrot.slane %v2990, 4
      %v3003 = vrot.slane %v2992, 4
      %v3004 = vsel %vm2838, %v3002, %v3003
      %v3005 = vrot.slane %v2991, 4
      %v3006 = vrot.slane %v2993, 4
      %v3007 = vsel %vm2838, %v3005, %v3006
      %v3008 = vrot.slane %v2994, 4
      %v3009 = vsel %vm2838, %v3003, %v3008
      %v3010 = vrot.slane %v2995, 4
      %v3011 = vsel %vm2838, %v3006, %v3010
      %3012 = vrot.lane.b32.xlu0 %v3004, 96
      %v3013 = vpop.permute.xlu0 %3012
      %3014 = vrot.lane.b32.xlu0 %v3007, 96
      %v3015 = vpop.permute.xlu0 %3014
      %3016 = vrot.lane.b32.xlu0 %v3009, 96
      %v3017 = vpop.permute.xlu0 %3016
      %3018 = vrot.lane.b32.xlu0 %v3011, 96
      %v3019 = vpop.permute.xlu0 %3018
      %v3020 = vsel %vm2221, %v3013, %v3015
      %v3021 = vsel %vm2221, %v3017, %v3019
      %v3024 = vadd.f32 %v2980, %v3020
      %v3025 = vadd.f32 %v2981, %v3021
      %v3026 = vld [vmem:[%s6] sm:$0x1]
      %v3028 = vlaneseq
      %v3029 = vshrl.u32 %v3028, 7
      %v3030 = vsub.s32 0, %v3029
      %v3031 = vrot.slane %v3026, %v3030
      %v3033 = vadd.f32 %v3024, %v3031
      %v3034 = vadd.f32 %v3025, %v3031
      %3035 = vst [vmem:[#allocation4] sm:$0xff] 0.0
      %3036 = vst [vmem:[#allocation4 + $0x8] sm:$0xff] 0.0
      %3037 = vst.msk [vmem:[#allocation4 + $0x10] sm:$0xff] %vm2054, 0.0
      %3038 = vst [vmem:[#allocation4 + $0x18] sm:$0x1] 0.0
      %3039 = vst [vmem:[#allocation4 + $0x20] sm:$0x1] 0.0
      %vm3040 = vcmask 122880
      %3041 = vst.msk [vmem:[#allocation4 + $0x28] sm:$0x1] %vm3040, 0.0
      %3042 = vst [vmem:[#allocation4 + $0x48] sm:$0xfe] 0.0
      %3043 = vst [vmem:[#allocation4 + $0x50] sm:$0xfe] 0.0
      %vm3044 = vcmask 130049
      %3045 = vst.msk [vmem:[#allocation4 + $0x58] sm:$0xfe] %vm3044, 0.0
      %3046 = vst [vmem:[#allocation4 + $0x60] sm:$0x3] 0.0
      %3047 = vst [vmem:[#allocation4 + $0x68] sm:$0x3] 0.0
      %3048 = vst.msk [vmem:[#allocation4 + $0x70] sm:$0x3] %vm2088, 0.0
      %vm3049 = vcmask 588800
      %3050 = vst.msk [vmem:[#allocation4] sm:$0xff] %vm3049, 0.0
      %3051 = vst.msk [vmem:[#allocation4 + $0x18] sm:$0xff] %vm3049, 0.0
      %3052 = vst.msk [vmem:[#allocation4 + $0x30] sm:$0xff] %vm3049, 0.0
      %3053 = vst.msk [vmem:[#allocation4 + $0x48] sm:$0xff] %vm3049, 0.0
      %vm3054 = vcmask 582656
      %3055 = vst.msk [vmem:[#allocation4 + $0x60] sm:$0x3] %vm3054, 0.0
      %vm3056 = vcmask 1048128
      %3057 = vst.msk [vmem:[#allocation4 + $0x8] sm:$0xff] %vm3056, 0.0
      %3058 = vst.msk [vmem:[#allocation4 + $0x10] sm:$0xff] %vm2054, 0.0
      %3059 = vst.msk [vmem:[#allocation4 + $0x20] sm:$0xff] %vm3056, 0.0
      %3060 = vst.msk [vmem:[#allocation4 + $0x28] sm:$0xff] %vm2054, 0.0
      %3061 = vst.msk [vmem:[#allocation4 + $0x38] sm:$0xff] %vm3056, 0.0
      %3062 = vst.msk [vmem:[#allocation4 + $0x40] sm:$0xff] %vm2054, 0.0
      %3063 = vst.msk [vmem:[#allocation4 + $0x50] sm:$0xff] %vm3056, 0.0
      %3064 = vst.msk [vmem:[#allocation4 + $0x58] sm:$0xff] %vm2054, 0.0
      %vm3065 = vcmask 1041984
      %3066 = vst.msk [vmem:[#allocation4 + $0x68] sm:$0x3] %vm3065, 0.0
      %3067 = vst.msk [vmem:[#allocation4 + $0x70] sm:$0x3] %vm2088, 0.0
      %v3070 = vrot.slane %v3033, 7
      %v3071 = vrot.slane %v3034, 7
      %v3072 = vsel %vm410, %v3070, %v3071
      %3073 = vrot.lane.b32.xlu0 %v3070, 72
      %v3074 = vpop.permute.xlu0 %3073
      %3075 = vrot.lane.b32.xlu0 %v3072, 72
      %v3076 = vpop.permute.xlu0 %3075
      %3077 = vrot.lane.b32.xlu0 %v3071, 72
      %v3078 = vpop.permute.xlu0 %3077
      %vm3082 = vcmask 1048129
      %3083 = vst.msk [vmem:[#allocation4 + $0x18] sm:$0xfe] %vm3082, %v3074
      %vm3084 = vcmask 588801
      %3085 = vst.msk [vmem:[#allocation4 + $0x20] sm:$0xfe] %vm3084, %v3074
      %3086 = vst.msk [vmem:[#allocation4 + $0x30] sm:$0xff] %vm3056, %v3076
      %3087 = vst.msk [vmem:[#allocation4 + $0x38] sm:$0xff] %vm3049, %v3076
      %vm3088 = vcmask 1040960
      %3089 = vst.msk [vmem:[#allocation4 + $0x48] sm:$0x1] %vm3088, %v3078
      %vm3090 = vcmask 581632
      %3091 = vst.msk [vmem:[#allocation4 + $0x50] sm:$0x1] %vm3090, %v3078
      %v3092 = vld [vmem:[%s7] sm:$0xff]
      %v3093 = vld [vmem:[%s7 + $0x8] sm:$0xff]
      %v3094 = vld [vmem:[%s7 + $0x10] sm:$0xff]
      %v3095 = vld [vmem:[%s7 + $0x18] sm:$0xff]
      %v3096 = vld [vmem:[%s7 + $0x20] sm:$0xff]
      %v3097 = vld [vmem:[%s7 + $0x28] sm:$0xff]
      %v3098 = vld [vmem:[%s7 + $0x30] sm:$0x1]
      %v3099 = vld [vmem:[#allocation4] sm:$0xff]
      %v3100 = vld [vmem:[#allocation4 + $0x18] sm:$0xff]
      %v3101 = vlaneseq
      %v3102 = vshrl.u32 %v3101, 7
      %v3103 = vsub.s32 0, %v3102
      %v3104 = vrot.slane %v3092, %v3103
      %v3105 = vmul.f32 %v3099, %v3104
      %v3106 = vmul.f32 %v3100, %v3104
      %v3107 = vadd.f32 %v3105, 0.0
      %v3108 = vadd.f32 %v3106, 0.0
      %v3109 = vld [vmem:[#allocation4 + $0x8] sm:$0xff]
      %v3110 = vld [vmem:[#allocation4 + $0x20] sm:$0xff]
      %v3111 = vlaneseq
      %v3112 = vshrl.u32 %v3111, 7
      %v3113 = vsub.s32 1, %v3112
      %v3114 = vrot.slane %v3092, %v3113
      %3116 = vrot.lane.b32.xlu0 %v3114, 24
      %v3117 = vpop.permute.xlu0 %3116
      %v3119 = vmul.f32 %v3099, %v3117
      %v3120 = vmul.f32 %v3109, %v3117
      %v3121 = vmul.f32 %v3100, %v3117
      %v3122 = vmul.f32 %v3110, %v3117
      %3127 = vrot.lane.b32.xlu0 %v3119, 104
      %v3128 = vpop.permute.xlu0 %3127
      %3129 = vrot.lane.b32.xlu0 %v3120, 104
      %v3130 = vpop.permute.xlu0 %3129
      %3131 = vrot.lane.b32.xlu0 %v3121, 104
      %v3132 = vpop.permute.xlu0 %3131
      %3133 = vrot.lane.b32.xlu0 %v3122, 104
      %v3134 = vpop.permute.xlu0 %3133
      %v3135 = vsel %vm2190, %v3128, %v3130
      %v3136 = vsel %vm2190, %v3132, %v3134
      %v3139 = vadd.f32 %v3107, %v3135
      %v3140 = vadd.f32 %v3108, %v3136
      %v3141 = vlaneseq
      %v3142 = vshrl.u32 %v3141, 7
      %v3143 = vsub.s32 2, %v3142
      %v3144 = vrot.slane %v3092, %v3143
      %3146 = vrot.lane.b32.xlu0 %v3144, 48
      %v3147 = vpop.permute.xlu0 %3146
      %v3149 = vmul.f32 %v3099, %v3147
      %v3150 = vmul.f32 %v3109, %v3147
      %v3151 = vmul.f32 %v3100, %v3147
      %v3152 = vmul.f32 %v3110, %v3147
      %3157 = vrot.lane.b32.xlu0 %v3149, 80
      %v3158 = vpop.permute.xlu0 %3157
      %3159 = vrot.lane.b32.xlu0 %v3150, 80
      %v3160 = vpop.permute.xlu0 %3159
      %3161 = vrot.lane.b32.xlu0 %v3151, 80
      %v3162 = vpop.permute.xlu0 %3161
      %3163 = vrot.lane.b32.xlu0 %v3152, 80
      %v3164 = vpop.permute.xlu0 %3163
      %vm3165 = vcmask 654336
      %v3166 = vsel %vm3165, %v3158, %v3160
      %v3167 = vsel %vm3165, %v3162, %v3164
      %v3170 = vadd.f32 %v3139, %v3166
      %v3171 = vadd.f32 %v3140, %v3167
      %v3172 = vlaneseq
      %v3173 = vshrl.u32 %v3172, 7
      %v3174 = vsub.s32 3, %v3173
      %v3175 = vrot.slane %v3092, %v3174
      %3177 = vrot.lane.b32.xlu0 %v3175, 72
      %v3178 = vpop.permute.xlu0 %3177
      %v3180 = vmul.f32 %v3099, %v3178
      %v3181 = vmul.f32 %v3109, %v3178
      %v3182 = vmul.f32 %v3100, %v3178
      %v3183 = vmul.f32 %v3110, %v3178
      %3188 = vrot.lane.b32.xlu0 %v3180, 56
      %v3189 = vpop.permute.xlu0 %3188
      %3190 = vrot.lane.b32.xlu0 %v3181, 56
      %v3191 = vpop.permute.xlu0 %3190
      %3192 = vrot.lane.b32.xlu0 %v3182, 56
      %v3193 = vpop.permute.xlu0 %3192
      %3194 = vrot.lane.b32.xlu0 %v3183, 56
      %v3195 = vpop.permute.xlu0 %3194
      %vm3196 = vcmask 457728
      %v3197 = vsel %vm3196, %v3189, %v3191
      %v3198 = vsel %vm3196, %v3193, %v3195
      %v3201 = vadd.f32 %v3170, %v3197
      %v3202 = vadd.f32 %v3171, %v3198
      %v3203 = vlaneseq
      %v3204 = vshrl.u32 %v3203, 7
      %v3205 = vsub.s32 4, %v3204
      %v3206 = vrot.slane %v3092, %v3205
      %3208 = vrot.lane.b32.xlu0 %v3206, 96
      %v3209 = vpop.permute.xlu0 %3208
      %v3211 = vmul.f32 %v3099, %v3209
      %v3212 = vmul.f32 %v3109, %v3209
      %v3213 = vmul.f32 %v3100, %v3209
      %v3214 = vmul.f32 %v3110, %v3209
      %3219 = vrot.lane.b32.xlu0 %v3211, 32
      %v3220 = vpop.permute.xlu0 %3219
      %3221 = vrot.lane.b32.xlu0 %v3212, 32
      %v3222 = vpop.permute.xlu0 %3221
      %3223 = vrot.lane.b32.xlu0 %v3213, 32
      %v3224 = vpop.permute.xlu0 %3223
      %3225 = vrot.lane.b32.xlu0 %v3214, 32
      %v3226 = vpop.permute.xlu0 %3225
      %vm3227 = vcmask 261120
      %v3228 = vsel %vm3227, %v3220, %v3222
      %v3229 = vsel %vm3227, %v3224, %v3226
      %v3232 = vadd.f32 %v3201, %v3228
      %v3233 = vadd.f32 %v3202, %v3229
      %v3234 = vlaneseq
      %v3235 = vshrl.u32 %v3234, 7
      %v3236 = vsub.s32 5, %v3235
      %v3237 = vrot.slane %v3092, %v3236
      %3239 = vrot.lane.b32.xlu0 %v3237, 120
      %v3240 = vpop.permute.xlu0 %3239
      %v3242 = vmul.f32 %v3099, %v3240
      %v3243 = vmul.f32 %v3109, %v3240
      %v3244 = vmul.f32 %v3100, %v3240
      %v3245 = vmul.f32 %v3110, %v3240
      %3250 = vrot.lane.b32.xlu0 %v3242, 8
      %v3251 = vpop.permute.xlu0 %3250
      %3252 = vrot.lane.b32.xlu0 %v3243, 8
      %v3253 = vpop.permute.xlu0 %3252
      %3254 = vrot.lane.b32.xlu0 %v3244, 8
      %v3255 = vpop.permute.xlu0 %3254
      %3256 = vrot.lane.b32.xlu0 %v3245, 8
      %v3257 = vpop.permute.xlu0 %3256
      %v3258 = vsel %vm398, %v3251, %v3253
      %v3259 = vsel %vm398, %v3255, %v3257
      %v3262 = vadd.f32 %v3232, %v3258
      %v3263 = vadd.f32 %v3233, %v3259
      %v3264 = vld [vmem:[#allocation4 + $0x10] sm:$0xff]
      %v3265 = vld [vmem:[#allocation4 + $0x28] sm:$0xff]
      %v3266 = vlaneseq
      %v3267 = vshrl.u32 %v3266, 7
      %v3268 = vsub.s32 6, %v3267
      %v3269 = vrot.slane %v3092, %v3268
      %3271 = vrot.lane.b32.xlu0 %v3269, 16
      %v3272 = vpop.permute.xlu0 %3271
      %v3274 = vmul.f32 %v3109, %v3272
      %v3275 = vmul.f32 %v3264, %v3272
      %v3276 = vmul.f32 %v3110, %v3272
      %v3277 = vmul.f32 %v3265, %v3272
      %3282 = vrot.lane.b32.xlu0 %v3274, 112
      %v3283 = vpop.permute.xlu0 %3282
      %3284 = vrot.lane.b32.xlu0 %v3275, 112
      %v3285 = vpop.permute.xlu0 %3284
      %3286 = vrot.lane.b32.xlu0 %v3276, 112
      %v3287 = vpop.permute.xlu0 %3286
      %3288 = vrot.lane.b32.xlu0 %v3277, 112
      %v3289 = vpop.permute.xlu0 %3288
      %v3290 = vsel %vm477, %v3283, %v3285
      %v3291 = vsel %vm477, %v3287, %v3289
      %v3294 = vadd.f32 %v3262, %v3290
      %v3295 = vadd.f32 %v3263, %v3291
      %v3296 = vld [vmem:[#allocation4] sm:$0xf8]
      %v3297 = vld [vmem:[#allocation4 + $0x30] sm:$0x7]
      %v3298 = vlaneseq
      %v3299 = vshrl.u32 %v3298, 7
      %v3300 = vsub.s32 7, %v3299
      %v3301 = vrot.slane %v3092, %v3300
      %v3302 = vmul.f32 %v3296, %v3301
      %v3303 = vmul.f32 %v3100, %v3301
      %v3304 = vmul.f32 %v3297, %v3301
      %v3308 = vrot.slane %v3302, 3
      %v3309 = vrot.slane %v3303, 3
      %v3310 = vsel %vm2638, %v3308, %v3309
      %v3311 = vrot.slane %v3304, 3
      %v3312 = vsel %vm2638, %v3309, %v3311
      %v3315 = vadd.f32 %v3294, %v3310
      %v3316 = vadd.f32 %v3295, %v3312
      %v3317 = vld [vmem:[#allocation4 + $0x8] sm:$0xf8]
      %v3318 = vld [vmem:[#allocation4 + $0x38] sm:$0x7]
      %v3319 = vlaneseq
      %v3320 = vshrl.u32 %v3319, 7
      %v3321 = vsub.s32 0, %v3320
      %v3322 = vrot.slane %v3093, %v3321
      %3324 = vrot.lane.b32.xlu0 %v3322, 24
      %v3325 = vpop.permute.xlu0 %3324
      %v3327 = vmul.f32 %v3296, %v3325
      %v3328 = vmul.f32 %v3317, %v3325
      %v3329 = vmul.f32 %v3100, %v3325
      %v3330 = vmul.f32 %v3110, %v3325
      %v3331 = vmul.f32 %v3297, %v3325
      %v3332 = vmul.f32 %v3318, %v3325
      %v3339 = vrot.slane %v3327, 3
      %v3340 = vrot.slane %v3329, 3
      %v3341 = vsel %vm2638, %v3339, %v3340
      %v3342 = vrot.slane %v3328, 3
      %v3343 = vrot.slane %v3330, 3
      %v3344 = vsel %vm2638, %v3342, %v3343
      %v3345 = vrot.slane %v3331, 3
      %v3346 = vsel %vm2638, %v3340, %v3345
      %v3347 = vrot.slane %v3332, 3
      %v3348 = vsel %vm2638, %v3343, %v3347
      %3349 = vrot.lane.b32.xlu0 %v3341, 104
      %v3350 = vpop.permute.xlu0 %3349
      %3351 = vrot.lane.b32.xlu0 %v3344, 104
      %v3352 = vpop.permute.xlu0 %3351
      %3353 = vrot.lane.b32.xlu0 %v3346, 104
      %v3354 = vpop.permute.xlu0 %3353
      %3355 = vrot.lane.b32.xlu0 %v3348, 104
      %v3356 = vpop.permute.xlu0 %3355
      %v3357 = vsel %vm2190, %v3350, %v3352
      %v3358 = vsel %vm2190, %v3354, %v3356
      %v3361 = vadd.f32 %v3315, %v3357
      %v3362 = vadd.f32 %v3316, %v3358
      %v3363 = vlaneseq
      %v3364 = vshrl.u32 %v3363, 7
      %v3365 = vsub.s32 1, %v3364
      %v3366 = vrot.slane %v3093, %v3365
      %3368 = vrot.lane.b32.xlu0 %v3366, 48
      %v3369 = vpop.permute.xlu0 %3368
      %v3371 = vmul.f32 %v3296, %v3369
      %v3372 = vmul.f32 %v3317, %v3369
      %v3373 = vmul.f32 %v3100, %v3369
      %v3374 = vmul.f32 %v3110, %v3369
      %v3375 = vmul.f32 %v3297, %v3369
      %v3376 = vmul.f32 %v3318, %v3369
      %v3383 = vrot.slane %v3371, 3
      %v3384 = vrot.slane %v3373, 3
      %v3385 = vsel %vm2638, %v3383, %v3384
      %v3386 = vrot.slane %v3372, 3
      %v3387 = vrot.slane %v3374, 3
      %v3388 = vsel %vm2638, %v3386, %v3387
      %v3389 = vrot.slane %v3375, 3
      %v3390 = vsel %vm2638, %v3384, %v3389
      %v3391 = vrot.slane %v3376, 3
      %v3392 = vsel %vm2638, %v3387, %v3391
      %3393 = vrot.lane.b32.xlu0 %v3385, 80
      %v3394 = vpop.permute.xlu0 %3393
      %3395 = vrot.lane.b32.xlu0 %v3388, 80
      %v3396 = vpop.permute.xlu0 %3395
      %3397 = vrot.lane.b32.xlu0 %v3390, 80
      %v3398 = vpop.permute.xlu0 %3397
      %3399 = vrot.lane.b32.xlu0 %v3392, 80
      %v3400 = vpop.permute.xlu0 %3399
      %v3401 = vsel %vm3165, %v3394, %v3396
      %v3402 = vsel %vm3165, %v3398, %v3400
      %v3405 = vadd.f32 %v3361, %v3401
      %v3406 = vadd.f32 %v3362, %v3402
      %v3407 = vlaneseq
      %v3408 = vshrl.u32 %v3407, 7
      %v3409 = vsub.s32 2, %v3408
      %v3410 = vrot.slane %v3093, %v3409
      %3412 = vrot.lane.b32.xlu0 %v3410, 72
      %v3413 = vpop.permute.xlu0 %3412
      %v3415 = vmul.f32 %v3296, %v3413
      %v3416 = vmul.f32 %v3317, %v3413
      %v3417 = vmul.f32 %v3100, %v3413
      %v3418 = vmul.f32 %v3110, %v3413
      %v3419 = vmul.f32 %v3297, %v3413
      %v3420 = vmul.f32 %v3318, %v3413
      %v3427 = vrot.slane %v3415, 3
      %v3428 = vrot.slane %v3417, 3
      %v3429 = vsel %vm2638, %v3427, %v3428
      %v3430 = vrot.slane %v3416, 3
      %v3431 = vrot.slane %v3418, 3
      %v3432 = vsel %vm2638, %v3430, %v3431
      %v3433 = vrot.slane %v3419, 3
      %v3434 = vsel %vm2638, %v3428, %v3433
      %v3435 = vrot.slane %v3420, 3
      %v3436 = vsel %vm2638, %v3431, %v3435
      %3437 = vrot.lane.b32.xlu0 %v3429, 56
      %v3438 = vpop.permute.xlu0 %3437
      %3439 = vrot.lane.b32.xlu0 %v3432, 56
      %v3440 = vpop.permute.xlu0 %3439
      %3441 = vrot.lane.b32.xlu0 %v3434, 56
      %v3442 = vpop.permute.xlu0 %3441
      %3443 = vrot.lane.b32.xlu0 %v3436, 56
      %v3444 = vpop.permute.xlu0 %3443
      %v3445 = vsel %vm3196, %v3438, %v3440
      %v3446 = vsel %vm3196, %v3442, %v3444
      %v3449 = vadd.f32 %v3405, %v3445
      %v3450 = vadd.f32 %v3406, %v3446
      %v3451 = vlaneseq
      %v3452 = vshrl.u32 %v3451, 7
      %v3453 = vsub.s32 3, %v3452
      %v3454 = vrot.slane %v3093, %v3453
      %3456 = vrot.lane.b32.xlu0 %v3454, 96
      %v3457 = vpop.permute.xlu0 %3456
      %v3459 = vmul.f32 %v3296, %v3457
      %v3460 = vmul.f32 %v3317, %v3457
      %v3461 = vmul.f32 %v3100, %v3457
      %v3462 = vmul.f32 %v3110, %v3457
      %v3463 = vmul.f32 %v3297, %v3457
      %v3464 = vmul.f32 %v3318, %v3457
      %v3471 = vrot.slane %v3459, 3
      %v3472 = vrot.slane %v3461, 3
      %v3473 = vsel %vm2638, %v3471, %v3472
      %v3474 = vrot.slane %v3460, 3
      %v3475 = vrot.slane %v3462, 3
      %v3476 = vsel %vm2638, %v3474, %v3475
      %v3477 = vrot.slane %v3463, 3
      %v3478 = vsel %vm2638, %v3472, %v3477
      %v3479 = vrot.slane %v3464, 3
      %v3480 = vsel %vm2638, %v3475, %v3479
      %3481 = vrot.lane.b32.xlu0 %v3473, 32
      %v3482 = vpop.permute.xlu0 %3481
      %3483 = vrot.lane.b32.xlu0 %v3476, 32
      %v3484 = vpop.permute.xlu0 %3483
      %3485 = vrot.lane.b32.xlu0 %v3478, 32
      %v3486 = vpop.permute.xlu0 %3485
      %3487 = vrot.lane.b32.xlu0 %v3480, 32
      %v3488 = vpop.permute.xlu0 %3487
      %v3489 = vsel %vm3227, %v3482, %v3484
      %v3490 = vsel %vm3227, %v3486, %v3488
      %v3493 = vadd.f32 %v3449, %v3489
      %v3494 = vadd.f32 %v3450, %v3490
      %v3495 = vlaneseq
      %v3496 = vshrl.u32 %v3495, 7
      %v3497 = vsub.s32 4, %v3496
      %v3498 = vrot.slane %v3093, %v3497
      %3500 = vrot.lane.b32.xlu0 %v3498, 120
      %v3501 = vpop.permute.xlu0 %3500
      %v3503 = vmul.f32 %v3296, %v3501
      %v3504 = vmul.f32 %v3317, %v3501
      %v3505 = vmul.f32 %v3100, %v3501
      %v3506 = vmul.f32 %v3110, %v3501
      %v3507 = vmul.f32 %v3297, %v3501
      %v3508 = vmul.f32 %v3318, %v3501
      %v3515 = vrot.slane %v3503, 3
      %v3516 = vrot.slane %v3505, 3
      %v3517 = vsel %vm2638, %v3515, %v3516
      %v3518 = vrot.slane %v3504, 3
      %v3519 = vrot.slane %v3506, 3
      %v3520 = vsel %vm2638, %v3518, %v3519
      %v3521 = vrot.slane %v3507, 3
      %v3522 = vsel %vm2638, %v3516, %v3521
      %v3523 = vrot.slane %v3508, 3
      %v3524 = vsel %vm2638, %v3519, %v3523
      %3525 = vrot.lane.b32.xlu0 %v3517, 8
      %v3526 = vpop.permute.xlu0 %3525
      %3527 = vrot.lane.b32.xlu0 %v3520, 8
      %v3528 = vpop.permute.xlu0 %3527
      %3529 = vrot.lane.b32.xlu0 %v3522, 8
      %v3530 = vpop.permute.xlu0 %3529
      %3531 = vrot.lane.b32.xlu0 %v3524, 8
      %v3532 = vpop.permute.xlu0 %3531
      %v3533 = vsel %vm398, %v3526, %v3528
      %v3534 = vsel %vm398, %v3530, %v3532
      %v3537 = vadd.f32 %v3493, %v3533
      %v3538 = vadd.f32 %v3494, %v3534
      %v3539 = vld [vmem:[#allocation4 + $0x10] sm:$0xf8]
      %v3540 = vld [vmem:[#allocation4 + $0x40] sm:$0x7]
      %v3541 = vlaneseq
      %v3542 = vshrl.u32 %v3541, 7
      %v3543 = vsub.s32 5, %v3542
      %v3544 = vrot.slane %v3093, %v3543
      %3546 = vrot.lane.b32.xlu0 %v3544, 16
      %v3547 = vpop.permute.xlu0 %3546
      %v3549 = vmul.f32 %v3317, %v3547
      %v3550 = vmul.f32 %v3539, %v3547
      %v3551 = vmul.f32 %v3110, %v3547
      %v3552 = vmul.f32 %v3265, %v3547
      %v3553 = vmul.f32 %v3318, %v3547
      %v3554 = vmul.f32 %v3540, %v3547
      %v3561 = vrot.slane %v3549, 3
      %v3562 = vrot.slane %v3551, 3
      %v3563 = vsel %vm2638, %v3561, %v3562
      %v3564 = vrot.slane %v3550, 3
      %v3565 = vrot.slane %v3552, 3
      %v3566 = vsel %vm2638, %v3564, %v3565
      %v3567 = vrot.slane %v3553, 3
      %v3568 = vsel %vm2638, %v3562, %v3567
      %v3569 = vrot.slane %v3554, 3
      %v3570 = vsel %vm2638, %v3565, %v3569
      %3571 = vrot.lane.b32.xlu0 %v3563, 112
      %v3572 = vpop.permute.xlu0 %3571
      %3573 = vrot.lane.b32.xlu0 %v3566, 112
      %v3574 = vpop.permute.xlu0 %3573
      %3575 = vrot.lane.b32.xlu0 %v3568, 112
      %v3576 = vpop.permute.xlu0 %3575
      %3577 = vrot.lane.b32.xlu0 %v3570, 112
      %v3578 = vpop.permute.xlu0 %3577
      %v3579 = vsel %vm477, %v3572, %v3574
      %v3580 = vsel %vm477, %v3576, %v3578
      %v3583 = vadd.f32 %v3537, %v3579
      %v3584 = vadd.f32 %v3538, %v3580
      %v3585 = vld [vmem:[#allocation4] sm:$0xc0]
      %v3586 = vld [vmem:[#allocation4 + $0x30] sm:$0x3f]
      %v3587 = vlaneseq
      %v3588 = vshrl.u32 %v3587, 7
      %v3589 = vsub.s32 6, %v3588
      %v3590 = vrot.slane %v3093, %v3589
      %v3591 = vmul.f32 %v3585, %v3590
      %v3592 = vmul.f32 %v3100, %v3590
      %v3593 = vmul.f32 %v3586, %v3590
      %v3597 = vrot.slane %v3591, 6
      %v3598 = vrot.slane %v3592, 6
      %v3599 = vsel %vm2066, %v3597, %v3598
      %v3600 = vrot.slane %v3593, 6
      %v3601 = vsel %vm2066, %v3598, %v3600
      %v3604 = vadd.f32 %v3583, %v3599
      %v3605 = vadd.f32 %v3584, %v3601
      %v3606 = vld [vmem:[#allocation4 + $0x8] sm:$0xc0]
      %v3607 = vld [vmem:[#allocation4 + $0x38] sm:$0x3f]
      %v3608 = vlaneseq
      %v3609 = vshrl.u32 %v3608, 7
      %v3610 = vsub.s32 7, %v3609
      %v3611 = vrot.slane %v3093, %v3610
      %3613 = vrot.lane.b32.xlu0 %v3611, 24
      %v3614 = vpop.permute.xlu0 %3613
      %v3616 = vmul.f32 %v3585, %v3614
      %v3617 = vmul.f32 %v3606, %v3614
      %v3618 = vmul.f32 %v3100, %v3614
      %v3619 = vmul.f32 %v3110, %v3614
      %v3620 = vmul.f32 %v3586, %v3614
      %v3621 = vmul.f32 %v3607, %v3614
      %v3628 = vrot.slane %v3616, 6
      %v3629 = vrot.slane %v3618, 6
      %v3630 = vsel %vm2066, %v3628, %v3629
      %v3631 = vrot.slane %v3617, 6
      %v3632 = vrot.slane %v3619, 6
      %v3633 = vsel %vm2066, %v3631, %v3632
      %v3634 = vrot.slane %v3620, 6
      %v3635 = vsel %vm2066, %v3629, %v3634
      %v3636 = vrot.slane %v3621, 6
      %v3637 = vsel %vm2066, %v3632, %v3636
      %3638 = vrot.lane.b32.xlu0 %v3630, 104
      %v3639 = vpop.permute.xlu0 %3638
      %3640 = vrot.lane.b32.xlu0 %v3633, 104
      %v3641 = vpop.permute.xlu0 %3640
      %3642 = vrot.lane.b32.xlu0 %v3635, 104
      %v3643 = vpop.permute.xlu0 %3642
      %3644 = vrot.lane.b32.xlu0 %v3637, 104
      %v3645 = vpop.permute.xlu0 %3644
      %v3646 = vsel %vm2190, %v3639, %v3641
      %v3647 = vsel %vm2190, %v3643, %v3645
      %v3650 = vadd.f32 %v3604, %v3646
      %v3651 = vadd.f32 %v3605, %v3647
      %v3652 = vlaneseq
      %v3653 = vshrl.u32 %v3652, 7
      %v3654 = vsub.s32 0, %v3653
      %v3655 = vrot.slane %v3094, %v3654
      %3657 = vrot.lane.b32.xlu0 %v3655, 48
      %v3658 = vpop.permute.xlu0 %3657
      %v3660 = vmul.f32 %v3585, %v3658
      %v3661 = vmul.f32 %v3606, %v3658
      %v3662 = vmul.f32 %v3100, %v3658
      %v3663 = vmul.f32 %v3110, %v3658
      %v3664 = vmul.f32 %v3586, %v3658
      %v3665 = vmul.f32 %v3607, %v3658
      %v3672 = vrot.slane %v3660, 6
      %v3673 = vrot.slane %v3662, 6
      %v3674 = vsel %vm2066, %v3672, %v3673
      %v3675 = vrot.slane %v3661, 6
      %v3676 = vrot.slane %v3663, 6
      %v3677 = vsel %vm2066, %v3675, %v3676
      %v3678 = vrot.slane %v3664, 6
      %v3679 = vsel %vm2066, %v3673, %v3678
      %v3680 = vrot.slane %v3665, 6
      %v3681 = vsel %vm2066, %v3676, %v3680
      %3682 = vrot.lane.b32.xlu0 %v3674, 80
      %v3683 = vpop.permute.xlu0 %3682
      %3684 = vrot.lane.b32.xlu0 %v3677, 80
      %v3685 = vpop.permute.xlu0 %3684
      %3686 = vrot.lane.b32.xlu0 %v3679, 80
      %v3687 = vpop.permute.xlu0 %3686
      %3688 = vrot.lane.b32.xlu0 %v3681, 80
      %v3689 = vpop.permute.xlu0 %3688
      %v3690 = vsel %vm3165, %v3683, %v3685
      %v3691 = vsel %vm3165, %v3687, %v3689
      %v3694 = vadd.f32 %v3650, %v3690
      %v3695 = vadd.f32 %v3651, %v3691
      %v3696 = vlaneseq
      %v3697 = vshrl.u32 %v3696, 7
      %v3698 = vsub.s32 1, %v3697
      %v3699 = vrot.slane %v3094, %v3698
      %3701 = vrot.lane.b32.xlu0 %v3699, 72
      %v3702 = vpop.permute.xlu0 %3701
      %v3704 = vmul.f32 %v3585, %v3702
      %v3705 = vmul.f32 %v3606, %v3702
      %v3706 = vmul.f32 %v3100, %v3702
      %v3707 = vmul.f32 %v3110, %v3702
      %v3708 = vmul.f32 %v3586, %v3702
      %v3709 = vmul.f32 %v3607, %v3702
      %v3716 = vrot.slane %v3704, 6
      %v3717 = vrot.slane %v3706, 6
      %v3718 = vsel %vm2066, %v3716, %v3717
      %v3719 = vrot.slane %v3705, 6
      %v3720 = vrot.slane %v3707, 6
      %v3721 = vsel %vm2066, %v3719, %v3720
      %v3722 = vrot.slane %v3708, 6
      %v3723 = vsel %vm2066, %v3717, %v3722
      %v3724 = vrot.slane %v3709, 6
      %v3725 = vsel %vm2066, %v3720, %v3724
      %3726 = vrot.lane.b32.xlu0 %v3718, 56
      %v3727 = vpop.permute.xlu0 %3726
      %3728 = vrot.lane.b32.xlu0 %v3721, 56
      %v3729 = vpop.permute.xlu0 %3728
      %3730 = vrot.lane.b32.xlu0 %v3723, 56
      %v3731 = vpop.permute.xlu0 %3730
      %3732 = vrot.lane.b32.xlu0 %v3725, 56
      %v3733 = vpop.permute.xlu0 %3732
      %v3734 = vsel %vm3196, %v3727, %v3729
      %v3735 = vsel %vm3196, %v3731, %v3733
      %v3738 = vadd.f32 %v3694, %v3734
      %v3739 = vadd.f32 %v3695, %v3735
      %v3740 = vlaneseq
      %v3741 = vshrl.u32 %v3740, 7
      %v3742 = vsub.s32 2, %v3741
      %v3743 = vrot.slane %v3094, %v3742
      %3745 = vrot.lane.b32.xlu0 %v3743, 96
      %v3746 = vpop.permute.xlu0 %3745
      %v3748 = vmul.f32 %v3585, %v3746
      %v3749 = vmul.f32 %v3606, %v3746
      %v3750 = vmul.f32 %v3100, %v3746
      %v3751 = vmul.f32 %v3110, %v3746
      %v3752 = vmul.f32 %v3586, %v3746
      %v3753 = vmul.f32 %v3607, %v3746
      %v3760 = vrot.slane %v3748, 6
      %v3761 = vrot.slane %v3750, 6
      %v3762 = vsel %vm2066, %v3760, %v3761
      %v3763 = vrot.slane %v3749, 6
      %v3764 = vrot.slane %v3751, 6
      %v3765 = vsel %vm2066, %v3763, %v3764
      %v3766 = vrot.slane %v3752, 6
      %v3767 = vsel %vm2066, %v3761, %v3766
      %v3768 = vrot.slane %v3753, 6
      %v3769 = vsel %vm2066, %v3764, %v3768
      %3770 = vrot.lane.b32.xlu0 %v3762, 32
      %v3771 = vpop.permute.xlu0 %3770
      %3772 = vrot.lane.b32.xlu0 %v3765, 32
      %v3773 = vpop.permute.xlu0 %3772
      %3774 = vrot.lane.b32.xlu0 %v3767, 32
      %v3775 = vpop.permute.xlu0 %3774
      %3776 = vrot.lane.b32.xlu0 %v3769, 32
      %v3777 = vpop.permute.xlu0 %3776
      %v3778 = vsel %vm3227, %v3771, %v3773
      %v3779 = vsel %vm3227, %v3775, %v3777
      %v3782 = vadd.f32 %v3738, %v3778
      %v3783 = vadd.f32 %v3739, %v3779
      %v3784 = vlaneseq
      %v3785 = vshrl.u32 %v3784, 7
      %v3786 = vsub.s32 3, %v3785
      %v3787 = vrot.slane %v3094, %v3786
      %3789 = vrot.lane.b32.xlu0 %v3787, 120
      %v3790 = vpop.permute.xlu0 %3789
      %v3792 = vmul.f32 %v3585, %v3790
      %v3793 = vmul.f32 %v3606, %v3790
      %v3794 = vmul.f32 %v3100, %v3790
      %v3795 = vmul.f32 %v3110, %v3790
      %v3796 = vmul.f32 %v3586, %v3790
      %v3797 = vmul.f32 %v3607, %v3790
      %v3804 = vrot.slane %v3792, 6
      %v3805 = vrot.slane %v3794, 6
      %v3806 = vsel %vm2066, %v3804, %v3805
      %v3807 = vrot.slane %v3793, 6
      %v3808 = vrot.slane %v3795, 6
      %v3809 = vsel %vm2066, %v3807, %v3808
      %v3810 = vrot.slane %v3796, 6
      %v3811 = vsel %vm2066, %v3805, %v3810
      %v3812 = vrot.slane %v3797, 6
      %v3813 = vsel %vm2066, %v3808, %v3812
      %3814 = vrot.lane.b32.xlu0 %v3806, 8
      %v3815 = vpop.permute.xlu0 %3814
      %3816 = vrot.lane.b32.xlu0 %v3809, 8
      %v3817 = vpop.permute.xlu0 %3816
      %3818 = vrot.lane.b32.xlu0 %v3811, 8
      %v3819 = vpop.permute.xlu0 %3818
      %3820 = vrot.lane.b32.xlu0 %v3813, 8
      %v3821 = vpop.permute.xlu0 %3820
      %v3822 = vsel %vm398, %v3815, %v3817
      %v3823 = vsel %vm398, %v3819, %v3821
      %v3826 = vadd.f32 %v3782, %v3822
      %v3827 = vadd.f32 %v3783, %v3823
      %v3828 = vld [vmem:[#allocation4 + $0x10] sm:$0xc0]
      %v3829 = vld [vmem:[#allocation4 + $0x40] sm:$0x3f]
      %v3830 = vlaneseq
      %v3831 = vshrl.u32 %v3830, 7
      %v3832 = vsub.s32 4, %v3831
      %v3833 = vrot.slane %v3094, %v3832
      %3835 = vrot.lane.b32.xlu0 %v3833, 16
      %v3836 = vpop.permute.xlu0 %3835
      %v3838 = vmul.f32 %v3606, %v3836
      %v3839 = vmul.f32 %v3828, %v3836
      %v3840 = vmul.f32 %v3110, %v3836
      %v3841 = vmul.f32 %v3265, %v3836
      %v3842 = vmul.f32 %v3607, %v3836
      %v3843 = vmul.f32 %v3829, %v3836
      %v3850 = vrot.slane %v3838, 6
      %v3851 = vrot.slane %v3840, 6
      %v3852 = vsel %vm2066, %v3850, %v3851
      %v3853 = vrot.slane %v3839, 6
      %v3854 = vrot.slane %v3841, 6
      %v3855 = vsel %vm2066, %v3853, %v3854
      %v3856 = vrot.slane %v3842, 6
      %v3857 = vsel %vm2066, %v3851, %v3856
      %v3858 = vrot.slane %v3843, 6
      %v3859 = vsel %vm2066, %v3854, %v3858
      %3860 = vrot.lane.b32.xlu0 %v3852, 112
      %v3861 = vpop.permute.xlu0 %3860
      %3862 = vrot.lane.b32.xlu0 %v3855, 112
      %v3863 = vpop.permute.xlu0 %3862
      %3864 = vrot.lane.b32.xlu0 %v3857, 112
      %v3865 = vpop.permute.xlu0 %3864
      %3866 = vrot.lane.b32.xlu0 %v3859, 112
      %v3867 = vpop.permute.xlu0 %3866
      %v3868 = vsel %vm477, %v3861, %v3863
      %v3869 = vsel %vm477, %v3865, %v3867
      %v3872 = vadd.f32 %v3826, %v3868
      %v3873 = vadd.f32 %v3827, %v3869
      %v3874 = vld [vmem:[#allocation4 + $0x18] sm:$0xfe]
      %v3875 = vld [vmem:[#allocation4 + $0x30] sm:$0xff]
      %v3876 = vld [vmem:[#allocation4 + $0x48] sm:$0x1]
      %v3877 = vlaneseq
      %v3878 = vshrl.u32 %v3877, 7
      %v3879 = vsub.s32 5, %v3878
      %v3880 = vrot.slane %v3094, %v3879
      %v3881 = vmul.f32 %v3874, %v3880
      %v3882 = vmul.f32 %v3875, %v3880
      %v3883 = vmul.f32 %v3876, %v3880
      %v3887 = vrot.slane %v3881, 1
      %v3888 = vrot.slane %v3882, 1
      %v3889 = vsel %vm490, %v3887, %v3888
      %v3890 = vrot.slane %v3883, 1
      %v3891 = vsel %vm490, %v3888, %v3890
      %v3894 = vadd.f32 %v3872, %v3889
      %v3895 = vadd.f32 %v3873, %v3891
      %v3896 = vld [vmem:[#allocation4 + $0x20] sm:$0xfe]
      %v3897 = vld [vmem:[#allocation4 + $0x38] sm:$0xff]
      %v3898 = vld [vmem:[#allocation4 + $0x50] sm:$0x1]
      %v3899 = vlaneseq
      %v3900 = vshrl.u32 %v3899, 7
      %v3901 = vsub.s32 6, %v3900
      %v3902 = vrot.slane %v3094, %v3901
      %3904 = vrot.lane.b32.xlu0 %v3902, 24
      %v3905 = vpop.permute.xlu0 %3904
      %v3907 = vmul.f32 %v3874, %v3905
      %v3908 = vmul.f32 %v3896, %v3905
      %v3909 = vmul.f32 %v3875, %v3905
      %v3910 = vmul.f32 %v3897, %v3905
      %v3911 = vmul.f32 %v3876, %v3905
      %v3912 = vmul.f32 %v3898, %v3905
      %v3919 = vrot.slane %v3907, 1
      %v3920 = vrot.slane %v3909, 1
      %v3921 = vsel %vm490, %v3919, %v3920
      %v3922 = vrot.slane %v3908, 1
      %v3923 = vrot.slane %v3910, 1
      %v3924 = vsel %vm490, %v3922, %v3923
      %v3925 = vrot.slane %v3911, 1
      %v3926 = vsel %vm490, %v3920, %v3925
      %v3927 = vrot.slane %v3912, 1
      %v3928 = vsel %vm490, %v3923, %v3927
      %3929 = vrot.lane.b32.xlu0 %v3921, 104
      %v3930 = vpop.permute.xlu0 %3929
      %3931 = vrot.lane.b32.xlu0 %v3924, 104
      %v3932 = vpop.permute.xlu0 %3931
      %3933 = vrot.lane.b32.xlu0 %v3926, 104
      %v3934 = vpop.permute.xlu0 %3933
      %3935 = vrot.lane.b32.xlu0 %v3928, 104
      %v3936 = vpop.permute.xlu0 %3935
      %v3937 = vsel %vm2190, %v3930, %v3932
      %v3938 = vsel %vm2190, %v3934, %v3936
      %v3941 = vadd.f32 %v3894, %v3937
      %v3942 = vadd.f32 %v3895, %v3938
      %v3943 = vlaneseq
      %v3944 = vshrl.u32 %v3943, 7
      %v3945 = vsub.s32 7, %v3944
      %v3946 = vrot.slane %v3094, %v3945
      %3948 = vrot.lane.b32.xlu0 %v3946, 48
      %v3949 = vpop.permute.xlu0 %3948
      %v3951 = vmul.f32 %v3874, %v3949
      %v3952 = vmul.f32 %v3896, %v3949
      %v3953 = vmul.f32 %v3875, %v3949
      %v3954 = vmul.f32 %v3897, %v3949
      %v3955 = vmul.f32 %v3876, %v3949
      %v3956 = vmul.f32 %v3898, %v3949
      %v3963 = vrot.slane %v3951, 1
      %v3964 = vrot.slane %v3953, 1
      %v3965 = vsel %vm490, %v3963, %v3964
      %v3966 = vrot.slane %v3952, 1
      %v3967 = vrot.slane %v3954, 1
      %v3968 = vsel %vm490, %v3966, %v3967
      %v3969 = vrot.slane %v3955, 1
      %v3970 = vsel %vm490, %v3964, %v3969
      %v3971 = vrot.slane %v3956, 1
      %v3972 = vsel %vm490, %v3967, %v3971
      %3973 = vrot.lane.b32.xlu0 %v3965, 80
      %v3974 = vpop.permute.xlu0 %3973
      %3975 = vrot.lane.b32.xlu0 %v3968, 80
      %v3976 = vpop.permute.xlu0 %3975
      %3977 = vrot.lane.b32.xlu0 %v3970, 80
      %v3978 = vpop.permute.xlu0 %3977
      %3979 = vrot.lane.b32.xlu0 %v3972, 80
      %v3980 = vpop.permute.xlu0 %3979
      %v3981 = vsel %vm3165, %v3974, %v3976
      %v3982 = vsel %vm3165, %v3978, %v3980
      %v3985 = vadd.f32 %v3941, %v3981
      %v3986 = vadd.f32 %v3942, %v3982
      %v3987 = vlaneseq
      %v3988 = vshrl.u32 %v3987, 7
      %v3989 = vsub.s32 0, %v3988
      %v3990 = vrot.slane %v3095, %v3989
      %3992 = vrot.lane.b32.xlu0 %v3990, 72
      %v3993 = vpop.permute.xlu0 %3992
      %v3995 = vmul.f32 %v3874, %v3993
      %v3996 = vmul.f32 %v3896, %v3993
      %v3997 = vmul.f32 %v3875, %v3993
      %v3998 = vmul.f32 %v3897, %v3993
      %v3999 = vmul.f32 %v3876, %v3993
      %v4000 = vmul.f32 %v3898, %v3993
      %v4007 = vrot.slane %v3995, 1
      %v4008 = vrot.slane %v3997, 1
      %v4009 = vsel %vm490, %v4007, %v4008
      %v4010 = vrot.slane %v3996, 1
      %v4011 = vrot.slane %v3998, 1
      %v4012 = vsel %vm490, %v4010, %v4011
      %v4013 = vrot.slane %v3999, 1
      %v4014 = vsel %vm490, %v4008, %v4013
      %v4015 = vrot.slane %v4000, 1
      %v4016 = vsel %vm490, %v4011, %v4015
      %4017 = vrot.lane.b32.xlu0 %v4009, 56
      %v4018 = vpop.permute.xlu0 %4017
      %4019 = vrot.lane.b32.xlu0 %v4012, 56
      %v4020 = vpop.permute.xlu0 %4019
      %4021 = vrot.lane.b32.xlu0 %v4014, 56
      %v4022 = vpop.permute.xlu0 %4021
      %4023 = vrot.lane.b32.xlu0 %v4016, 56
      %v4024 = vpop.permute.xlu0 %4023
      %v4025 = vsel %vm3196, %v4018, %v4020
      %v4026 = vsel %vm3196, %v4022, %v4024
      %v4029 = vadd.f32 %v3985, %v4025
      %v4030 = vadd.f32 %v3986, %v4026
      %v4031 = vlaneseq
      %v4032 = vshrl.u32 %v4031, 7
      %v4033 = vsub.s32 1, %v4032
      %v4034 = vrot.slane %v3095, %v4033
      %4036 = vrot.lane.b32.xlu0 %v4034, 96
      %v4037 = vpop.permute.xlu0 %4036
      %v4039 = vmul.f32 %v3874, %v4037
      %v4040 = vmul.f32 %v3896, %v4037
      %v4041 = vmul.f32 %v3875, %v4037
      %v4042 = vmul.f32 %v3897, %v4037
      %v4043 = vmul.f32 %v3876, %v4037
      %v4044 = vmul.f32 %v3898, %v4037
      %v4051 = vrot.slane %v4039, 1
      %v4052 = vrot.slane %v4041, 1
      %v4053 = vsel %vm490, %v4051, %v4052
      %v4054 = vrot.slane %v4040, 1
      %v4055 = vrot.slane %v4042, 1
      %v4056 = vsel %vm490, %v4054, %v4055
      %v4057 = vrot.slane %v4043, 1
      %v4058 = vsel %vm490, %v4052, %v4057
      %v4059 = vrot.slane %v4044, 1
      %v4060 = vsel %vm490, %v4055, %v4059
      %4061 = vrot.lane.b32.xlu0 %v4053, 32
      %v4062 = vpop.permute.xlu0 %4061
      %4063 = vrot.lane.b32.xlu0 %v4056, 32
      %v4064 = vpop.permute.xlu0 %4063
      %4065 = vrot.lane.b32.xlu0 %v4058, 32
      %v4066 = vpop.permute.xlu0 %4065
      %4067 = vrot.lane.b32.xlu0 %v4060, 32
      %v4068 = vpop.permute.xlu0 %4067
      %v4069 = vsel %vm3227, %v4062, %v4064
      %v4070 = vsel %vm3227, %v4066, %v4068
      %v4073 = vadd.f32 %v4029, %v4069
      %v4074 = vadd.f32 %v4030, %v4070
      %v4075 = vlaneseq
      %v4076 = vshrl.u32 %v4075, 7
      %v4077 = vsub.s32 2, %v4076
      %v4078 = vrot.slane %v3095, %v4077
      %4080 = vrot.lane.b32.xlu0 %v4078, 120
      %v4081 = vpop.permute.xlu0 %4080
      %v4083 = vmul.f32 %v3874, %v4081
      %v4084 = vmul.f32 %v3896, %v4081
      %v4085 = vmul.f32 %v3875, %v4081
      %v4086 = vmul.f32 %v3897, %v4081
      %v4087 = vmul.f32 %v3876, %v4081
      %v4088 = vmul.f32 %v3898, %v4081
      %v4095 = vrot.slane %v4083, 1
      %v4096 = vrot.slane %v4085, 1
      %v4097 = vsel %vm490, %v4095, %v4096
      %v4098 = vrot.slane %v4084, 1
      %v4099 = vrot.slane %v4086, 1
      %v4100 = vsel %vm490, %v4098, %v4099
      %v4101 = vrot.slane %v4087, 1
      %v4102 = vsel %vm490, %v4096, %v4101
      %v4103 = vrot.slane %v4088, 1
      %v4104 = vsel %vm490, %v4099, %v4103
      %4105 = vrot.lane.b32.xlu0 %v4097, 8
      %v4106 = vpop.permute.xlu0 %4105
      %4107 = vrot.lane.b32.xlu0 %v4100, 8
      %v4108 = vpop.permute.xlu0 %4107
      %4109 = vrot.lane.b32.xlu0 %v4102, 8
      %v4110 = vpop.permute.xlu0 %4109
      %4111 = vrot.lane.b32.xlu0 %v4104, 8
      %v4112 = vpop.permute.xlu0 %4111
      %v4113 = vsel %vm398, %v4106, %v4108
      %v4114 = vsel %vm398, %v4110, %v4112
      %v4117 = vadd.f32 %v4073, %v4113
      %v4118 = vadd.f32 %v4074, %v4114
      %v4119 = vld [vmem:[#allocation4 + $0x28] sm:$0xfe]
      %v4120 = vld [vmem:[#allocation4 + $0x40] sm:$0xff]
      %v4121 = vld [vmem:[#allocation4 + $0x58] sm:$0x1]
      %v4122 = vlaneseq
      %v4123 = vshrl.u32 %v4122, 7
      %v4124 = vsub.s32 3, %v4123
      %v4125 = vrot.slane %v3095, %v4124
      %4127 = vrot.lane.b32.xlu0 %v4125, 16
      %v4128 = vpop.permute.xlu0 %4127
      %v4130 = vmul.f32 %v3896, %v4128
      %v4131 = vmul.f32 %v4119, %v4128
      %v4132 = vmul.f32 %v3897, %v4128
      %v4133 = vmul.f32 %v4120, %v4128
      %v4134 = vmul.f32 %v3898, %v4128
      %v4135 = vmul.f32 %v4121, %v4128
      %v4142 = vrot.slane %v4130, 1
      %v4143 = vrot.slane %v4132, 1
      %v4144 = vsel %vm490, %v4142, %v4143
      %v4145 = vrot.slane %v4131, 1
      %v4146 = vrot.slane %v4133, 1
      %v4147 = vsel %vm490, %v4145, %v4146
      %v4148 = vrot.slane %v4134, 1
      %v4149 = vsel %vm490, %v4143, %v4148
      %v4150 = vrot.slane %v4135, 1
      %v4151 = vsel %vm490, %v4146, %v4150
      %4152 = vrot.lane.b32.xlu0 %v4144, 112
      %v4153 = vpop.permute.xlu0 %4152
      %4154 = vrot.lane.b32.xlu0 %v4147, 112
      %v4155 = vpop.permute.xlu0 %4154
      %4156 = vrot.lane.b32.xlu0 %v4149, 112
      %v4157 = vpop.permute.xlu0 %4156
      %4158 = vrot.lane.b32.xlu0 %v4151, 112
      %v4159 = vpop.permute.xlu0 %4158
      %v4160 = vsel %vm477, %v4153, %v4155
      %v4161 = vsel %vm477, %v4157, %v4159
      %v4164 = vadd.f32 %v4117, %v4160
      %v4165 = vadd.f32 %v4118, %v4161
      %v4166 = vld [vmem:[#allocation4 + $0x18] sm:$0xf0]
      %v4167 = vld [vmem:[#allocation4 + $0x48] sm:$0xf]
      %v4168 = vlaneseq
      %v4169 = vshrl.u32 %v4168, 7
      %v4170 = vsub.s32 4, %v4169
      %v4171 = vrot.slane %v3095, %v4170
      %v4172 = vmul.f32 %v4166, %v4171
      %v4173 = vmul.f32 %v3875, %v4171
      %v4174 = vmul.f32 %v4167, %v4171
      %v4178 = vrot.slane %v4172, 4
      %v4179 = vrot.slane %v4173, 4
      %v4180 = vsel %vm2838, %v4178, %v4179
      %v4181 = vrot.slane %v4174, 4
      %v4182 = vsel %vm2838, %v4179, %v4181
      %v4185 = vadd.f32 %v4164, %v4180
      %v4186 = vadd.f32 %v4165, %v4182
      %v4187 = vld [vmem:[#allocation4 + $0x20] sm:$0xf0]
      %v4188 = vld [vmem:[#allocation4 + $0x50] sm:$0xf]
      %v4189 = vlaneseq
      %v4190 = vshrl.u32 %v4189, 7
      %v4191 = vsub.s32 5, %v4190
      %v4192 = vrot.slane %v3095, %v4191
      %4194 = vrot.lane.b32.xlu0 %v4192, 24
      %v4195 = vpop.permute.xlu0 %4194
      %v4197 = vmul.f32 %v4166, %v4195
      %v4198 = vmul.f32 %v4187, %v4195
      %v4199 = vmul.f32 %v3875, %v4195
      %v4200 = vmul.f32 %v3897, %v4195
      %v4201 = vmul.f32 %v4167, %v4195
      %v4202 = vmul.f32 %v4188, %v4195
      %v4209 = vrot.slane %v4197, 4
      %v4210 = vrot.slane %v4199, 4
      %v4211 = vsel %vm2838, %v4209, %v4210
      %v4212 = vrot.slane %v4198, 4
      %v4213 = vrot.slane %v4200, 4
      %v4214 = vsel %vm2838, %v4212, %v4213
      %v4215 = vrot.slane %v4201, 4
      %v4216 = vsel %vm2838, %v4210, %v4215
      %v4217 = vrot.slane %v4202, 4
      %v4218 = vsel %vm2838, %v4213, %v4217
      %4219 = vrot.lane.b32.xlu0 %v4211, 104
      %v4220 = vpop.permute.xlu0 %4219
      %4221 = vrot.lane.b32.xlu0 %v4214, 104
      %v4222 = vpop.permute.xlu0 %4221
      %4223 = vrot.lane.b32.xlu0 %v4216, 104
      %v4224 = vpop.permute.xlu0 %4223
      %4225 = vrot.lane.b32.xlu0 %v4218, 104
      %v4226 = vpop.permute.xlu0 %4225
      %v4227 = vsel %vm2190, %v4220, %v4222
      %v4228 = vsel %vm2190, %v4224, %v4226
      %v4231 = vadd.f32 %v4185, %v4227
      %v4232 = vadd.f32 %v4186, %v4228
      %v4233 = vlaneseq
      %v4234 = vshrl.u32 %v4233, 7
      %v4235 = vsub.s32 6, %v4234
      %v4236 = vrot.slane %v3095, %v4235
      %4238 = vrot.lane.b32.xlu0 %v4236, 48
      %v4239 = vpop.permute.xlu0 %4238
      %v4241 = vmul.f32 %v4166, %v4239
      %v4242 = vmul.f32 %v4187, %v4239
      %v4243 = vmul.f32 %v3875, %v4239
      %v4244 = vmul.f32 %v3897, %v4239
      %v4245 = vmul.f32 %v4167, %v4239
      %v4246 = vmul.f32 %v4188, %v4239
      %v4253 = vrot.slane %v4241, 4
      %v4254 = vrot.slane %v4243, 4
      %v4255 = vsel %vm2838, %v4253, %v4254
      %v4256 = vrot.slane %v4242, 4
      %v4257 = vrot.slane %v4244, 4
      %v4258 = vsel %vm2838, %v4256, %v4257
      %v4259 = vrot.slane %v4245, 4
      %v4260 = vsel %vm2838, %v4254, %v4259
      %v4261 = vrot.slane %v4246, 4
      %v4262 = vsel %vm2838, %v4257, %v4261
      %4263 = vrot.lane.b32.xlu0 %v4255, 80
      %v4264 = vpop.permute.xlu0 %4263
      %4265 = vrot.lane.b32.xlu0 %v4258, 80
      %v4266 = vpop.permute.xlu0 %4265
      %4267 = vrot.lane.b32.xlu0 %v4260, 80
      %v4268 = vpop.permute.xlu0 %4267
      %4269 = vrot.lane.b32.xlu0 %v4262, 80
      %v4270 = vpop.permute.xlu0 %4269
      %v4271 = vsel %vm3165, %v4264, %v4266
      %v4272 = vsel %vm3165, %v4268, %v4270
      %v4275 = vadd.f32 %v4231, %v4271
      %v4276 = vadd.f32 %v4232, %v4272
      %v4277 = vlaneseq
      %v4278 = vshrl.u32 %v4277, 7
      %v4279 = vsub.s32 7, %v4278
      %v4280 = vrot.slane %v3095, %v4279
      %4282 = vrot.lane.b32.xlu0 %v4280, 72
      %v4283 = vpop.permute.xlu0 %4282
      %v4285 = vmul.f32 %v4166, %v4283
      %v4286 = vmul.f32 %v4187, %v4283
      %v4287 = vmul.f32 %v3875, %v4283
      %v4288 = vmul.f32 %v3897, %v4283
      %v4289 = vmul.f32 %v4167, %v4283
      %v4290 = vmul.f32 %v4188, %v4283
      %v4297 = vrot.slane %v4285, 4
      %v4298 = vrot.slane %v4287, 4
      %v4299 = vsel %vm2838, %v4297, %v4298
      %v4300 = vrot.slane %v4286, 4
      %v4301 = vrot.slane %v4288, 4
      %v4302 = vsel %vm2838, %v4300, %v4301
      %v4303 = vrot.slane %v4289, 4
      %v4304 = vsel %vm2838, %v4298, %v4303
      %v4305 = vrot.slane %v4290, 4
      %v4306 = vsel %vm2838, %v4301, %v4305
      %4307 = vrot.lane.b32.xlu0 %v4299, 56
      %v4308 = vpop.permute.xlu0 %4307
      %4309 = vrot.lane.b32.xlu0 %v4302, 56
      %v4310 = vpop.permute.xlu0 %4309
      %4311 = vrot.lane.b32.xlu0 %v4304, 56
      %v4312 = vpop.permute.xlu0 %4311
      %4313 = vrot.lane.b32.xlu0 %v4306, 56
      %v4314 = vpop.permute.xlu0 %4313
      %v4315 = vsel %vm3196, %v4308, %v4310
      %v4316 = vsel %vm3196, %v4312, %v4314
      %v4319 = vadd.f32 %v4275, %v4315
      %v4320 = vadd.f32 %v4276, %v4316
      %v4321 = vlaneseq
      %v4322 = vshrl.u32 %v4321, 7
      %v4323 = vsub.s32 0, %v4322
      %v4324 = vrot.slane %v3096, %v4323
      %4326 = vrot.lane.b32.xlu0 %v4324, 96
      %v4327 = vpop.permute.xlu0 %4326
      %v4329 = vmul.f32 %v4166, %v4327
      %v4330 = vmul.f32 %v4187, %v4327
      %v4331 = vmul.f32 %v3875, %v4327
      %v4332 = vmul.f32 %v3897, %v4327
      %v4333 = vmul.f32 %v4167, %v4327
      %v4334 = vmul.f32 %v4188, %v4327
      %v4341 = vrot.slane %v4329, 4
      %v4342 = vrot.slane %v4331, 4
      %v4343 = vsel %vm2838, %v4341, %v4342
      %v4344 = vrot.slane %v4330, 4
      %v4345 = vrot.slane %v4332, 4
      %v4346 = vsel %vm2838, %v4344, %v4345
      %v4347 = vrot.slane %v4333, 4
      %v4348 = vsel %vm2838, %v4342, %v4347
      %v4349 = vrot.slane %v4334, 4
      %v4350 = vsel %vm2838, %v4345, %v4349
      %4351 = vrot.lane.b32.xlu0 %v4343, 32
      %v4352 = vpop.permute.xlu0 %4351
      %4353 = vrot.lane.b32.xlu0 %v4346, 32
      %v4354 = vpop.permute.xlu0 %4353
      %4355 = vrot.lane.b32.xlu0 %v4348, 32
      %v4356 = vpop.permute.xlu0 %4355
      %4357 = vrot.lane.b32.xlu0 %v4350, 32
      %v4358 = vpop.permute.xlu0 %4357
      %v4359 = vsel %vm3227, %v4352, %v4354
      %v4360 = vsel %vm3227, %v4356, %v4358
      %v4363 = vadd.f32 %v4319, %v4359
      %v4364 = vadd.f32 %v4320, %v4360
      %v4365 = vlaneseq
      %v4366 = vshrl.u32 %v4365, 7
      %v4367 = vsub.s32 1, %v4366
      %v4368 = vrot.slane %v3096, %v4367
      %4370 = vrot.lane.b32.xlu0 %v4368, 120
      %v4371 = vpop.permute.xlu0 %4370
      %v4373 = vmul.f32 %v4166, %v4371
      %v4374 = vmul.f32 %v4187, %v4371
      %v4375 = vmul.f32 %v3875, %v4371
      %v4376 = vmul.f32 %v3897, %v4371
      %v4377 = vmul.f32 %v4167, %v4371
      %v4378 = vmul.f32 %v4188, %v4371
      %v4385 = vrot.slane %v4373, 4
      %v4386 = vrot.slane %v4375, 4
      %v4387 = vsel %vm2838, %v4385, %v4386
      %v4388 = vrot.slane %v4374, 4
      %v4389 = vrot.slane %v4376, 4
      %v4390 = vsel %vm2838, %v4388, %v4389
      %v4391 = vrot.slane %v4377, 4
      %v4392 = vsel %vm2838, %v4386, %v4391
      %v4393 = vrot.slane %v4378, 4
      %v4394 = vsel %vm2838, %v4389, %v4393
      %4395 = vrot.lane.b32.xlu0 %v4387, 8
      %v4396 = vpop.permute.xlu0 %4395
      %4397 = vrot.lane.b32.xlu0 %v4390, 8
      %v4398 = vpop.permute.xlu0 %4397
      %4399 = vrot.lane.b32.xlu0 %v4392, 8
      %v4400 = vpop.permute.xlu0 %4399
      %4401 = vrot.lane.b32.xlu0 %v4394, 8
      %v4402 = vpop.permute.xlu0 %4401
      %v4403 = vsel %vm398, %v4396, %v4398
      %v4404 = vsel %vm398, %v4400, %v4402
      %v4407 = vadd.f32 %v4363, %v4403
      %v4408 = vadd.f32 %v4364, %v4404
      %v4409 = vld [vmem:[#allocation4 + $0x28] sm:$0xf0]
      %v4410 = vld [vmem:[#allocation4 + $0x58] sm:$0xf]
      %v4411 = vlaneseq
      %v4412 = vshrl.u32 %v4411, 7
      %v4413 = vsub.s32 2, %v4412
      %v4414 = vrot.slane %v3096, %v4413
      %4416 = vrot.lane.b32.xlu0 %v4414, 16
      %v4417 = vpop.permute.xlu0 %4416
      %v4419 = vmul.f32 %v4187, %v4417
      %v4420 = vmul.f32 %v4409, %v4417
      %v4421 = vmul.f32 %v3897, %v4417
      %v4422 = vmul.f32 %v4120, %v4417
      %v4423 = vmul.f32 %v4188, %v4417
      %v4424 = vmul.f32 %v4410, %v4417
      %v4431 = vrot.slane %v4419, 4
      %v4432 = vrot.slane %v4421, 4
      %v4433 = vsel %vm2838, %v4431, %v4432
      %v4434 = vrot.slane %v4420, 4
      %v4435 = vrot.slane %v4422, 4
      %v4436 = vsel %vm2838, %v4434, %v4435
      %v4437 = vrot.slane %v4423, 4
      %v4438 = vsel %vm2838, %v4432, %v4437
      %v4439 = vrot.slane %v4424, 4
      %v4440 = vsel %vm2838, %v4435, %v4439
      %4441 = vrot.lane.b32.xlu0 %v4433, 112
      %v4442 = vpop.permute.xlu0 %4441
      %4443 = vrot.lane.b32.xlu0 %v4436, 112
      %v4444 = vpop.permute.xlu0 %4443
      %4445 = vrot.lane.b32.xlu0 %v4438, 112
      %v4446 = vpop.permute.xlu0 %4445
      %4447 = vrot.lane.b32.xlu0 %v4440, 112
      %v4448 = vpop.permute.xlu0 %4447
      %v4449 = vsel %vm477, %v4442, %v4444
      %v4450 = vsel %vm477, %v4446, %v4448
      %v4453 = vadd.f32 %v4407, %v4449
      %v4454 = vadd.f32 %v4408, %v4450
      %v4455 = vld [vmem:[#allocation4 + $0x18] sm:$0x80]
      %v4456 = vld [vmem:[#allocation4 + $0x48] sm:$0x7f]
      %v4457 = vlaneseq
      %v4458 = vshrl.u32 %v4457, 7
      %v4459 = vsub.s32 3, %v4458
      %v4460 = vrot.slane %v3096, %v4459
      %v4461 = vmul.f32 %v4455, %v4460
      %v4462 = vmul.f32 %v3875, %v4460
      %v4463 = vmul.f32 %v4456, %v4460
      %v4467 = vrot.slane %v4461, 7
      %v4468 = vrot.slane %v4462, 7
      %v4469 = vsel %vm410, %v4467, %v4468
      %v4470 = vrot.slane %v4463, 7
      %v4471 = vsel %vm410, %v4468, %v4470
      %v4474 = vadd.f32 %v4453, %v4469
      %v4475 = vadd.f32 %v4454, %v4471
      %v4476 = vld [vmem:[#allocation4 + $0x20] sm:$0x80]
      %v4477 = vld [vmem:[#allocation4 + $0x50] sm:$0x7f]
      %v4478 = vlaneseq
      %v4479 = vshrl.u32 %v4478, 7
      %v4480 = vsub.s32 4, %v4479
      %v4481 = vrot.slane %v3096, %v4480
      %4483 = vrot.lane.b32.xlu0 %v4481, 24
      %v4484 = vpop.permute.xlu0 %4483
      %v4486 = vmul.f32 %v4455, %v4484
      %v4487 = vmul.f32 %v4476, %v4484
      %v4488 = vmul.f32 %v3875, %v4484
      %v4489 = vmul.f32 %v3897, %v4484
      %v4490 = vmul.f32 %v4456, %v4484
      %v4491 = vmul.f32 %v4477, %v4484
      %v4498 = vrot.slane %v4486, 7
      %v4499 = vrot.slane %v4488, 7
      %v4500 = vsel %vm410, %v4498, %v4499
      %v4501 = vrot.slane %v4487, 7
      %v4502 = vrot.slane %v4489, 7
      %v4503 = vsel %vm410, %v4501, %v4502
      %v4504 = vrot.slane %v4490, 7
      %v4505 = vsel %vm410, %v4499, %v4504
      %v4506 = vrot.slane %v4491, 7
      %v4507 = vsel %vm410, %v4502, %v4506
      %4508 = vrot.lane.b32.xlu0 %v4500, 104
      %v4509 = vpop.permute.xlu0 %4508
      %4510 = vrot.lane.b32.xlu0 %v4503, 104
      %v4511 = vpop.permute.xlu0 %4510
      %4512 = vrot.lane.b32.xlu0 %v4505, 104
      %v4513 = vpop.permute.xlu0 %4512
      %4514 = vrot.lane.b32.xlu0 %v4507, 104
      %v4515 = vpop.permute.xlu0 %4514
      %v4516 = vsel %vm2190, %v4509, %v4511
      %v4517 = vsel %vm2190, %v4513, %v4515
      %v4520 = vadd.f32 %v4474, %v4516
      %v4521 = vadd.f32 %v4475, %v4517
      %v4522 = vlaneseq
      %v4523 = vshrl.u32 %v4522, 7
      %v4524 = vsub.s32 5, %v4523
      %v4525 = vrot.slane %v3096, %v4524
      %4527 = vrot.lane.b32.xlu0 %v4525, 48
      %v4528 = vpop.permute.xlu0 %4527
      %v4530 = vmul.f32 %v4455, %v4528
      %v4531 = vmul.f32 %v4476, %v4528
      %v4532 = vmul.f32 %v3875, %v4528
      %v4533 = vmul.f32 %v3897, %v4528
      %v4534 = vmul.f32 %v4456, %v4528
      %v4535 = vmul.f32 %v4477, %v4528
      %v4542 = vrot.slane %v4530, 7
      %v4543 = vrot.slane %v4532, 7
      %v4544 = vsel %vm410, %v4542, %v4543
      %v4545 = vrot.slane %v4531, 7
      %v4546 = vrot.slane %v4533, 7
      %v4547 = vsel %vm410, %v4545, %v4546
      %v4548 = vrot.slane %v4534, 7
      %v4549 = vsel %vm410, %v4543, %v4548
      %v4550 = vrot.slane %v4535, 7
      %v4551 = vsel %vm410, %v4546, %v4550
      %4552 = vrot.lane.b32.xlu0 %v4544, 80
      %v4553 = vpop.permute.xlu0 %4552
      %4554 = vrot.lane.b32.xlu0 %v4547, 80
      %v4555 = vpop.permute.xlu0 %4554
      %4556 = vrot.lane.b32.xlu0 %v4549, 80
      %v4557 = vpop.permute.xlu0 %4556
      %4558 = vrot.lane.b32.xlu0 %v4551, 80
      %v4559 = vpop.permute.xlu0 %4558
      %v4560 = vsel %vm3165, %v4553, %v4555
      %v4561 = vsel %vm3165, %v4557, %v4559
      %v4564 = vadd.f32 %v4520, %v4560
      %v4565 = vadd.f32 %v4521, %v4561
      %v4566 = vlaneseq
      %v4567 = vshrl.u32 %v4566, 7
      %v4568 = vsub.s32 6, %v4567
      %v4569 = vrot.slane %v3096, %v4568
      %4571 = vrot.lane.b32.xlu0 %v4569, 72
      %v4572 = vpop.permute.xlu0 %4571
      %v4574 = vmul.f32 %v4455, %v4572
      %v4575 = vmul.f32 %v4476, %v4572
      %v4576 = vmul.f32 %v3875, %v4572
      %v4577 = vmul.f32 %v3897, %v4572
      %v4578 = vmul.f32 %v4456, %v4572
      %v4579 = vmul.f32 %v4477, %v4572
      %v4586 = vrot.slane %v4574, 7
      %v4587 = vrot.slane %v4576, 7
      %v4588 = vsel %vm410, %v4586, %v4587
      %v4589 = vrot.slane %v4575, 7
      %v4590 = vrot.slane %v4577, 7
      %v4591 = vsel %vm410, %v4589, %v4590
      %v4592 = vrot.slane %v4578, 7
      %v4593 = vsel %vm410, %v4587, %v4592
      %v4594 = vrot.slane %v4579, 7
      %v4595 = vsel %vm410, %v4590, %v4594
      %4596 = vrot.lane.b32.xlu0 %v4588, 56
      %v4597 = vpop.permute.xlu0 %4596
      %4598 = vrot.lane.b32.xlu0 %v4591, 56
      %v4599 = vpop.permute.xlu0 %4598
      %4600 = vrot.lane.b32.xlu0 %v4593, 56
      %v4601 = vpop.permute.xlu0 %4600
      %4602 = vrot.lane.b32.xlu0 %v4595, 56
      %v4603 = vpop.permute.xlu0 %4602
      %v4604 = vsel %vm3196, %v4597, %v4599
      %v4605 = vsel %vm3196, %v4601, %v4603
      %v4608 = vadd.f32 %v4564, %v4604
      %v4609 = vadd.f32 %v4565, %v4605
      %v4610 = vlaneseq
      %v4611 = vshrl.u32 %v4610, 7
      %v4612 = vsub.s32 7, %v4611
      %v4613 = vrot.slane %v3096, %v4612
      %4615 = vrot.lane.b32.xlu0 %v4613, 96
      %v4616 = vpop.permute.xlu0 %4615
      %v4618 = vmul.f32 %v4455, %v4616
      %v4619 = vmul.f32 %v4476, %v4616
      %v4620 = vmul.f32 %v3875, %v4616
      %v4621 = vmul.f32 %v3897, %v4616
      %v4622 = vmul.f32 %v4456, %v4616
      %v4623 = vmul.f32 %v4477, %v4616
      %v4630 = vrot.slane %v4618, 7
      %v4631 = vrot.slane %v4620, 7
      %v4632 = vsel %vm410, %v4630, %v4631
      %v4633 = vrot.slane %v4619, 7
      %v4634 = vrot.slane %v4621, 7
      %v4635 = vsel %vm410, %v4633, %v4634
      %v4636 = vrot.slane %v4622, 7
      %v4637 = vsel %vm410, %v4631, %v4636
      %v4638 = vrot.slane %v4623, 7
      %v4639 = vsel %vm410, %v4634, %v4638
      %4640 = vrot.lane.b32.xlu0 %v4632, 32
      %v4641 = vpop.permute.xlu0 %4640
      %4642 = vrot.lane.b32.xlu0 %v4635, 32
      %v4643 = vpop.permute.xlu0 %4642
      %4644 = vrot.lane.b32.xlu0 %v4637, 32
      %v4645 = vpop.permute.xlu0 %4644
      %4646 = vrot.lane.b32.xlu0 %v4639, 32
      %v4647 = vpop.permute.xlu0 %4646
      %v4648 = vsel %vm3227, %v4641, %v4643
      %v4649 = vsel %vm3227, %v4645, %v4647
      %v4652 = vadd.f32 %v4608, %v4648
      %v4653 = vadd.f32 %v4609, %v4649
      %v4654 = vlaneseq
      %v4655 = vshrl.u32 %v4654, 7
      %v4656 = vsub.s32 0, %v4655
      %v4657 = vrot.slane %v3097, %v4656
      %4659 = vrot.lane.b32.xlu0 %v4657, 120
      %v4660 = vpop.permute.xlu0 %4659
      %v4662 = vmul.f32 %v4455, %v4660
      %v4663 = vmul.f32 %v4476, %v4660
      %v4664 = vmul.f32 %v3875, %v4660
      %v4665 = vmul.f32 %v3897, %v4660
      %v4666 = vmul.f32 %v4456, %v4660
      %v4667 = vmul.f32 %v4477, %v4660
      %v4674 = vrot.slane %v4662, 7
      %v4675 = vrot.slane %v4664, 7
      %v4676 = vsel %vm410, %v4674, %v4675
      %v4677 = vrot.slane %v4663, 7
      %v4678 = vrot.slane %v4665, 7
      %v4679 = vsel %vm410, %v4677, %v4678
      %v4680 = vrot.slane %v4666, 7
      %v4681 = vsel %vm410, %v4675, %v4680
      %v4682 = vrot.slane %v4667, 7
      %v4683 = vsel %vm410, %v4678, %v4682
      %4684 = vrot.lane.b32.xlu0 %v4676, 8
      %v4685 = vpop.permute.xlu0 %4684
      %4686 = vrot.lane.b32.xlu0 %v4679, 8
      %v4687 = vpop.permute.xlu0 %4686
      %4688 = vrot.lane.b32.xlu0 %v4681, 8
      %v4689 = vpop.permute.xlu0 %4688
      %4690 = vrot.lane.b32.xlu0 %v4683, 8
      %v4691 = vpop.permute.xlu0 %4690
      %v4692 = vsel %vm398, %v4685, %v4687
      %v4693 = vsel %vm398, %v4689, %v4691
      %v4696 = vadd.f32 %v4652, %v4692
      %v4697 = vadd.f32 %v4653, %v4693
      %v4698 = vld [vmem:[#allocation4 + $0x28] sm:$0x80]
      %v4699 = vld [vmem:[#allocation4 + $0x58] sm:$0x7f]
      %v4700 = vlaneseq
      %v4701 = vshrl.u32 %v4700, 7
      %v4702 = vsub.s32 1, %v4701
      %v4703 = vrot.slane %v3097, %v4702
      %4705 = vrot.lane.b32.xlu0 %v4703, 16
      %v4706 = vpop.permute.xlu0 %4705
      %v4708 = vmul.f32 %v4476, %v4706
      %v4709 = vmul.f32 %v4698, %v4706
      %v4710 = vmul.f32 %v3897, %v4706
      %v4711 = vmul.f32 %v4120, %v4706
      %v4712 = vmul.f32 %v4477, %v4706
      %v4713 = vmul.f32 %v4699, %v4706
      %v4720 = vrot.slane %v4708, 7
      %v4721 = vrot.slane %v4710, 7
      %v4722 = vsel %vm410, %v4720, %v4721
      %v4723 = vrot.slane %v4709, 7
      %v4724 = vrot.slane %v4711, 7
      %v4725 = vsel %vm410, %v4723, %v4724
      %v4726 = vrot.slane %v4712, 7
      %v4727 = vsel %vm410, %v4721, %v4726
      %v4728 = vrot.slane %v4713, 7
      %v4729 = vsel %vm410, %v4724, %v4728
      %4730 = vrot.lane.b32.xlu0 %v4722, 112
      %v4731 = vpop.permute.xlu0 %4730
      %4732 = vrot.lane.b32.xlu0 %v4725, 112
      %v4733 = vpop.permute.xlu0 %4732
      %4734 = vrot.lane.b32.xlu0 %v4727, 112
      %v4735 = vpop.permute.xlu0 %4734
      %4736 = vrot.lane.b32.xlu0 %v4729, 112
      %v4737 = vpop.permute.xlu0 %4736
      %v4738 = vsel %vm477, %v4731, %v4733
      %v4739 = vsel %vm477, %v4735, %v4737
      %v4742 = vadd.f32 %v4696, %v4738
      %v4743 = vadd.f32 %v4697, %v4739
      %v4744 = vld [vmem:[#allocation4 + $0x30] sm:$0xfc]
      %v4745 = vld [vmem:[#allocation4 + $0x48] sm:$0xff]
      %v4746 = vld [vmem:[#allocation4 + $0x60] sm:$0x3]
      %v4747 = vlaneseq
      %v4748 = vshrl.u32 %v4747, 7
      %v4749 = vsub.s32 2, %v4748
      %v4750 = vrot.slane %v3097, %v4749
      %v4751 = vmul.f32 %v4744, %v4750
      %v4752 = vmul.f32 %v4745, %v4750
      %v4753 = vmul.f32 %v4746, %v4750
      %v4757 = vrot.slane %v4751, 2
      %v4758 = vrot.slane %v4752, 2
      %v4759 = vsel %vm578, %v4757, %v4758
      %v4760 = vrot.slane %v4753, 2
      %v4761 = vsel %vm578, %v4758, %v4760
      %v4764 = vadd.f32 %v4742, %v4759
      %v4765 = vadd.f32 %v4743, %v4761
      %v4766 = vld [vmem:[#allocation4 + $0x38] sm:$0xfc]
      %v4767 = vld [vmem:[#allocation4 + $0x50] sm:$0xff]
      %v4768 = vld [vmem:[#allocation4 + $0x68] sm:$0x3]
      %v4769 = vlaneseq
      %v4770 = vshrl.u32 %v4769, 7
      %v4771 = vsub.s32 3, %v4770
      %v4772 = vrot.slane %v3097, %v4771
      %4774 = vrot.lane.b32.xlu0 %v4772, 24
      %v4775 = vpop.permute.xlu0 %4774
      %v4777 = vmul.f32 %v4744, %v4775
      %v4778 = vmul.f32 %v4766, %v4775
      %v4779 = vmul.f32 %v4745, %v4775
      %v4780 = vmul.f32 %v4767, %v4775
      %v4781 = vmul.f32 %v4746, %v4775
      %v4782 = vmul.f32 %v4768, %v4775
      %v4789 = vrot.slane %v4777, 2
      %v4790 = vrot.slane %v4779, 2
      %v4791 = vsel %vm578, %v4789, %v4790
      %v4792 = vrot.slane %v4778, 2
      %v4793 = vrot.slane %v4780, 2
      %v4794 = vsel %vm578, %v4792, %v4793
      %v4795 = vrot.slane %v4781, 2
      %v4796 = vsel %vm578, %v4790, %v4795
      %v4797 = vrot.slane %v4782, 2
      %v4798 = vsel %vm578, %v4793, %v4797
      %4799 = vrot.lane.b32.xlu0 %v4791, 104
      %v4800 = vpop.permute.xlu0 %4799
      %4801 = vrot.lane.b32.xlu0 %v4794, 104
      %v4802 = vpop.permute.xlu0 %4801
      %4803 = vrot.lane.b32.xlu0 %v4796, 104
      %v4804 = vpop.permute.xlu0 %4803
      %4805 = vrot.lane.b32.xlu0 %v4798, 104
      %v4806 = vpop.permute.xlu0 %4805
      %v4807 = vsel %vm2190, %v4800, %v4802
      %v4808 = vsel %vm2190, %v4804, %v4806
      %v4811 = vadd.f32 %v4764, %v4807
      %v4812 = vadd.f32 %v4765, %v4808
      %v4813 = vlaneseq
      %v4814 = vshrl.u32 %v4813, 7
      %v4815 = vsub.s32 4, %v4814
      %v4816 = vrot.slane %v3097, %v4815
      %4818 = vrot.lane.b32.xlu0 %v4816, 48
      %v4819 = vpop.permute.xlu0 %4818
      %v4821 = vmul.f32 %v4744, %v4819
      %v4822 = vmul.f32 %v4766, %v4819
      %v4823 = vmul.f32 %v4745, %v4819
      %v4824 = vmul.f32 %v4767, %v4819
      %v4825 = vmul.f32 %v4746, %v4819
      %v4826 = vmul.f32 %v4768, %v4819
      %v4833 = vrot.slane %v4821, 2
      %v4834 = vrot.slane %v4823, 2
      %v4835 = vsel %vm578, %v4833, %v4834
      %v4836 = vrot.slane %v4822, 2
      %v4837 = vrot.slane %v4824, 2
      %v4838 = vsel %vm578, %v4836, %v4837
      %v4839 = vrot.slane %v4825, 2
      %v4840 = vsel %vm578, %v4834, %v4839
      %v4841 = vrot.slane %v4826, 2
      %v4842 = vsel %vm578, %v4837, %v4841
      %4843 = vrot.lane.b32.xlu0 %v4835, 80
      %v4844 = vpop.permute.xlu0 %4843
      %4845 = vrot.lane.b32.xlu0 %v4838, 80
      %v4846 = vpop.permute.xlu0 %4845
      %4847 = vrot.lane.b32.xlu0 %v4840, 80
      %v4848 = vpop.permute.xlu0 %4847
      %4849 = vrot.lane.b32.xlu0 %v4842, 80
      %v4850 = vpop.permute.xlu0 %4849
      %v4851 = vsel %vm3165, %v4844, %v4846
      %v4852 = vsel %vm3165, %v4848, %v4850
      %v4855 = vadd.f32 %v4811, %v4851
      %v4856 = vadd.f32 %v4812, %v4852
      %v4857 = vlaneseq
      %v4858 = vshrl.u32 %v4857, 7
      %v4859 = vsub.s32 5, %v4858
      %v4860 = vrot.slane %v3097, %v4859
      %4862 = vrot.lane.b32.xlu0 %v4860, 72
      %v4863 = vpop.permute.xlu0 %4862
      %v4865 = vmul.f32 %v4744, %v4863
      %v4866 = vmul.f32 %v4766, %v4863
      %v4867 = vmul.f32 %v4745, %v4863
      %v4868 = vmul.f32 %v4767, %v4863
      %v4869 = vmul.f32 %v4746, %v4863
      %v4870 = vmul.f32 %v4768, %v4863
      %v4877 = vrot.slane %v4865, 2
      %v4878 = vrot.slane %v4867, 2
      %v4879 = vsel %vm578, %v4877, %v4878
      %v4880 = vrot.slane %v4866, 2
      %v4881 = vrot.slane %v4868, 2
      %v4882 = vsel %vm578, %v4880, %v4881
      %v4883 = vrot.slane %v4869, 2
      %v4884 = vsel %vm578, %v4878, %v4883
      %v4885 = vrot.slane %v4870, 2
      %v4886 = vsel %vm578, %v4881, %v4885
      %4887 = vrot.lane.b32.xlu0 %v4879, 56
      %v4888 = vpop.permute.xlu0 %4887
      %4889 = vrot.lane.b32.xlu0 %v4882, 56
      %v4890 = vpop.permute.xlu0 %4889
      %4891 = vrot.lane.b32.xlu0 %v4884, 56
      %v4892 = vpop.permute.xlu0 %4891
      %4893 = vrot.lane.b32.xlu0 %v4886, 56
      %v4894 = vpop.permute.xlu0 %4893
      %v4895 = vsel %vm3196, %v4888, %v4890
      %v4896 = vsel %vm3196, %v4892, %v4894
      %v4899 = vadd.f32 %v4855, %v4895
      %v4900 = vadd.f32 %v4856, %v4896
      %v4901 = vlaneseq
      %v4902 = vshrl.u32 %v4901, 7
      %v4903 = vsub.s32 6, %v4902
      %v4904 = vrot.slane %v3097, %v4903
      %4906 = vrot.lane.b32.xlu0 %v4904, 96
      %v4907 = vpop.permute.xlu0 %4906
      %v4909 = vmul.f32 %v4744, %v4907
      %v4910 = vmul.f32 %v4766, %v4907
      %v4911 = vmul.f32 %v4745, %v4907
      %v4912 = vmul.f32 %v4767, %v4907
      %v4913 = vmul.f32 %v4746, %v4907
      %v4914 = vmul.f32 %v4768, %v4907
      %v4921 = vrot.slane %v4909, 2
      %v4922 = vrot.slane %v4911, 2
      %v4923 = vsel %vm578, %v4921, %v4922
      %v4924 = vrot.slane %v4910, 2
      %v4925 = vrot.slane %v4912, 2
      %v4926 = vsel %vm578, %v4924, %v4925
      %v4927 = vrot.slane %v4913, 2
      %v4928 = vsel %vm578, %v4922, %v4927
      %v4929 = vrot.slane %v4914, 2
      %v4930 = vsel %vm578, %v4925, %v4929
      %4931 = vrot.lane.b32.xlu0 %v4923, 32
      %v4932 = vpop.permute.xlu0 %4931
      %4933 = vrot.lane.b32.xlu0 %v4926, 32
      %v4934 = vpop.permute.xlu0 %4933
      %4935 = vrot.lane.b32.xlu0 %v4928, 32
      %v4936 = vpop.permute.xlu0 %4935
      %4937 = vrot.lane.b32.xlu0 %v4930, 32
      %v4938 = vpop.permute.xlu0 %4937
      %v4939 = vsel %vm3227, %v4932, %v4934
      %v4940 = vsel %vm3227, %v4936, %v4938
      %v4943 = vadd.f32 %v4899, %v4939
      %v4944 = vadd.f32 %v4900, %v4940
      %v4945 = vlaneseq
      %v4946 = vshrl.u32 %v4945, 7
      %v4947 = vsub.s32 7, %v4946
      %v4948 = vrot.slane %v3097, %v4947
      %4950 = vrot.lane.b32.xlu0 %v4948, 120
      %v4951 = vpop.permute.xlu0 %4950
      %v4953 = vmul.f32 %v4744, %v4951
      %v4954 = vmul.f32 %v4766, %v4951
      %v4955 = vmul.f32 %v4745, %v4951
      %v4956 = vmul.f32 %v4767, %v4951
      %v4957 = vmul.f32 %v4746, %v4951
      %v4958 = vmul.f32 %v4768, %v4951
      %v4965 = vrot.slane %v4953, 2
      %v4966 = vrot.slane %v4955, 2
      %v4967 = vsel %vm578, %v4965, %v4966
      %v4968 = vrot.slane %v4954, 2
      %v4969 = vrot.slane %v4956, 2
      %v4970 = vsel %vm578, %v4968, %v4969
      %v4971 = vrot.slane %v4957, 2
      %v4972 = vsel %vm578, %v4966, %v4971
      %v4973 = vrot.slane %v4958, 2
      %v4974 = vsel %vm578, %v4969, %v4973
      %4975 = vrot.lane.b32.xlu0 %v4967, 8
      %v4976 = vpop.permute.xlu0 %4975
      %4977 = vrot.lane.b32.xlu0 %v4970, 8
      %v4978 = vpop.permute.xlu0 %4977
      %4979 = vrot.lane.b32.xlu0 %v4972, 8
      %v4980 = vpop.permute.xlu0 %4979
      %4981 = vrot.lane.b32.xlu0 %v4974, 8
      %v4982 = vpop.permute.xlu0 %4981
      %v4983 = vsel %vm398, %v4976, %v4978
      %v4984 = vsel %vm398, %v4980, %v4982
      %v4987 = vadd.f32 %v4943, %v4983
      %v4988 = vadd.f32 %v4944, %v4984
      %v4989 = vld [vmem:[#allocation4 + $0x40] sm:$0xfc]
      %v4990 = vld [vmem:[#allocation4 + $0x58] sm:$0xff]
      %v4991 = vld [vmem:[#allocation4 + $0x70] sm:$0x3]
      %v4992 = vlaneseq
      %v4993 = vshrl.u32 %v4992, 7
      %v4994 = vsub.s32 0, %v4993
      %v4995 = vrot.slane %v3098, %v4994
      %4997 = vrot.lane.b32.xlu0 %v4995, 16
      %v4998 = vpop.permute.xlu0 %4997
      %v5000 = vmul.f32 %v4766, %v4998
      %v5001 = vmul.f32 %v4989, %v4998
      %v5002 = vmul.f32 %v4767, %v4998
      %v5003 = vmul.f32 %v4990, %v4998
      %v5004 = vmul.f32 %v4768, %v4998
      %v5005 = vmul.f32 %v4991, %v4998
      %v5012 = vrot.slane %v5000, 2
      %v5013 = vrot.slane %v5002, 2
      %v5014 = vsel %vm578, %v5012, %v5013
      %v5015 = vrot.slane %v5001, 2
      %v5016 = vrot.slane %v5003, 2
      %v5017 = vsel %vm578, %v5015, %v5016
      %v5018 = vrot.slane %v5004, 2
      %v5019 = vsel %vm578, %v5013, %v5018
      %v5020 = vrot.slane %v5005, 2
      %v5021 = vsel %vm578, %v5016, %v5020
      %5022 = vrot.lane.b32.xlu0 %v5014, 112
      %v5023 = vpop.permute.xlu0 %5022
      %5024 = vrot.lane.b32.xlu0 %v5017, 112
      %v5025 = vpop.permute.xlu0 %5024
      %5026 = vrot.lane.b32.xlu0 %v5019, 112
      %v5027 = vpop.permute.xlu0 %5026
      %5028 = vrot.lane.b32.xlu0 %v5021, 112
      %v5029 = vpop.permute.xlu0 %5028
      %v5030 = vsel %vm477, %v5023, %v5025
      %v5031 = vsel %vm477, %v5027, %v5029
      %v5034 = vadd.f32 %v4987, %v5030
      %v5035 = vadd.f32 %v4988, %v5031
      %v5036 = vld [vmem:[%s8] sm:$0x1]
      %v5038 = vlaneseq
      %v5039 = vshrl.u32 %v5038, 7
      %v5040 = vsub.s32 0, %v5039
      %v5041 = vrot.slane %v5036, %v5040
      %v5043 = vadd.f32 %v5034, %v5041
      %v5044 = vadd.f32 %v5035, %v5041
      %v5045 = vld [vmem:[%s9] sm:$0xff]
      %v5046 = vld [vmem:[%s9 + $0x8] sm:$0xff]
      %v5047 = vld [vmem:[%s9 + $0x10] sm:$0xff]
      %v5048 = vld [vmem:[%s9 + $0x18] sm:$0xff]
      %v5049 = vld [vmem:[%s9 + $0x20] sm:$0xff]
      %v5050 = vld [vmem:[%s9 + $0x28] sm:$0xff]
      %v5051 = vld [vmem:[%s9 + $0x30] sm:$0xff]
      %v5052 = vld [vmem:[%s9 + $0x38] sm:$0xff]
      %v5053 = vld [vmem:[%s9 + $0x40] sm:$0xff]
      %v5054 = vld [vmem:[%s9 + $0x48] sm:$0xff]
      %v5055 = vld [vmem:[%s9 + $0x50] sm:$0xff]
      %v5056 = vld [vmem:[%s9 + $0x58] sm:$0xff]
      %v5057 = vld [vmem:[%s9 + $0x60] sm:$0xff]
      %v5058 = vld [vmem:[%s9 + $0x68] sm:$0xff]
      %v5059 = vld [vmem:[%s9 + $0x70] sm:$0xff]
      %v5060 = vld [vmem:[%s9 + $0x78] sm:$0xff]
      %v5061 = vld [vmem:[%s10] sm:$0x1]
      %v5063 = vlaneseq
      %v5064 = vshrl.u32 %v5063, 7
      %v5065 = vsub.s32 0, %v5064
      %v5066 = vrot.slane %v5061, %v5065
      %5068 = vmatprep.subr.mxu0 0.0
      %5069 = vmatpush1.msra.mxu0 %v5045
      %5070 = vmatprep.subr.mxu0 0.0
      %5071 = vmatpush1.msra.mxu0 %v5046
      %5072 = vmatprep.subr.mxu0 0.0
      %5073 = vmatpush1.msra.mxu0 %v5047
      %5074 = vmatprep.subr.mxu0 0.0
      %5075 = vmatpush1.msra.mxu0 %v5048
      %5076 = vmatprep.subr.mxu0 0.0
      %5077 = vmatpush1.msra.mxu0 %v5049
      %5078 = vmatprep.subr.mxu0 0.0
      %5079 = vmatpush1.msra.mxu0 %v5050
      %5080 = vmatprep.subr.mxu0 0.0
      %5081 = vmatpush1.msra.mxu0 %v5051
      %5082 = vmatprep.subr.mxu0 0.0
      %5083 = vmatpush1.msra.mxu0 %v5052
      %5084 = vmatprep.subr.mxu0 0.0
      %5085 = vmatpush1.msra.mxu0 %v5053
      %5086 = vmatprep.subr.mxu0 0.0
      %5087 = vmatpush1.msra.mxu0 %v5054
      %5088 = vmatprep.subr.mxu0 0.0
      %5089 = vmatpush1.msra.mxu0 %v5055
      %5090 = vmatprep.subr.mxu0 0.0
      %5091 = vmatpush1.msra.mxu0 %v5056
      %5092 = vmatprep.subr.mxu0 0.0
      %5093 = vmatpush1.msra.mxu0 %v5057
      %5094 = vmatprep.subr.mxu0 0.0
      %5095 = vmatpush1.msra.mxu0 %v5058
      %5096 = vmatprep.subr.mxu0 0.0
      %5097 = vmatpush1.msra.mxu0 %v5059
      %5098 = vmatprep.subr.mxu0 0.0
      %5099 = vmatpush1.msra.mxu0 %v5060
      %5100 = vmatprep.subr.mxu0 0.0
      %5101 = vmatpush1.msra.mxu0 0.0
      %5102 = vmatprep.subr.mxu0 0.0
      %5103 = vmatpush1.msra.mxu0 0.0
      %5104 = vmatprep.subr.mxu0 0.0
      %5105 = vmatpush1.msra.mxu0 0.0
      %5106 = vmatprep.subr.mxu0 0.0
      %5107 = vmatpush1.msra.mxu0 0.0
      %5108 = vmatprep.subr.mxu0 0.0
      %5109 = vmatpush1.msra.mxu0 0.0
      %5110 = vmatprep.subr.mxu0 0.0
      %5111 = vmatpush1.msra.mxu0 0.0
      %5112 = vmatprep.subr.mxu0 0.0
      %5113 = vmatpush1.msra.mxu0 0.0
      %5114 = vmatprep.subr.mxu0 0.0
      %5115 = vmatpush1.msra.mxu0 0.0
      %5116 = vmatprep.subr.mxu0 0.0
      %5117 = vmatpush1.msra.mxu0 0.0
      %5118 = vmatprep.subr.mxu0 0.0
      %5119 = vmatpush1.msra.mxu0 0.0
      %5120 = vmatprep.subr.mxu0 0.0
      %5121 = vmatpush1.msra.mxu0 0.0
      %5122 = vmatprep.subr.mxu0 0.0
      %5123 = vmatpush1.msra.mxu0 0.0
      %5124 = vmatprep.subr.mxu0 0.0
      %5125 = vmatpush1.msra.mxu0 0.0
      %5126 = vmatprep.subr.mxu0 0.0
      %5127 = vmatpush1.msra.mxu0 0.0
      %5128 = vmatprep.subr.mxu0 0.0
      %5129 = vmatpush1.msra.mxu0 0.0
      %5130 = vmatprep.subr.mxu0 0.0
      %5131 = vmatpush1.msra.mxu0 0.0
      %5132 = vmatprep.mubr.f32.mxu0 0.0
      %5133 = vmatmul.mubr.f32.gmra.mrb[0].mxu0 %v5043
      %v5134 = vpop.f32.mrb[0].mxu0
      %v5135 = vadd.f32 %v5066, %v5134
      %v5136 = vpop.f32.mrb[0].mxu0
      %5137 = vmatprep.mubr.f32.mxu0 0.0
      %5138 = vmatmul.mubr.f32.gmra.mrb[0].mxu0 %v5044
      %v5139 = vpop.f32.mrb[0].mxu0
      %v5140 = vadd.f32 %v5066, %v5139
      %v5141 = vpop.f32.mrb[0].mxu0
      %5142 = vdwg.mxu0
      %v5143 = vsub.f32 0.0, %v5135
      %v5144 = vsub.f32 0.0, %v5140
      %v5145 = vmul.f32 %v5143, 1.442695
      %v5146 = vpow.pop %v5145
      %v5147 = vmul.f32 %v5144, 1.442695
      %v5148 = vpow.pop %v5147
      %v5149 = vadd.f32 %v5146, 1.0
      %v5150 = vadd.f32 %v5148, 1.0
      %v5151 = vrcp.pop %v5149
      %v5152 = vrcp.pop %v5150
      %v5153 = vmul.f32 %v5149, %v5151
      %v5154 = vmul.f32 %v5150, %v5152
      %v5155 = vsub.f32 2.0, %v5153
      %v5156 = vsub.f32 2.0, %v5154
      %v5157 = vmul.f32 %v5151, %v5155
      %v5158 = vmul.f32 %v5152, %v5156
      %v5159 = vmul.f32 %v5157, %v2040
      %v5160 = vmul.f32 %v5158, %v2045
      %v5161 = vadd.f32 %v5159, %v387
      %v5162 = vadd.f32 %v5160, %v388
      %5163 = vst [vmem:[%s386] sm:$0xff] %v5161
      %5164 = vst [vmem:[%s386 + $0x8] sm:$0xff] %v5162
      %p5165 = scmp.lt.s32.totalorder %s22, 1
      %s5166 = scalar_select %p5165, %s22, 1
      %s5167 = smul.addr %s5166, 2
      %s5168 = smul.addr %s5167, 8
      %s5169 = scalar_lea.vmem %s11, %s5168
      // Predicated region
      $region65: #{rcbv6_forward.1} parent=63 // pred_check
        %p5170 = pneg %p276
      $region66: #{rcbv6_forward.1} parent=63 // pred_check_branch
        %5172 = sbr.rel (%p5170) target = $region68
      $region67: #{rcbv6_forward.1} parent=63 // pred_region
        _
      $region68: #{rcbv6_forward.1} parent=63 // pred_fallthru
        _
    $region64: #{rcbv6_forward.1} parent=5 // pred_fallthru
      _
    %p5173 = scmp.le.s32.totalorder 2, %s17
    // Predicated region
    $region69: #{rcbv6_forward.1} parent=5 // pred_check
      %p5174 = pneg %p5173
    $region70: #{rcbv6_forward.1} parent=5 // pred_check_branch
      %5176 = sbr.rel (%p5174) target = $region72
    $region71: #{rcbv6_forward.1} parent=5 // pred_region
      %s5177 = ssub.s32 %s17, 2
      // Predicated region
      $region73: #{rcbv6_forward.1} parent=71 // pred_check
        %p5178 = pneg %p282
      $region74: #{rcbv6_forward.1} parent=71 // pred_check_branch
        %5180 = sbr.rel (%p5178) target = $region76
      $region75: #{rcbv6_forward.1} parent=71 // pred_region
        %p5181 = scmp.lt.s32.totalorder %s23, 1
        %s5182 = scalar_select %p5181, %s23, 1
        %s5183 = smul.addr %s5182, 2
        %s5184 = smul.addr %s5183, 8
        %s5185 = scalar_lea.vmem %s11, %s5184
      $region76: #{rcbv6_forward.1} parent=71 // pred_fallthru
        _
    $region72: #{rcbv6_forward.1} parent=5 // pred_fallthru
      _
  $region6: #{rcbv6_forward.1} parent=0 // loop_footer
    %s21 = sadd.s32 1, %s17
  $region7: #{rcbv6_forward.1} parent=0 // loop_footer_branch
    %16 = sbr.rel target = $region3
  $region8: #{rcbv6_forward.1} parent=0 // loop_exit
    _

</llo_original>
